<compile_context>
chip_gen: v7x
topology: tpu7x:2x2x1
jax: 0.10.0
libtpu: 0.0.40
codegen_flags: <defaults>
</compile_context>

<pallas_src>
import functools

import jax
import jax.numpy as jnp
from jax.experimental import pallas as pl
from jax.experimental.pallas import tpu as pltpu


# --------------------------- BN / bias folding helpers -----------------------

def _bn_scale_shift(bn, eps=1e-5):
    gamma, beta, mean, var = bn
    s = gamma / jnp.sqrt(var + eps)
    return s, beta - mean * s


def _fold_conv_bn(bias, bn, use_bn, eps=1e-5):
    """scale/shift such that scale*y + shift == BN_eval(y + bias) (or y + bias)."""
    if use_bn:
        s, t = _bn_scale_shift(bn, eps)
        shift = t + s * bias
    else:
        s = jnp.ones_like(bias)
        shift = bias
    return (s.reshape(-1, 1).astype(jnp.float32),
            shift.reshape(-1, 1).astype(jnp.float32))


def _pre_bn(bn, c, use_bn, eps=1e-5):
    """scale/shift for a standalone BN (or identity if use_bn=False)."""
    if use_bn:
        s, t = _bn_scale_shift(bn, eps)
    else:
        s = jnp.ones((c,), jnp.float32)
        t = jnp.zeros((c,), jnp.float32)
    return (s.reshape(-1, 1).astype(jnp.float32),
            t.reshape(-1, 1).astype(jnp.float32))


def _w2d(w):
    """(C_out, C_in, K) torch conv weight -> (C_out, K*C_in) bf16 matmul LHS."""
    c_out, c_in, k = w.shape
    return jnp.transpose(w, (0, 2, 1)).reshape(c_out, k * c_in).astype(jnp.bfloat16)


def _phase_split(xp, s):
    """(N, C, Lp) -> (N, s, C, ceil(Lp/s)); phase j holds xp[..., j::s]."""
    n, c, lp = xp.shape
    lq = -(-lp // s)
    if s * lq > lp:
        xp = jnp.pad(xp, ((0, 0), (0, 0), (0, s * lq - lp)))
    return xp.reshape(n, c, lq, s).transpose(0, 3, 1, 2)


# ------------------------- fused first conv + BN + ReLU -----------------------

def first_conv_bn_relu(x, conv_p, bn_p, use_bn, kernel_size):
    w, b = conv_p
    N, C_in, L = x.shape
    C_out = w.shape[0]
    K = kernel_size
    L_out = L                                    # stride 1
    p = max(0, (L_out - 1) + K - L)
    pad_l = p // 2
    L_pad = L + p
    xp = jnp.pad(x.astype(jnp.float32), ((0, 0), (0, 0), (pad_l, p - pad_l)))
    w2 = _w2d(w)
    scale, shift = _fold_conv_bn(b, bn_p, use_bn)

    def kernel(xp_ref, w_ref, s_ref, h_ref, o_ref, rhs_ref):
        # im2col taps gathered in-kernel (static slices), one big matmul.
        for t in range(K):
            rhs_ref[t * C_in:(t + 1) * C_in, :] = xp_ref[0, :, t:t + L_out]
        y = jnp.dot(w_ref[...], rhs_ref[...].astype(jnp.bfloat16),
                    preferred_element_type=jnp.float32)
        o_ref[0] = jnp.maximum(y * s_ref[...] + h_ref[...], 0.0)

    return pl.pallas_call(
        kernel,
        out_shape=jax.ShapeDtypeStruct((N, C_out, L_out), jnp.float32),
        grid=(N,),
        in_specs=[
            pl.BlockSpec((1, C_in, L_pad), lambda n: (n, 0, 0)),
            pl.BlockSpec((C_out, K * C_in), lambda n: (0, 0)),
            pl.BlockSpec((C_out, 1), lambda n: (0, 0)),
            pl.BlockSpec((C_out, 1), lambda n: (0, 0)),
        ],
        out_specs=pl.BlockSpec((1, C_out, L_out), lambda n: (n, 0, 0)),
        scratch_shapes=[pltpu.VMEM((K * C_in, L_out), jnp.float32)],
        compiler_params=pltpu.CompilerParams(dimension_semantics=("parallel",)),
    )(xp, w2, scale, shift)


# ------------------------------ fused basic block -----------------------------

def basic_block_forward(x, bp, cfg, kernel_size, stride, use_bn, groups=1):
    assert groups == 1  # TODO(synk): grouped conv (groups>1) not implemented; config uses groups=1
    N, C_in, L = x.shape
    K = kernel_size
    downsample = cfg['downsample']
    has_pre = not cfg['is_first']
    s1 = stride if downsample else 1
    C_out = cfg['out_ch']
    assert C_in == cfg['in_ch']

    # conv1 SAME padding + stride-phase split (no K-fold HBM duplication).
    L_out = -(-L // s1)
    p1 = max(0, (L_out - 1) * s1 + K - L)
    pad1_l = p1 // 2
    L_pad1 = L + p1
    Lq = -(-L_pad1 // s1)
    xp = jnp.pad(x.astype(jnp.float32),
                 ((0, 0), (0, 0), (pad1_l, (p1 - pad1_l) + (s1 * Lq - L_pad1))))
    xph = xp.reshape(N, C_in, Lq, s1).transpose(0, 3, 1, 2)      # (N, s1, C_in, Lq)

    w1, b1 = bp['conv1']
    w2, b2 = bp['conv2']
    w1m = _w2d(w1)                                               # (C_out, K*C_in)
    w2m = _w2d(w2)                                               # (C_out, K*C_out)
    s2c, h2c = _fold_conv_bn(b1, bp['bn2'], use_bn)              # bias1 folded into BN2
    b2c = b2.reshape(-1, 1).astype(jnp.float32)

    inputs = [xph]
    in_specs = [pl.BlockSpec((1, s1, C_in, Lq), lambda n: (n, 0, 0, 0))]
    if has_pre:
        pre_s, pre_h = _pre_bn(bp['bn1'], C_in, use_bn)
        inputs += [pre_s, pre_h]
        in_specs += [pl.BlockSpec((C_in, 1), lambda n: (0, 0)),
                     pl.BlockSpec((C_in, 1), lambda n: (0, 0))]
    inputs += [w1m, s2c, h2c, w2m, b2c]
    in_specs += [pl.BlockSpec((C_out, K * C_in), lambda n: (0, 0)),
                 pl.BlockSpec((C_out, 1), lambda n: (0, 0)),
                 pl.BlockSpec((C_out, 1), lambda n: (0, 0)),
                 pl.BlockSpec((C_out, K * C_out), lambda n: (0, 0)),
                 pl.BlockSpec((C_out, 1), lambda n: (0, 0))]

    if downsample:
        k = s1
        L_pool = -(-L // k)                      # == L_out
        pp_l = (k - 1) // 2
        right = k * L_pool - L - pp_l
        xpool = jnp.pad(x.astype(jnp.float32),
                        ((0, 0), (0, 0), (pp_l, max(0, right))))[:, :, :k * L_pool]
        xpool = xpool.reshape(N, C_in, L_pool, k).transpose(0, 3, 1, 2)
        inputs.append(xpool)
        in_specs.append(pl.BlockSpec((1, k, C_in, L_pool), lambda n: (n, 0, 0, 0)))

    ch1 = (C_out - C_in) // 2
    pad2_l = (K - 1) // 2
    L_in = L

    def kernel(*refs):
        it = iter(refs)
        xp_ref = next(it)
        if has_pre:
            ps_ref = next(it)
            ph_ref = next(it)
        w1_ref = next(it)
        s2_ref = next(it)
        h2_ref = next(it)
        w2_ref = next(it)
        b2_ref = next(it)
        id_ref = next(it) if downsample else None
        o_ref = next(it)
        rhs1_ref = next(it)
        midp_ref = next(it)
        rhs2_ref = next(it)

        # ---- conv1: in-kernel tap gather (+ fused BN1/ReLU1 prologue) ----
        for t in range(K):
            j, q = t % s1, t // s1
            tap = xp_ref[0, j, :, q:q + L_out]                   # (C_in, L_out)
            if has_pre:
                tap = jnp.maximum(tap * ps_ref[...] + ph_ref[...], 0.0)
                if p1 > 0:
                    # SAME pad happens AFTER BN+ReLU in the reference: re-zero pads.
                    pos = t + s1 * jax.lax.broadcasted_iota(
                        jnp.int32, (C_in, L_out), 1)
                    tap = jnp.where((pos >= pad1_l) & (pos < pad1_l + L_in),
                                    tap, 0.0)
            rhs1_ref[t * C_in:(t + 1) * C_in, :] = tap

        mid = jnp.dot(w1_ref[...], rhs1_ref[...].astype(jnp.bfloat16),
                      preferred_element_type=jnp.float32)        # (C_out, L_out)
        mid = jnp.maximum(mid * s2_ref[...] + h2_ref[...], 0.0)  # bias1+BN2+ReLU2

        # ---- conv2 (stride 1, SAME) via zero-padded VMEM scratch ----
        midp_ref[...] = jnp.zeros_like(midp_ref)
        midp_ref[:, pad2_l:pad2_l + L_out] = mid
        for t in range(K):
            rhs2_ref[t * C_out:(t + 1) * C_out, :] = midp_ref[:, t:t + L_out]
        out = jnp.dot(w2_ref[...], rhs2_ref[...].astype(jnp.bfloat16),
                      preferred_element_type=jnp.float32) + b2_ref[...]

        # ---- identity path: in-kernel max-pool + channel-offset residual add ----
        if downsample:
            ident = id_ref[0, 0, :, :]
            for j in range(1, s1):
                ident = jnp.maximum(ident, id_ref[0, j, :, :])
        else:
            ident = xp_ref[0, 0, :, pad1_l:pad1_l + L_in]
        if C_out == C_in:
            o_ref[0] = out + ident
        else:
            o_ref[0] = out
            o_ref[0, ch1:ch1 + C_in, :] = out[ch1:ch1 + C_in, :] + ident

    return pl.pallas_call(
        kernel,
        out_shape=jax.ShapeDtypeStruct((N, C_out, L_out), jnp.float32),
        grid=(N,),
        in_specs=in_specs,
        out_specs=pl.BlockSpec((1, C_out, L_out), lambda n: (n, 0, 0)),
        scratch_shapes=[
            pltpu.VMEM((K * C_in, L_out), jnp.float32),          # conv1 im2col RHS
            pltpu.VMEM((C_out, L_out + K - 1), jnp.float32),     # conv2 padded mid
            pltpu.VMEM((K * C_out, L_out), jnp.float32),         # conv2 im2col RHS
        ],
        compiler_params=pltpu.CompilerParams(dimension_semantics=("parallel",)),
    )(*inputs)


# ------------------------- fused final BN + ReLU + mean -----------------------

def final_bn_relu_mean(x, bn_p, use_bn):
    N, C, L = x.shape
    scale, shift = _pre_bn(bn_p, C, use_bn)

    def kernel(x_ref, s_ref, h_ref, o_ref):
        y = jnp.maximum(x_ref[...] * s_ref[...] + h_ref[...], 0.0)
        o_ref[...] = jnp.mean(y, axis=-1)

    return pl.pallas_call(
        kernel,
        out_shape=jax.ShapeDtypeStruct((N, C), jnp.float32),
        grid=(1,),
        in_specs=[pl.BlockSpec((N, C, L), lambda i: (0, 0, 0)),
                  pl.BlockSpec((C, 1), lambda i: (0, 0)),
                  pl.BlockSpec((C, 1), lambda i: (0, 0))],
        out_specs=pl.BlockSpec((N, C), lambda i: (0, 0)),
    )(x, scale, shift)


# ------------------------ parameter init (deterministic) ---------------------

def _init_conv(key, c_out, c_in, k):
    kw, kb = jax.random.split(key)
    bound = 1.0 / float(c_in * k) ** 0.5
    w = jax.random.uniform(kw, (c_out, c_in, k), jnp.float32, -bound, bound)
    b = jax.random.uniform(kb, (c_out,), jnp.float32, -bound, bound)
    return w, b


def _init_bn(key, c):
    k1, k2, k3, k4 = jax.random.split(key, 4)
    gamma = 1.0 + 0.1 * jax.random.normal(k1, (c,), jnp.float32)
    beta = 0.1 * jax.random.normal(k2, (c,), jnp.float32)
    mean = 0.1 * jax.random.normal(k3, (c,), jnp.float32)
    var = 1.0 + 0.1 * jnp.abs(jax.random.normal(k4, (c,), jnp.float32))
    return gamma, beta, mean, var


def build_resnet1d_params(key, in_channels, base_filters, kernel_size, n_block,
                          downsample_gap=2, increasefilter_gap=4):
    params = {}
    cfgs = []
    key, k = jax.random.split(key)
    params['first_conv'] = _init_conv(k, base_filters, in_channels, kernel_size)
    key, k = jax.random.split(key)
    params['first_bn'] = _init_bn(k, base_filters)
    blocks = []
    out_ch = base_filters
    for i in range(n_block):
        is_first = (i == 0)
        downsample = (i % downsample_gap == 1)
        if is_first:
            in_ch = base_filters
            out_ch = in_ch
        else:
            in_ch = int(base_filters * 2 ** ((i - 1) // increasefilter_gap))
            out_ch = in_ch * 2 if (i % increasefilter_gap == 0 and i != 0) else in_ch
        cfgs.append(dict(in_ch=in_ch, out_ch=out_ch,
                         downsample=downsample, is_first=is_first))
        key, k1, k2, k3, k4 = jax.random.split(key, 5)
        blocks.append(dict(
            bn1=_init_bn(k1, in_ch),
            conv1=_init_conv(k2, out_ch, in_ch, kernel_size),
            bn2=_init_bn(k3, out_ch),
            conv2=_init_conv(k4, out_ch, out_ch, kernel_size),
        ))
    params['blocks'] = blocks
    key, k = jax.random.split(key)
    params['final_bn'] = _init_bn(k, out_ch)
    return params, cfgs


# ------------------------------ model forward --------------------------------

def resnet1d_encoder_forward(x, params, cfgs, kernel_size, stride,
                             use_bn=True, use_do=True):
    # use_do: Dropout(p=0.5) is the eval-mode identity (deterministic forward).
    out = first_conv_bn_relu(x, params['first_conv'], params['first_bn'],
                             use_bn, kernel_size)
    for cfg, bp in zip(cfgs, params['blocks']):
        out = basic_block_forward(out, bp, cfg, kernel_size, stride, use_bn)
    out = final_bn_relu_mean(out, params['final_bn'], use_bn)
    return out


# ----------------------------------- main ------------------------------------

if __name__ == "__main__":
    in_channels, base_filters, kernel_size, stride = 4, 8, 3, 2
    n_block = 5            # exercises downsample + channel-increase residual pad
    N, L = 2, 16

    key = jax.random.PRNGKey(0)
    kx, kp = jax.random.split(key)
    x = jax.random.normal(kx, (N, in_channels, L), jnp.float32)
    params, cfgs = build_resnet1d_params(
        kp, in_channels, base_filters, kernel_size, n_block,
        downsample_gap=2, increasefilter_gap=4)

    fwd = jax.jit(functools.partial(
        resnet1d_encoder_forward, cfgs=cfgs, kernel_size=kernel_size,
        stride=stride, use_bn=True, use_do=True))

    out = fwd(x, params)
    jax.block_until_ready(out)
    assert out.shape == (N, 16), out.shape
    assert bool(jnp.all(jnp.isfinite(out)))
    print("KERNEL_OK")
</pallas_src>

<mosaic_0001>
module attributes {stable_mosaic.version = 11 : i64} {
  func.func @kernel(%arg0: i32, %arg1: memref<1x4x18xf32, #tpu.memory_space<vmem>>, %arg2: memref<8x12xbf16, #tpu.memory_space<vmem>>, %arg3: memref<8x1xf32, #tpu.memory_space<vmem>>, %arg4: memref<8x1xf32, #tpu.memory_space<vmem>>, %arg5: memref<1x8x16xf32, #tpu.memory_space<vmem>>, %arg6: memref<12x16xf32, #tpu.memory_space<vmem>>) attributes {dimension_semantics = [#tpu.dimension_semantics<parallel>], iteration_bounds = array<i64: 2>, scalar_prefetch = 0 : i64, scratch_operands = 1 : i64, tpu.core_type = #tpu.core_type<tc>, window_params = [{transform_indices = @transform_0, window_bounds = array<i64: 1, 4, 18>}, {pipeline_mode = #tpu.pipeline_mode<synchronous>, transform_indices = @transform_1, window_bounds = array<i64: 8, 12>}, {pipeline_mode = #tpu.pipeline_mode<synchronous>, transform_indices = @transform_2, window_bounds = array<i64: 8, 1>}, {pipeline_mode = #tpu.pipeline_mode<synchronous>, transform_indices = @transform_3, window_bounds = array<i64: 8, 1>}, {transform_indices = @transform_4, window_bounds = array<i64: 1, 8, 16>}]} {
    %c0 = arith.constant 0 : index
    %c0_0 = arith.constant 0 : index
    %c0_1 = arith.constant 0 : index
    %0 = vector.load %arg1[%c0, %c0_0, %c0_1] : memref<1x4x18xf32, #tpu.memory_space<vmem>>, vector<1x4x16xf32>
    %1 = vector.shape_cast %0 : vector<1x4x16xf32> to vector<4x16xf32>
    %c0_2 = arith.constant 0 : index
    %c0_3 = arith.constant 0 : index
    %2 = vector.load %arg6[%c0_2, %c0_3] : memref<12x16xf32, #tpu.memory_space<vmem>>, vector<4x16xf32>
    tpu.vector_store %arg6[%c0_2, %c0_3], %1 {strides = array<i32>} : memref<12x16xf32, #tpu.memory_space<vmem>>, vector<4x16xf32>,
    %c0_4 = arith.constant 0 : index
    %c0_5 = arith.constant 0 : index
    %c1 = arith.constant 1 : index
    %3 = vector.load %arg1[%c0_4, %c0_5, %c1] : memref<1x4x18xf32, #tpu.memory_space<vmem>>, vector<1x4x16xf32>
    %4 = vector.shape_cast %3 : vector<1x4x16xf32> to vector<4x16xf32>
    %c4 = arith.constant 4 : index
    %c0_6 = arith.constant 0 : index
    %5 = vector.load %arg6[%c4, %c0_6] : memref<12x16xf32, #tpu.memory_space<vmem>>, vector<4x16xf32>
    tpu.vector_store %arg6[%c4, %c0_6], %4 {strides = array<i32>} : memref<12x16xf32, #tpu.memory_space<vmem>>, vector<4x16xf32>,
    %c0_7 = arith.constant 0 : index
    %c0_8 = arith.constant 0 : index
    %c2 = arith.constant 2 : index
    %6 = vector.load %arg1[%c0_7, %c0_8, %c2] : memref<1x4x18xf32, #tpu.memory_space<vmem>>, vector<1x4x16xf32>
    %7 = vector.shape_cast %6 : vector<1x4x16xf32> to vector<4x16xf32>
    %c8 = arith.constant 8 : index
    %c0_9 = arith.constant 0 : index
    %8 = vector.load %arg6[%c8, %c0_9] : memref<12x16xf32, #tpu.memory_space<vmem>>, vector<4x16xf32>
    tpu.vector_store %arg6[%c8, %c0_9], %7 {strides = array<i32>} : memref<12x16xf32, #tpu.memory_space<vmem>>, vector<4x16xf32>,
    %c0_10 = arith.constant 0 : index
    %c0_11 = arith.constant 0 : index
    %9 = vector.load %arg2[%c0_10, %c0_11] : memref<8x12xbf16, #tpu.memory_space<vmem>>, vector<8x12xbf16>
    %c0_12 = arith.constant 0 : index
    %c0_13 = arith.constant 0 : index
    %10 = vector.load %arg6[%c0_12, %c0_13] : memref<12x16xf32, #tpu.memory_space<vmem>>, vector<12x16xf32>
    %11 = arith.truncf %10 : vector<12x16xf32> to vector<12x16xbf16>
    %cst = arith.constant dense<0.000000e+00> : vector<8x16xf32>
    %12 = tpu.matmul %9, %11, %cst {dimension_numbers = #tpu.dot_dimension_numbers<[1], [0], [0], [1], [0, 0, 1, 1], [], []>} : vector<8x12xbf16>, vector<12x16xbf16>, vector<8x16xf32> -> vector<8x16xf32>
    %c0_14 = arith.constant 0 : index
    %c0_15 = arith.constant 0 : index
    %13 = vector.load %arg3[%c0_14, %c0_15] : memref<8x1xf32, #tpu.memory_space<vmem>>, vector<8x1xf32>
    %14 = vector.broadcast %13 : vector<8x1xf32> to vector<8x16xf32>
    %15 = arith.mulf %12, %14 : vector<8x16xf32>
    %c0_16 = arith.constant 0 : index
    %c0_17 = arith.constant 0 : index
    %16 = vector.load %arg4[%c0_16, %c0_17] : memref<8x1xf32, #tpu.memory_space<vmem>>, vector<8x1xf32>
    %17 = vector.broadcast %16 : vector<8x1xf32> to vector<8x16xf32>
    %18 = arith.addf %15, %17 : vector<8x16xf32>
    %cst_18 = arith.constant 0.000000e+00 : f32
    %19 = vector.broadcast %cst_18 : f32 to vector<8x16xf32>
    %20 = arith.maximumf %18, %19 : vector<8x16xf32>
    %c0_19 = arith.constant 0 : index
    %c0_20 = arith.constant 0 : index
    %c0_21 = arith.constant 0 : index
    %21 = vector.load %arg5[%c0_19, %c0_20, %c0_21] : memref<1x8x16xf32, #tpu.memory_space<vmem>>, vector<1x8x16xf32>
    %22 = vector.shape_cast %21 : vector<1x8x16xf32> to vector<8x16xf32>
    %23 = vector.shape_cast %20 : vector<8x16xf32> to vector<1x8x16xf32>
    tpu.vector_store %arg5[%c0_19, %c0_20, %c0_21], %23 {strides = array<i32>} : memref<1x8x16xf32, #tpu.memory_space<vmem>>, vector<1x8x16xf32>,
    return
  }
  func.func @transform_0(%arg0: i32) -> (i32, i32, i32) {
    %c0_i32 = arith.constant 0 : i32
    %c0_i32_0 = arith.constant 0 : i32
    %c0_i32_1 = arith.constant 0 : i32
    return %arg0, %c0_i32, %c0_i32_0 : i32, i32, i32
  }
  func.func @transform_1(%arg0: i32) -> (i32, i32) {
    %c0_i32 = arith.constant 0 : i32
    %c0_i32_0 = arith.constant 0 : i32
    %c0_i32_1 = arith.constant 0 : i32
    return %c0_i32, %c0_i32_0 : i32, i32
  }
  func.func @transform_2(%arg0: i32) -> (i32, i32) {
    %c0_i32 = arith.constant 0 : i32
    %c0_i32_0 = arith.constant 0 : i32
    %c0_i32_1 = arith.constant 0 : i32
    return %c0_i32, %c0_i32_0 : i32, i32
  }
  func.func @transform_3(%arg0: i32) -> (i32, i32) {
    %c0_i32 = arith.constant 0 : i32
    %c0_i32_0 = arith.constant 0 : i32
    %c0_i32_1 = arith.constant 0 : i32
    return %c0_i32, %c0_i32_0 : i32, i32
  }
  func.func @transform_4(%arg0: i32) -> (i32, i32, i32) {
    %c0_i32 = arith.constant 0 : i32
    %c0_i32_0 = arith.constant 0 : i32
    %c0_i32_1 = arith.constant 0 : i32
    return %arg0, %c0_i32, %c0_i32_0 : i32, i32, i32
  }
}

module attributes {stable_mosaic.version = 11 : i64} {
  func.func @kernel(%arg0: i32, %arg1: memref<1x1x8x18xf32, #tpu.memory_space<vmem>>, %arg2: memref<8x24xbf16, #tpu.memory_space<vmem>>, %arg3: memref<8x1xf32, #tpu.memory_space<vmem>>, %arg4: memref<8x1xf32, #tpu.memory_space<vmem>>, %arg5: memref<8x24xbf16, #tpu.memory_space<vmem>>, %arg6: memref<8x1xf32, #tpu.memory_space<vmem>>, %arg7: memref<1x8x16xf32, #tpu.memory_space<vmem>>, %arg8: memref<24x16xf32, #tpu.memory_space<vmem>>, %arg9: memref<8x18xf32, #tpu.memory_space<vmem>>, %arg10: memref<24x16xf32, #tpu.memory_space<vmem>>) attributes {dimension_semantics = [#tpu.dimension_semantics<parallel>], iteration_bounds = array<i64: 2>, scalar_prefetch = 0 : i64, scratch_operands = 3 : i64, tpu.core_type = #tpu.core_type<tc>, window_params = [{transform_indices = @transform_0, window_bounds = array<i64: 1, 1, 8, 18>}, {pipeline_mode = #tpu.pipeline_mode<synchronous>, transform_indices = @transform_1, window_bounds = array<i64: 8, 24>}, {pipeline_mode = #tpu.pipeline_mode<synchronous>, transform_indices = @transform_2, window_bounds = array<i64: 8, 1>}, {pipeline_mode = #tpu.pipeline_mode<synchronous>, transform_indices = @transform_3, window_bounds = array<i64: 8, 1>}, {pipeline_mode = #tpu.pipeline_mode<synchronous>, transform_indices = @transform_4, window_bounds = array<i64: 8, 24>}, {pipeline_mode = #tpu.pipeline_mode<synchronous>, transform_indices = @transform_5, window_bounds = array<i64: 8, 1>}, {transform_indices = @transform_6, window_bounds = array<i64: 1, 8, 16>}]} {
    %c0 = arith.constant 0 : index
    %c0_0 = arith.constant 0 : index
    %c0_1 = arith.constant 0 : index
    %c0_2 = arith.constant 0 : index
    %0 = vector.load %arg1[%c0, %c0_0, %c0_1, %c0_2] : memref<1x1x8x18xf32, #tpu.memory_space<vmem>>, vector<1x1x8x16xf32>
    %1 = vector.shape_cast %0 : vector<1x1x8x16xf32> to vector<8x16xf32>
    %c0_3 = arith.constant 0 : index
    %c0_4 = arith.constant 0 : index
    %2 = vector.load %arg8[%c0_3, %c0_4] : memref<24x16xf32, #tpu.memory_space<vmem>>, vector<8x16xf32>
    tpu.vector_store %arg8[%c0_3, %c0_4], %1 {strides = array<i32>} : memref<24x16xf32, #tpu.memory_space<vmem>>, vector<8x16xf32>,
    %c0_5 = arith.constant 0 : index
    %c0_6 = arith.constant 0 : index
    %c0_7 = arith.constant 0 : index
    %c1 = arith.constant 1 : index
    %3 = vector.load %arg1[%c0_5, %c0_6, %c0_7, %c1] : memref<1x1x8x18xf32, #tpu.memory_space<vmem>>, vector<1x1x8x16xf32>
    %4 = vector.shape_cast %3 : vector<1x1x8x16xf32> to vector<8x16xf32>
    %c8 = arith.constant 8 : index
    %c0_8 = arith.constant 0 : index
    %5 = vector.load %arg8[%c8, %c0_8] : memref<24x16xf32, #tpu.memory_space<vmem>>, vector<8x16xf32>
    tpu.vector_store %arg8[%c8, %c0_8], %4 {strides = array<i32>} : memref<24x16xf32, #tpu.memory_space<vmem>>, vector<8x16xf32>,
    %c0_9 = arith.constant 0 : index
    %c0_10 = arith.constant 0 : index
    %c0_11 = arith.constant 0 : index
    %c2 = arith.constant 2 : index
    %6 = vector.load %arg1[%c0_9, %c0_10, %c0_11, %c2] : memref<1x1x8x18xf32, #tpu.memory_space<vmem>>, vector<1x1x8x16xf32>
    %7 = vector.shape_cast %6 : vector<1x1x8x16xf32> to vector<8x16xf32>
    %c16 = arith.constant 16 : index
    %c0_12 = arith.constant 0 : index
    %8 = vector.load %arg8[%c16, %c0_12] : memref<24x16xf32, #tpu.memory_space<vmem>>, vector<8x16xf32>
    tpu.vector_store %arg8[%c16, %c0_12], %7 {strides = array<i32>} : memref<24x16xf32, #tpu.memory_space<vmem>>, vector<8x16xf32>,
    %c0_13 = arith.constant 0 : index
    %c0_14 = arith.constant 0 : index
    %9 = vector.load %arg2[%c0_13, %c0_14] : memref<8x24xbf16, #tpu.memory_space<vmem>>, vector<8x24xbf16>
    %c0_15 = arith.constant 0 : index
    %c0_16 = arith.constant 0 : index
    %10 = vector.load %arg8[%c0_15, %c0_16] : memref<24x16xf32, #tpu.memory_space<vmem>>, vector<24x16xf32>
    %11 = arith.truncf %10 : vector<24x16xf32> to vector<24x16xbf16>
    %cst = arith.constant dense<0.000000e+00> : vector<8x16xf32>
    %12 = tpu.matmul %9, %11, %cst {dimension_numbers = #tpu.dot_dimension_numbers<[1], [0], [0], [1], [0, 0, 1, 1], [], []>} : vector<8x24xbf16>, vector<24x16xbf16>, vector<8x16xf32> -> vector<8x16xf32>
    %c0_17 = arith.constant 0 : index
    %c0_18 = arith.constant 0 : index
    %13 = vector.load %arg3[%c0_17, %c0_18] : memref<8x1xf32, #tpu.memory_space<vmem>>, vector<8x1xf32>
    %14 = vector.broadcast %13 : vector<8x1xf32> to vector<8x16xf32>
    %15 = arith.mulf %12, %14 : vector<8x16xf32>
    %c0_19 = arith.constant 0 : index
    %c0_20 = arith.constant 0 : index
    %16 = vector.load %arg4[%c0_19, %c0_20] : memref<8x1xf32, #tpu.memory_space<vmem>>, vector<8x1xf32>
    %17 = vector.broadcast %16 : vector<8x1xf32> to vector<8x16xf32>
    %18 = arith.addf %15, %17 : vector<8x16xf32>
    %cst_21 = arith.constant 0.000000e+00 : f32
    %19 = vector.broadcast %cst_21 : f32 to vector<8x16xf32>
    %20 = arith.maximumf %18, %19 : vector<8x16xf32>
    %cst_22 = arith.constant 0.000000e+00 : f32
    %21 = vector.broadcast %cst_22 : f32 to vector<8x18xf32>
    %c0_23 = arith.constant 0 : index
    %c0_24 = arith.constant 0 : index
    %22 = vector.load %arg9[%c0_23, %c0_24] : memref<8x18xf32, #tpu.memory_space<vmem>>, vector<8x18xf32>
    tpu.vector_store %arg9[%c0_23, %c0_24], %21 {strides = array<i32>} : memref<8x18xf32, #tpu.memory_space<vmem>>, vector<8x18xf32>,
    %c0_25 = arith.constant 0 : index
    %c1_26 = arith.constant 1 : index
    %23 = vector.load %arg9[%c0_25, %c1_26] : memref<8x18xf32, #tpu.memory_space<vmem>>, vector<8x16xf32>
    tpu.vector_store %arg9[%c0_25, %c1_26], %20 {strides = array<i32>} : memref<8x18xf32, #tpu.memory_space<vmem>>, vector<8x16xf32>,
    %c0_27 = arith.constant 0 : index
    %c0_28 = arith.constant 0 : index
    %24 = vector.load %arg9[%c0_27, %c0_28] : memref<8x18xf32, #tpu.memory_space<vmem>>, vector<8x16xf32>
    %c0_29 = arith.constant 0 : index
    %c0_30 = arith.constant 0 : index
    %25 = vector.load %arg10[%c0_29, %c0_30] : memref<24x16xf32, #tpu.memory_space<vmem>>, vector<8x16xf32>
    tpu.vector_store %arg10[%c0_29, %c0_30], %24 {strides = array<i32>} : memref<24x16xf32, #tpu.memory_space<vmem>>, vector<8x16xf32>,
    %c0_31 = arith.constant 0 : index
    %c1_32 = arith.constant 1 : index
    %26 = vector.load %arg9[%c0_31, %c1_32] : memref<8x18xf32, #tpu.memory_space<vmem>>, vector<8x16xf32>
    %c8_33 = arith.constant 8 : index
    %c0_34 = arith.constant 0 : index
    %27 = vector.load %arg10[%c8_33, %c0_34] : memref<24x16xf32, #tpu.memory_space<vmem>>, vector<8x16xf32>
    tpu.vector_store %arg10[%c8_33, %c0_34], %26 {strides = array<i32>} : memref<24x16xf32, #tpu.memory_space<vmem>>, vector<8x16xf32>,
    %c0_35 = arith.constant 0 : index
    %c2_36 = arith.constant 2 : index
    %28 = vector.load %arg9[%c0_35, %c2_36] : memref<8x18xf32, #tpu.memory_space<vmem>>, vector<8x16xf32>
    %c16_37 = arith.constant 16 : index
    %c0_38 = arith.constant 0 : index
    %29 = vector.load %arg10[%c16_37, %c0_38] : memref<24x16xf32, #tpu.memory_space<vmem>>, vector<8x16xf32>
    tpu.vector_store %arg10[%c16_37, %c0_38], %28 {strides = array<i32>} : memref<24x16xf32, #tpu.memory_space<vmem>>, vector<8x16xf32>,
    %c0_39 = arith.constant 0 : index
    %c0_40 = arith.constant 0 : index
    %30 = vector.load %arg5[%c0_39, %c0_40] : memref<8x24xbf16, #tpu.memory_space<vmem>>, vector<8x24xbf16>
    %c0_41 = arith.constant 0 : index
    %c0_42 = arith.constant 0 : index
    %31 = vector.load %arg10[%c0_41, %c0_42] : memref<24x16xf32, #tpu.memory_space<vmem>>, vector<24x16xf32>
    %32 = arith.truncf %31 : vector<24x16xf32> to vector<24x16xbf16>
    %cst_43 = arith.constant dense<0.000000e+00> : vector<8x16xf32>
    %33 = tpu.matmul %30, %32, %cst_43 {dimension_numbers = #tpu.dot_dimension_numbers<[1], [0], [0], [1], [0, 0, 1, 1], [], []>} : vector<8x24xbf16>, vector<24x16xbf16>, vector<8x16xf32> -> vector<8x16xf32>
    %c0_44 = arith.constant 0 : index
    %c0_45 = arith.constant 0 : index
    %34 = vector.load %arg6[%c0_44, %c0_45] : memref<8x1xf32, #tpu.memory_space<vmem>>, vector<8x1xf32>
    %35 = vector.broadcast %34 : vector<8x1xf32> to vector<8x16xf32>
    %36 = arith.addf %33, %35 : vector<8x16xf32>
    %c0_46 = arith.constant 0 : index
    %c0_47 = arith.constant 0 : index
    %c0_48 = arith.constant 0 : index
    %c1_49 = arith.constant 1 : index
    %37 = vector.load %arg1[%c0_46, %c0_47, %c0_48, %c1_49] : memref<1x1x8x18xf32, #tpu.memory_space<vmem>>, vector<1x1x8x16xf32>
    %38 = vector.shape_cast %37 : vector<1x1x8x16xf32> to vector<8x16xf32>
    %39 = arith.addf %36, %38 : vector<8x16xf32>
    %c0_50 = arith.constant 0 : index
    %c0_51 = arith.constant 0 : index
    %c0_52 = arith.constant 0 : index
    %40 = vector.load %arg7[%c0_50, %c0_51, %c0_52] : memref<1x8x16xf32, #tpu.memory_space<vmem>>, vector<1x8x16xf32>
    %41 = vector.shape_cast %40 : vector<1x8x16xf32> to vector<8x16xf32>
    %42 = vector.shape_cast %39 : vector<8x16xf32> to vector<1x8x16xf32>
    tpu.vector_store %arg7[%c0_50, %c0_51, %c0_52], %42 {strides = array<i32>} : memref<1x8x16xf32, #tpu.memory_space<vmem>>, vector<1x8x16xf32>,
    return
  }
  func.func @transform_0(%arg0: i32) -> (i32, i32, i32, i32) {
    %c0_i32 = arith.constant 0 : i32
    %c0_i32_0 = arith.constant 0 : i32
    %c0_i32_1 = arith.constant 0 : i32
    %c0_i32_2 = arith.constant 0 : i32
    return %arg0, %c0_i32, %c0_i32_0, %c0_i32_1 : i32, i32, i32, i32
  }
  func.func @transform_1(%arg0: i32) -> (i32, i32) {
    %c0_i32 = arith.constant 0 : i32
    %c0_i32_0 = arith.constant 0 : i32
    %c0_i32_1 = arith.constant 0 : i32
    return %c0_i32, %c0_i32_0 : i32, i32
  }
  func.func @transform_2(%arg0: i32) -> (i32, i32) {
    %c0_i32 = arith.constant 0 : i32
    %c0_i32_0 = arith.constant 0 : i32
    %c0_i32_1 = arith.constant 0 : i32
    return %c0_i32, %c0_i32_0 : i32, i32
  }
  func.func @transform_3(%arg0: i32) -> (i32, i32) {
    %c0_i32 = arith.constant 0 : i32
    %c0_i32_0 = arith.constant 0 : i32
    %c0_i32_1 = arith.constant 0 : i32
    return %c0_i32, %c0_i32_0 : i32, i32
  }
  func.func @transform_4(%arg0: i32) -> (i32, i32) {
    %c0_i32 = arith.constant 0 : i32
    %c0_i32_0 = arith.constant 0 : i32
    %c0_i32_1 = arith.constant 0 : i32
    return %c0_i32, %c0_i32_0 : i32, i32
  }
  func.func @transform_5(%arg0: i32) -> (i32, i32) {
    %c0_i32 = arith.constant 0 : i32
    %c0_i32_0 = arith.constant 0 : i32
    %c0_i32_1 = arith.constant 0 : i32
    return %c0_i32, %c0_i32_0 : i32, i32
  }
  func.func @transform_6(%arg0: i32) -> (i32, i32, i32) {
    %c0_i32 = arith.constant 0 : i32
    %c0_i32_0 = arith.constant 0 : i32
    %c0_i32_1 = arith.constant 0 : i32
    return %arg0, %c0_i32, %c0_i32_0 : i32, i32, i32
  }
}

module attributes {stable_mosaic.version = 11 : i64} {
  func.func @kernel(%arg0: i32, %arg1: memref<1x2x8x9xf32, #tpu.memory_space<vmem>>, %arg2: memref<8x1xf32, #tpu.memory_space<vmem>>, %arg3: memref<8x1xf32, #tpu.memory_space<vmem>>, %arg4: memref<8x24xbf16, #tpu.memory_space<vmem>>, %arg5: memref<8x1xf32, #tpu.memory_space<vmem>>, %arg6: memref<8x1xf32, #tpu.memory_space<vmem>>, %arg7: memref<8x24xbf16, #tpu.memory_space<vmem>>, %arg8: memref<8x1xf32, #tpu.memory_space<vmem>>, %arg9: memref<1x2x8x8xf32, #tpu.memory_space<vmem>>, %arg10: memref<1x8x8xf32, #tpu.memory_space<vmem>>, %arg11: memref<24x8xf32, #tpu.memory_space<vmem>>, %arg12: memref<8x10xf32, #tpu.memory_space<vmem>>, %arg13: memref<24x8xf32, #tpu.memory_space<vmem>>) attributes {dimension_semantics = [#tpu.dimension_semantics<parallel>], iteration_bounds = array<i64: 2>, scalar_prefetch = 0 : i64, scratch_operands = 3 : i64, tpu.core_type = #tpu.core_type<tc>, window_params = [{transform_indices = @transform_0, window_bounds = array<i64: 1, 2, 8, 9>}, {pipeline_mode = #tpu.pipeline_mode<synchronous>, transform_indices = @transform_1, window_bounds = array<i64: 8, 1>}, {pipeline_mode = #tpu.pipeline_mode<synchronous>, transform_indices = @transform_2, window_bounds = array<i64: 8, 1>}, {pipeline_mode = #tpu.pipeline_mode<synchronous>, transform_indices = @transform_3, window_bounds = array<i64: 8, 24>}, {pipeline_mode = #tpu.pipeline_mode<synchronous>, transform_indices = @transform_4, window_bounds = array<i64: 8, 1>}, {pipeline_mode = #tpu.pipeline_mode<synchronous>, transform_indices = @transform_5, window_bounds = array<i64: 8, 1>}, {pipeline_mode = #tpu.pipeline_mode<synchronous>, transform_indices = @transform_6, window_bounds = array<i64: 8, 24>}, {pipeline_mode = #tpu.pipeline_mode<synchronous>, transform_indices = @transform_7, window_bounds = array<i64: 8, 1>}, {transform_indices = @transform_8, window_bounds = array<i64: 1, 2, 8, 8>}, {transform_indices = @transform_9, window_bounds = array<i64: 1, 8, 8>}]} {
    %c0 = arith.constant 0 : index
    %c0_0 = arith.constant 0 : index
    %c0_1 = arith.constant 0 : index
    %c0_2 = arith.constant 0 : index
    %0 = vector.load %arg1[%c0, %c0_0, %c0_1, %c0_2] : memref<1x2x8x9xf32, #tpu.memory_space<vmem>>, vector<1x1x8x8xf32>
    %1 = vector.shape_cast %0 : vector<1x1x8x8xf32> to vector<8x8xf32>
    %c0_3 = arith.constant 0 : index
    %c0_4 = arith.constant 0 : index
    %2 = vector.load %arg2[%c0_3, %c0_4] : memref<8x1xf32, #tpu.memory_space<vmem>>, vector<8x1xf32>
    %3 = vector.broadcast %2 : vector<8x1xf32> to vector<8x8xf32>
    %4 = arith.mulf %1, %3 : vector<8x8xf32>
    %c0_5 = arith.constant 0 : index
    %c0_6 = arith.constant 0 : index
    %5 = vector.load %arg3[%c0_5, %c0_6] : memref<8x1xf32, #tpu.memory_space<vmem>>, vector<8x1xf32>
    %6 = vector.broadcast %5 : vector<8x1xf32> to vector<8x8xf32>
    %7 = arith.addf %4, %6 : vector<8x8xf32>
    %cst = arith.constant 0.000000e+00 : f32
    %8 = vector.broadcast %cst : f32 to vector<8x8xf32>
    %9 = arith.maximumf %7, %8 : vector<8x8xf32>
    %10 = tpu.iota {dimensions = array<i32: 1>} : vector<8x8xi32>
    %c2_i32 = arith.constant 2 : i32
    %11 = vector.broadcast %c2_i32 : i32 to vector<8x8xi32>
    %12 = arith.muli %11, %10 : vector<8x8xi32>
    %c0_i32 = arith.constant 0 : i32
    %13 = vector.broadcast %c0_i32 : i32 to vector<8x8xi32>
    %14 = arith.addi %13, %12 : vector<8x8xi32>
    %c0_i32_7 = arith.constant 0 : i32
    %15 = vector.broadcast %c0_i32_7 : i32 to vector<8x8xi32>
    %16 = arith.cmpi sge, %14, %15 : vector<8x8xi32>
    %c16_i32 = arith.constant 16 : i32
    %17 = vector.broadcast %c16_i32 : i32 to vector<8x8xi32>
    %18 = arith.cmpi slt, %14, %17 : vector<8x8xi32>
    %19 = arith.andi %16, %18 : vector<8x8xi1>
    %cst_8 = arith.constant 0.000000e+00 : f32
    %20 = vector.broadcast %cst_8 : f32 to vector<8x8xf32>
    %21 = arith.select %19, %9, %20 : vector<8x8xi1>, vector<8x8xf32>
    %c0_9 = arith.constant 0 : index
    %c0_10 = arith.constant 0 : index
    %22 = vector.load %arg11[%c0_9, %c0_10] : memref<24x8xf32, #tpu.memory_space<vmem>>, vector<8x8xf32>
    tpu.vector_store %arg11[%c0_9, %c0_10], %21 {strides = array<i32>} : memref<24x8xf32, #tpu.memory_space<vmem>>, vector<8x8xf32>,
    %c0_11 = arith.constant 0 : index
    %c1 = arith.constant 1 : index
    %c0_12 = arith.constant 0 : index
    %c0_13 = arith.constant 0 : index
    %23 = vector.load %arg1[%c0_11, %c1, %c0_12, %c0_13] : memref<1x2x8x9xf32, #tpu.memory_space<vmem>>, vector<1x1x8x8xf32>
    %24 = vector.shape_cast %23 : vector<1x1x8x8xf32> to vector<8x8xf32>
    %c0_14 = arith.constant 0 : index
    %c0_15 = arith.constant 0 : index
    %25 = vector.load %arg2[%c0_14, %c0_15] : memref<8x1xf32, #tpu.memory_space<vmem>>, vector<8x1xf32>
    %26 = vector.broadcast %25 : vector<8x1xf32> to vector<8x8xf32>
    %27 = arith.mulf %24, %26 : vector<8x8xf32>
    %c0_16 = arith.constant 0 : index
    %c0_17 = arith.constant 0 : index
    %28 = vector.load %arg3[%c0_16, %c0_17] : memref<8x1xf32, #tpu.memory_space<vmem>>, vector<8x1xf32>
    %29 = vector.broadcast %28 : vector<8x1xf32> to vector<8x8xf32>
    %30 = arith.addf %27, %29 : vector<8x8xf32>
    %cst_18 = arith.constant 0.000000e+00 : f32
    %31 = vector.broadcast %cst_18 : f32 to vector<8x8xf32>
    %32 = arith.maximumf %30, %31 : vector<8x8xf32>
    %33 = tpu.iota {dimensions = array<i32: 1>} : vector<8x8xi32>
    %c2_i32_19 = arith.constant 2 : i32
    %34 = vector.broadcast %c2_i32_19 : i32 to vector<8x8xi32>
    %35 = arith.muli %34, %33 : vector<8x8xi32>
    %c1_i32 = arith.constant 1 : i32
    %36 = vector.broadcast %c1_i32 : i32 to vector<8x8xi32>
    %37 = arith.addi %36, %35 : vector<8x8xi32>
    %c0_i32_20 = arith.constant 0 : i32
    %38 = vector.broadcast %c0_i32_20 : i32 to vector<8x8xi32>
    %39 = arith.cmpi sge, %37, %38 : vector<8x8xi32>
    %c16_i32_21 = arith.constant 16 : i32
    %40 = vector.broadcast %c16_i32_21 : i32 to vector<8x8xi32>
    %41 = arith.cmpi slt, %37, %40 : vector<8x8xi32>
    %42 = arith.andi %39, %41 : vector<8x8xi1>
    %cst_22 = arith.constant 0.000000e+00 : f32
    %43 = vector.broadcast %cst_22 : f32 to vector<8x8xf32>
    %44 = arith.select %42, %32, %43 : vector<8x8xi1>, vector<8x8xf32>
    %c8 = arith.constant 8 : index
    %c0_23 = arith.constant 0 : index
    %45 = vector.load %arg11[%c8, %c0_23] : memref<24x8xf32, #tpu.memory_space<vmem>>, vector<8x8xf32>
    tpu.vector_store %arg11[%c8, %c0_23], %44 {strides = array<i32>} : memref<24x8xf32, #tpu.memory_space<vmem>>, vector<8x8xf32>,
    %c0_24 = arith.constant 0 : index
    %c0_25 = arith.constant 0 : index
    %c0_26 = arith.constant 0 : index
    %c1_27 = arith.constant 1 : index
    %46 = vector.load %arg1[%c0_24, %c0_25, %c0_26, %c1_27] : memref<1x2x8x9xf32, #tpu.memory_space<vmem>>, vector<1x1x8x8xf32>
    %47 = vector.shape_cast %46 : vector<1x1x8x8xf32> to vector<8x8xf32>
    %c0_28 = arith.constant 0 : index
    %c0_29 = arith.constant 0 : index
    %48 = vector.load %arg2[%c0_28, %c0_29] : memref<8x1xf32, #tpu.memory_space<vmem>>, vector<8x1xf32>
    %49 = vector.broadcast %48 : vector<8x1xf32> to vector<8x8xf32>
    %50 = arith.mulf %47, %49 : vector<8x8xf32>
    %c0_30 = arith.constant 0 : index
    %c0_31 = arith.constant 0 : index
    %51 = vector.load %arg3[%c0_30, %c0_31] : memref<8x1xf32, #tpu.memory_space<vmem>>, vector<8x1xf32>
    %52 = vector.broadcast %51 : vector<8x1xf32> to vector<8x8xf32>
    %53 = arith.addf %50, %52 : vector<8x8xf32>
    %cst_32 = arith.constant 0.000000e+00 : f32
    %54 = vector.broadcast %cst_32 : f32 to vector<8x8xf32>
    %55 = arith.maximumf %53, %54 : vector<8x8xf32>
    %56 = tpu.iota {dimensions = array<i32: 1>} : vector<8x8xi32>
    %c2_i32_33 = arith.constant 2 : i32
    %57 = vector.broadcast %c2_i32_33 : i32 to vector<8x8xi32>
    %58 = arith.muli %57, %56 : vector<8x8xi32>
    %c2_i32_34 = arith.constant 2 : i32
    %59 = vector.broadcast %c2_i32_34 : i32 to vector<8x8xi32>
    %60 = arith.addi %59, %58 : vector<8x8xi32>
    %c0_i32_35 = arith.constant 0 : i32
    %61 = vector.broadcast %c0_i32_35 : i32 to vector<8x8xi32>
    %62 = arith.cmpi sge, %60, %61 : vector<8x8xi32>
    %c16_i32_36 = arith.constant 16 : i32
    %63 = vector.broadcast %c16_i32_36 : i32 to vector<8x8xi32>
    %64 = arith.cmpi slt, %60, %63 : vector<8x8xi32>
    %65 = arith.andi %62, %64 : vector<8x8xi1>
    %cst_37 = arith.constant 0.000000e+00 : f32
    %66 = vector.broadcast %cst_37 : f32 to vector<8x8xf32>
    %67 = arith.select %65, %55, %66 : vector<8x8xi1>, vector<8x8xf32>
    %c16 = arith.constant 16 : index
    %c0_38 = arith.constant 0 : index
    %68 = vector.load %arg11[%c16, %c0_38] : memref<24x8xf32, #tpu.memory_space<vmem>>, vector<8x8xf32>
    tpu.vector_store %arg11[%c16, %c0_38], %67 {strides = array<i32>} : memref<24x8xf32, #tpu.memory_space<vmem>>, vector<8x8xf32>,
    %c0_39 = arith.constant 0 : index
    %c0_40 = arith.constant 0 : index
    %69 = vector.load %arg4[%c0_39, %c0_40] : memref<8x24xbf16, #tpu.memory_space<vmem>>, vector<8x24xbf16>
    %c0_41 = arith.constant 0 : index
    %c0_42 = arith.constant 0 : index
    %70 = vector.load %arg11[%c0_41, %c0_42] : memref<24x8xf32, #tpu.memory_space<vmem>>, vector<24x8xf32>
    %71 = arith.truncf %70 : vector<24x8xf32> to vector<24x8xbf16>
    %cst_43 = arith.constant dense<0.000000e+00> : vector<8x8xf32>
    %72 = tpu.matmul %69, %71, %cst_43 {dimension_numbers = #tpu.dot_dimension_numbers<[1], [0], [0], [1], [0, 0, 1, 1], [], []>} : vector<8x24xbf16>, vector<24x8xbf16>, vector<8x8xf32> -> vector<8x8xf32>
    %c0_44 = arith.constant 0 : index
    %c0_45 = arith.constant 0 : index
    %73 = vector.load %arg5[%c0_44, %c0_45] : memref<8x1xf32, #tpu.memory_space<vmem>>, vector<8x1xf32>
    %74 = vector.broadcast %73 : vector<8x1xf32> to vector<8x8xf32>
    %75 = arith.mulf %72, %74 : vector<8x8xf32>
    %c0_46 = arith.constant 0 : index
    %c0_47 = arith.constant 0 : index
    %76 = vector.load %arg6[%c0_46, %c0_47] : memref<8x1xf32, #tpu.memory_space<vmem>>, vector<8x1xf32>
    %77 = vector.broadcast %76 : vector<8x1xf32> to vector<8x8xf32>
    %78 = arith.addf %75, %77 : vector<8x8xf32>
    %cst_48 = arith.constant 0.000000e+00 : f32
    %79 = vector.broadcast %cst_48 : f32 to vector<8x8xf32>
    %80 = arith.maximumf %78, %79 : vector<8x8xf32>
    %cst_49 = arith.constant 0.000000e+00 : f32
    %81 = vector.broadcast %cst_49 : f32 to vector<8x10xf32>
    %c0_50 = arith.constant 0 : index
    %c0_51 = arith.constant 0 : index
    %82 = vector.load %arg12[%c0_50, %c0_51] : memref<8x10xf32, #tpu.memory_space<vmem>>, vector<8x10xf32>
    tpu.vector_store %arg12[%c0_50, %c0_51], %81 {strides = array<i32>} : memref<8x10xf32, #tpu.memory_space<vmem>>, vector<8x10xf32>,
    %c0_52 = arith.constant 0 : index
    %c1_53 = arith.constant 1 : index
    %83 = vector.load %arg12[%c0_52, %c1_53] : memref<8x10xf32, #tpu.memory_space<vmem>>, vector<8x8xf32>
    tpu.vector_store %arg12[%c0_52, %c1_53], %80 {strides = array<i32>} : memref<8x10xf32, #tpu.memory_space<vmem>>, vector<8x8xf32>,
    %c0_54 = arith.constant 0 : index
    %c0_55 = arith.constant 0 : index
    %84 = vector.load %arg12[%c0_54, %c0_55] : memref<8x10xf32, #tpu.memory_space<vmem>>, vector<8x8xf32>
    %c0_56 = arith.constant 0 : index
    %c0_57 = arith.constant 0 : index
    %85 = vector.load %arg13[%c0_56, %c0_57] : memref<24x8xf32, #tpu.memory_space<vmem>>, vector<8x8xf32>
    tpu.vector_store %arg13[%c0_56, %c0_57], %84 {strides = array<i32>} : memref<24x8xf32, #tpu.memory_space<vmem>>, vector<8x8xf32>,
    %c0_58 = arith.constant 0 : index
    %c1_59 = arith.constant 1 : index
    %86 = vector.load %arg12[%c0_58, %c1_59] : memref<8x10xf32, #tpu.memory_space<vmem>>, vector<8x8xf32>
    %c8_60 = arith.constant 8 : index
    %c0_61 = arith.constant 0 : index
    %87 = vector.load %arg13[%c8_60, %c0_61] : memref<24x8xf32, #tpu.memory_space<vmem>>, vector<8x8xf32>
    tpu.vector_store %arg13[%c8_60, %c0_61], %86 {strides = array<i32>} : memref<24x8xf32, #tpu.memory_space<vmem>>, vector<8x8xf32>,
    %c0_62 = arith.constant 0 : index
    %c2 = arith.constant 2 : index
    %88 = vector.load %arg12[%c0_62, %c2] : memref<8x10xf32, #tpu.memory_space<vmem>>, vector<8x8xf32>
    %c16_63 = arith.constant 16 : index
    %c0_64 = arith.constant 0 : index
    %89 = vector.load %arg13[%c16_63, %c0_64] : memref<24x8xf32, #tpu.memory_space<vmem>>, vector<8x8xf32>
    tpu.vector_store %arg13[%c16_63, %c0_64], %88 {strides = array<i32>} : memref<24x8xf32, #tpu.memory_space<vmem>>, vector<8x8xf32>,
    %c0_65 = arith.constant 0 : index
    %c0_66 = arith.constant 0 : index
    %90 = vector.load %arg7[%c0_65, %c0_66] : memref<8x24xbf16, #tpu.memory_space<vmem>>, vector<8x24xbf16>
    %c0_67 = arith.constant 0 : index
    %c0_68 = arith.constant 0 : index
    %91 = vector.load %arg13[%c0_67, %c0_68] : memref<24x8xf32, #tpu.memory_space<vmem>>, vector<24x8xf32>
    %92 = arith.truncf %91 : vector<24x8xf32> to vector<24x8xbf16>
    %cst_69 = arith.constant dense<0.000000e+00> : vector<8x8xf32>
    %93 = tpu.matmul %90, %92, %cst_69 {dimension_numbers = #tpu.dot_dimension_numbers<[1], [0], [0], [1], [0, 0, 1, 1], [], []>} : vector<8x24xbf16>, vector<24x8xbf16>, vector<8x8xf32> -> vector<8x8xf32>
    %c0_70 = arith.constant 0 : index
    %c0_71 = arith.constant 0 : index
    %94 = vector.load %arg8[%c0_70, %c0_71] : memref<8x1xf32, #tpu.memory_space<vmem>>, vector<8x1xf32>
    %95 = vector.broadcast %94 : vector<8x1xf32> to vector<8x8xf32>
    %96 = arith.addf %93, %95 : vector<8x8xf32>
    %c0_72 = arith.constant 0 : index
    %c0_73 = arith.constant 0 : index
    %c0_74 = arith.constant 0 : index
    %c0_75 = arith.constant 0 : index
    %97 = vector.load %arg9[%c0_72, %c0_73, %c0_74, %c0_75] : memref<1x2x8x8xf32, #tpu.memory_space<vmem>>, vector<1x1x8x8xf32>
    %98 = vector.shape_cast %97 : vector<1x1x8x8xf32> to vector<8x8xf32>
    %c0_76 = arith.constant 0 : index
    %c1_77 = arith.constant 1 : index
    %c0_78 = arith.constant 0 : index
    %c0_79 = arith.constant 0 : index
    %99 = vector.load %arg9[%c0_76, %c1_77, %c0_78, %c0_79] : memref<1x2x8x8xf32, #tpu.memory_space<vmem>>, vector<1x1x8x8xf32>
    %100 = vector.shape_cast %99 : vector<1x1x8x8xf32> to vector<8x8xf32>
    %101 = arith.maximumf %98, %100 : vector<8x8xf32>
    %102 = arith.addf %96, %101 : vector<8x8xf32>
    %c0_80 = arith.constant 0 : index
    %c0_81 = arith.constant 0 : index
    %c0_82 = arith.constant 0 : index
    %103 = vector.load %arg10[%c0_80, %c0_81, %c0_82] : memref<1x8x8xf32, #tpu.memory_space<vmem>>, vector<1x8x8xf32>
    %104 = vector.shape_cast %103 : vector<1x8x8xf32> to vector<8x8xf32>
    %105 = vector.shape_cast %102 : vector<8x8xf32> to vector<1x8x8xf32>
    tpu.vector_store %arg10[%c0_80, %c0_81, %c0_82], %105 {strides = array<i32>} : memref<1x8x8xf32, #tpu.memory_space<vmem>>, vector<1x8x8xf32>,
    return
  }
  func.func @transform_0(%arg0: i32) -> (i32, i32, i32, i32) {
    %c0_i32 = arith.constant 0 : i32
    %c0_i32_0 = arith.constant 0 : i32
    %c0_i32_1 = arith.constant 0 : i32
    %c0_i32_2 = arith.constant 0 : i32
    return %arg0, %c0_i32, %c0_i32_0, %c0_i32_1 : i32, i32, i32, i32
  }
  func.func @transform_1(%arg0: i32) -> (i32, i32) {
    %c0_i32 = arith.constant 0 : i32
    %c0_i32_0 = arith.constant 0 : i32
    %c0_i32_1 = arith.constant 0 : i32
    return %c0_i32, %c0_i32_0 : i32, i32
  }
  func.func @transform_2(%arg0: i32) -> (i32, i32) {
    %c0_i32 = arith.constant 0 : i32
    %c0_i32_0 = arith.constant 0 : i32
    %c0_i32_1 = arith.constant 0 : i32
    return %c0_i32, %c0_i32_0 : i32, i32
  }
  func.func @transform_3(%arg0: i32) -> (i32, i32) {
    %c0_i32 = arith.constant 0 : i32
    %c0_i32_0 = arith.constant 0 : i32
    %c0_i32_1 = arith.constant 0 : i32
    return %c0_i32, %c0_i32_0 : i32, i32
  }
  func.func @transform_4(%arg0: i32) -> (i32, i32) {
    %c0_i32 = arith.constant 0 : i32
    %c0_i32_0 = arith.constant 0 : i32
    %c0_i32_1 = arith.constant 0 : i32
    return %c0_i32, %c0_i32_0 : i32, i32
  }
  func.func @transform_5(%arg0: i32) -> (i32, i32) {
    %c0_i32 = arith.constant 0 : i32
    %c0_i32_0 = arith.constant 0 : i32
    %c0_i32_1 = arith.constant 0 : i32
    return %c0_i32, %c0_i32_0 : i32, i32
  }
  func.func @transform_6(%arg0: i32) -> (i32, i32) {
    %c0_i32 = arith.constant 0 : i32
    %c0_i32_0 = arith.constant 0 : i32
    %c0_i32_1 = arith.constant 0 : i32
    return %c0_i32, %c0_i32_0 : i32, i32
  }
  func.func @transform_7(%arg0: i32) -> (i32, i32) {
    %c0_i32 = arith.constant 0 : i32
    %c0_i32_0 = arith.constant 0 : i32
    %c0_i32_1 = arith.constant 0 : i32
    return %c0_i32, %c0_i32_0 : i32, i32
  }
  func.func @transform_8(%arg0: i32) -> (i32, i32, i32, i32) {
    %c0_i32 = arith.constant 0 : i32
    %c0_i32_0 = arith.constant 0 : i32
    %c0_i32_1 = arith.constant 0 : i32
    %c0_i32_2 = arith.constant 0 : i32
    return %arg0, %c0_i32, %c0_i32_0, %c0_i32_1 : i32, i32, i32, i32
  }
  func.func @transform_9(%arg0: i32) -> (i32, i32, i32) {
    %c0_i32 = arith.constant 0 : i32
    %c0_i32_0 = arith.constant 0 : i32
    %c0_i32_1 = arith.constant 0 : i32
    return %arg0, %c0_i32, %c0_i32_0 : i32, i32, i32
  }
}

module attributes {stable_mosaic.version = 11 : i64} {
  func.func @kernel(%arg0: i32, %arg1: memref<1x1x8x10xf32, #tpu.memory_space<vmem>>, %arg2: memref<8x1xf32, #tpu.memory_space<vmem>>, %arg3: memref<8x1xf32, #tpu.memory_space<vmem>>, %arg4: memref<8x24xbf16, #tpu.memory_space<vmem>>, %arg5: memref<8x1xf32, #tpu.memory_space<vmem>>, %arg6: memref<8x1xf32, #tpu.memory_space<vmem>>, %arg7: memref<8x24xbf16, #tpu.memory_space<vmem>>, %arg8: memref<8x1xf32, #tpu.memory_space<vmem>>, %arg9: memref<1x8x8xf32, #tpu.memory_space<vmem>>, %arg10: memref<24x8xf32, #tpu.memory_space<vmem>>, %arg11: memref<8x10xf32, #tpu.memory_space<vmem>>, %arg12: memref<24x8xf32, #tpu.memory_space<vmem>>) attributes {dimension_semantics = [#tpu.dimension_semantics<parallel>], iteration_bounds = array<i64: 2>, scalar_prefetch = 0 : i64, scratch_operands = 3 : i64, tpu.core_type = #tpu.core_type<tc>, window_params = [{transform_indices = @transform_0, window_bounds = array<i64: 1, 1, 8, 10>}, {pipeline_mode = #tpu.pipeline_mode<synchronous>, transform_indices = @transform_1, window_bounds = array<i64: 8, 1>}, {pipeline_mode = #tpu.pipeline_mode<synchronous>, transform_indices = @transform_2, window_bounds = array<i64: 8, 1>}, {pipeline_mode = #tpu.pipeline_mode<synchronous>, transform_indices = @transform_3, window_bounds = array<i64: 8, 24>}, {pipeline_mode = #tpu.pipeline_mode<synchronous>, transform_indices = @transform_4, window_bounds = array<i64: 8, 1>}, {pipeline_mode = #tpu.pipeline_mode<synchronous>, transform_indices = @transform_5, window_bounds = array<i64: 8, 1>}, {pipeline_mode = #tpu.pipeline_mode<synchronous>, transform_indices = @transform_6, window_bounds = array<i64: 8, 24>}, {pipeline_mode = #tpu.pipeline_mode<synchronous>, transform_indices = @transform_7, window_bounds = array<i64: 8, 1>}, {transform_indices = @transform_8, window_bounds = array<i64: 1, 8, 8>}]} {
    %c0 = arith.constant 0 : index
    %c0_0 = arith.constant 0 : index
    %c0_1 = arith.constant 0 : index
    %c0_2 = arith.constant 0 : index
    %0 = vector.load %arg1[%c0, %c0_0, %c0_1, %c0_2] : memref<1x1x8x10xf32, #tpu.memory_space<vmem>>, vector<1x1x8x8xf32>
    %1 = vector.shape_cast %0 : vector<1x1x8x8xf32> to vector<8x8xf32>
    %c0_3 = arith.constant 0 : index
    %c0_4 = arith.constant 0 : index
    %2 = vector.load %arg2[%c0_3, %c0_4] : memref<8x1xf32, #tpu.memory_space<vmem>>, vector<8x1xf32>
    %3 = vector.broadcast %2 : vector<8x1xf32> to vector<8x8xf32>
    %4 = arith.mulf %1, %3 : vector<8x8xf32>
    %c0_5 = arith.constant 0 : index
    %c0_6 = arith.constant 0 : index
    %5 = vector.load %arg3[%c0_5, %c0_6] : memref<8x1xf32, #tpu.memory_space<vmem>>, vector<8x1xf32>
    %6 = vector.broadcast %5 : vector<8x1xf32> to vector<8x8xf32>
    %7 = arith.addf %4, %6 : vector<8x8xf32>
    %cst = arith.constant 0.000000e+00 : f32
    %8 = vector.broadcast %cst : f32 to vector<8x8xf32>
    %9 = arith.maximumf %7, %8 : vector<8x8xf32>
    %10 = tpu.iota {dimensions = array<i32: 1>} : vector<8x8xi32>
    %c1_i32 = arith.constant 1 : i32
    %11 = vector.broadcast %c1_i32 : i32 to vector<8x8xi32>
    %12 = arith.muli %11, %10 : vector<8x8xi32>
    %c0_i32 = arith.constant 0 : i32
    %13 = vector.broadcast %c0_i32 : i32 to vector<8x8xi32>
    %14 = arith.addi %13, %12 : vector<8x8xi32>
    %c1_i32_7 = arith.constant 1 : i32
    %15 = vector.broadcast %c1_i32_7 : i32 to vector<8x8xi32>
    %16 = arith.cmpi sge, %14, %15 : vector<8x8xi32>
    %c9_i32 = arith.constant 9 : i32
    %17 = vector.broadcast %c9_i32 : i32 to vector<8x8xi32>
    %18 = arith.cmpi slt, %14, %17 : vector<8x8xi32>
    %19 = arith.andi %16, %18 : vector<8x8xi1>
    %cst_8 = arith.constant 0.000000e+00 : f32
    %20 = vector.broadcast %cst_8 : f32 to vector<8x8xf32>
    %21 = arith.select %19, %9, %20 : vector<8x8xi1>, vector<8x8xf32>
    %c0_9 = arith.constant 0 : index
    %c0_10 = arith.constant 0 : index
    %22 = vector.load %arg10[%c0_9, %c0_10] : memref<24x8xf32, #tpu.memory_space<vmem>>, vector<8x8xf32>
    tpu.vector_store %arg10[%c0_9, %c0_10], %21 {strides = array<i32>} : memref<24x8xf32, #tpu.memory_space<vmem>>, vector<8x8xf32>,
    %c0_11 = arith.constant 0 : index
    %c0_12 = arith.constant 0 : index
    %c0_13 = arith.constant 0 : index
    %c1 = arith.constant 1 : index
    %23 = vector.load %arg1[%c0_11, %c0_12, %c0_13, %c1] : memref<1x1x8x10xf32, #tpu.memory_space<vmem>>, vector<1x1x8x8xf32>
    %24 = vector.shape_cast %23 : vector<1x1x8x8xf32> to vector<8x8xf32>
    %c0_14 = arith.constant 0 : index
    %c0_15 = arith.constant 0 : index
    %25 = vector.load %arg2[%c0_14, %c0_15] : memref<8x1xf32, #tpu.memory_space<vmem>>, vector<8x1xf32>
    %26 = vector.broadcast %25 : vector<8x1xf32> to vector<8x8xf32>
    %27 = arith.mulf %24, %26 : vector<8x8xf32>
    %c0_16 = arith.constant 0 : index
    %c0_17 = arith.constant 0 : index
    %28 = vector.load %arg3[%c0_16, %c0_17] : memref<8x1xf32, #tpu.memory_space<vmem>>, vector<8x1xf32>
    %29 = vector.broadcast %28 : vector<8x1xf32> to vector<8x8xf32>
    %30 = arith.addf %27, %29 : vector<8x8xf32>
    %cst_18 = arith.constant 0.000000e+00 : f32
    %31 = vector.broadcast %cst_18 : f32 to vector<8x8xf32>
    %32 = arith.maximumf %30, %31 : vector<8x8xf32>
    %33 = tpu.iota {dimensions = array<i32: 1>} : vector<8x8xi32>
    %c1_i32_19 = arith.constant 1 : i32
    %34 = vector.broadcast %c1_i32_19 : i32 to vector<8x8xi32>
    %35 = arith.muli %34, %33 : vector<8x8xi32>
    %c1_i32_20 = arith.constant 1 : i32
    %36 = vector.broadcast %c1_i32_20 : i32 to vector<8x8xi32>
    %37 = arith.addi %36, %35 : vector<8x8xi32>
    %c1_i32_21 = arith.constant 1 : i32
    %38 = vector.broadcast %c1_i32_21 : i32 to vector<8x8xi32>
    %39 = arith.cmpi sge, %37, %38 : vector<8x8xi32>
    %c9_i32_22 = arith.constant 9 : i32
    %40 = vector.broadcast %c9_i32_22 : i32 to vector<8x8xi32>
    %41 = arith.cmpi slt, %37, %40 : vector<8x8xi32>
    %42 = arith.andi %39, %41 : vector<8x8xi1>
    %cst_23 = arith.constant 0.000000e+00 : f32
    %43 = vector.broadcast %cst_23 : f32 to vector<8x8xf32>
    %44 = arith.select %42, %32, %43 : vector<8x8xi1>, vector<8x8xf32>
    %c8 = arith.constant 8 : index
    %c0_24 = arith.constant 0 : index
    %45 = vector.load %arg10[%c8, %c0_24] : memref<24x8xf32, #tpu.memory_space<vmem>>, vector<8x8xf32>
    tpu.vector_store %arg10[%c8, %c0_24], %44 {strides = array<i32>} : memref<24x8xf32, #tpu.memory_space<vmem>>, vector<8x8xf32>,
    %c0_25 = arith.constant 0 : index
    %c0_26 = arith.constant 0 : index
    %c0_27 = arith.constant 0 : index
    %c2 = arith.constant 2 : index
    %46 = vector.load %arg1[%c0_25, %c0_26, %c0_27, %c2] : memref<1x1x8x10xf32, #tpu.memory_space<vmem>>, vector<1x1x8x8xf32>
    %47 = vector.shape_cast %46 : vector<1x1x8x8xf32> to vector<8x8xf32>
    %c0_28 = arith.constant 0 : index
    %c0_29 = arith.constant 0 : index
    %48 = vector.load %arg2[%c0_28, %c0_29] : memref<8x1xf32, #tpu.memory_space<vmem>>, vector<8x1xf32>
    %49 = vector.broadcast %48 : vector<8x1xf32> to vector<8x8xf32>
    %50 = arith.mulf %47, %49 : vector<8x8xf32>
    %c0_30 = arith.constant 0 : index
    %c0_31 = arith.constant 0 : index
    %51 = vector.load %arg3[%c0_30, %c0_31] : memref<8x1xf32, #tpu.memory_space<vmem>>, vector<8x1xf32>
    %52 = vector.broadcast %51 : vector<8x1xf32> to vector<8x8xf32>
    %53 = arith.addf %50, %52 : vector<8x8xf32>
    %cst_32 = arith.constant 0.000000e+00 : f32
    %54 = vector.broadcast %cst_32 : f32 to vector<8x8xf32>
    %55 = arith.maximumf %53, %54 : vector<8x8xf32>
    %56 = tpu.iota {dimensions = array<i32: 1>} : vector<8x8xi32>
    %c1_i32_33 = arith.constant 1 : i32
    %57 = vector.broadcast %c1_i32_33 : i32 to vector<8x8xi32>
    %58 = arith.muli %57, %56 : vector<8x8xi32>
    %c2_i32 = arith.constant 2 : i32
    %59 = vector.broadcast %c2_i32 : i32 to vector<8x8xi32>
    %60 = arith.addi %59, %58 : vector<8x8xi32>
    %c1_i32_34 = arith.constant 1 : i32
    %61 = vector.broadcast %c1_i32_34 : i32 to vector<8x8xi32>
    %62 = arith.cmpi sge, %60, %61 : vector<8x8xi32>
    %c9_i32_35 = arith.constant 9 : i32
    %63 = vector.broadcast %c9_i32_35 : i32 to vector<8x8xi32>
    %64 = arith.cmpi slt, %60, %63 : vector<8x8xi32>
    %65 = arith.andi %62, %64 : vector<8x8xi1>
    %cst_36 = arith.constant 0.000000e+00 : f32
    %66 = vector.broadcast %cst_36 : f32 to vector<8x8xf32>
    %67 = arith.select %65, %55, %66 : vector<8x8xi1>, vector<8x8xf32>
    %c16 = arith.constant 16 : index
    %c0_37 = arith.constant 0 : index
    %68 = vector.load %arg10[%c16, %c0_37] : memref<24x8xf32, #tpu.memory_space<vmem>>, vector<8x8xf32>
    tpu.vector_store %arg10[%c16, %c0_37], %67 {strides = array<i32>} : memref<24x8xf32, #tpu.memory_space<vmem>>, vector<8x8xf32>,
    %c0_38 = arith.constant 0 : index
    %c0_39 = arith.constant 0 : index
    %69 = vector.load %arg4[%c0_38, %c0_39] : memref<8x24xbf16, #tpu.memory_space<vmem>>, vector<8x24xbf16>
    %c0_40 = arith.constant 0 : index
    %c0_41 = arith.constant 0 : index
    %70 = vector.load %arg10[%c0_40, %c0_41] : memref<24x8xf32, #tpu.memory_space<vmem>>, vector<24x8xf32>
    %71 = arith.truncf %70 : vector<24x8xf32> to vector<24x8xbf16>
    %cst_42 = arith.constant dense<0.000000e+00> : vector<8x8xf32>
    %72 = tpu.matmul %69, %71, %cst_42 {dimension_numbers = #tpu.dot_dimension_numbers<[1], [0], [0], [1], [0, 0, 1, 1], [], []>} : vector<8x24xbf16>, vector<24x8xbf16>, vector<8x8xf32> -> vector<8x8xf32>
    %c0_43 = arith.constant 0 : index
    %c0_44 = arith.constant 0 : index
    %73 = vector.load %arg5[%c0_43, %c0_44] : memref<8x1xf32, #tpu.memory_space<vmem>>, vector<8x1xf32>
    %74 = vector.broadcast %73 : vector<8x1xf32> to vector<8x8xf32>
    %75 = arith.mulf %72, %74 : vector<8x8xf32>
    %c0_45 = arith.constant 0 : index
    %c0_46 = arith.constant 0 : index
    %76 = vector.load %arg6[%c0_45, %c0_46] : memref<8x1xf32, #tpu.memory_space<vmem>>, vector<8x1xf32>
    %77 = vector.broadcast %76 : vector<8x1xf32> to vector<8x8xf32>
    %78 = arith.addf %75, %77 : vector<8x8xf32>
    %cst_47 = arith.constant 0.000000e+00 : f32
    %79 = vector.broadcast %cst_47 : f32 to vector<8x8xf32>
    %80 = arith.maximumf %78, %79 : vector<8x8xf32>
    %cst_48 = arith.constant 0.000000e+00 : f32
    %81 = vector.broadcast %cst_48 : f32 to vector<8x10xf32>
    %c0_49 = arith.constant 0 : index
    %c0_50 = arith.constant 0 : index
    %82 = vector.load %arg11[%c0_49, %c0_50] : memref<8x10xf32, #tpu.memory_space<vmem>>, vector<8x10xf32>
    tpu.vector_store %arg11[%c0_49, %c0_50], %81 {strides = array<i32>} : memref<8x10xf32, #tpu.memory_space<vmem>>, vector<8x10xf32>,
    %c0_51 = arith.constant 0 : index
    %c1_52 = arith.constant 1 : index
    %83 = vector.load %arg11[%c0_51, %c1_52] : memref<8x10xf32, #tpu.memory_space<vmem>>, vector<8x8xf32>
    tpu.vector_store %arg11[%c0_51, %c1_52], %80 {strides = array<i32>} : memref<8x10xf32, #tpu.memory_space<vmem>>, vector<8x8xf32>,
    %c0_53 = arith.constant 0 : index
    %c0_54 = arith.constant 0 : index
    %84 = vector.load %arg11[%c0_53, %c0_54] : memref<8x10xf32, #tpu.memory_space<vmem>>, vector<8x8xf32>
    %c0_55 = arith.constant 0 : index
    %c0_56 = arith.constant 0 : index
    %85 = vector.load %arg12[%c0_55, %c0_56] : memref<24x8xf32, #tpu.memory_space<vmem>>, vector<8x8xf32>
    tpu.vector_store %arg12[%c0_55, %c0_56], %84 {strides = array<i32>} : memref<24x8xf32, #tpu.memory_space<vmem>>, vector<8x8xf32>,
    %c0_57 = arith.constant 0 : index
    %c1_58 = arith.constant 1 : index
    %86 = vector.load %arg11[%c0_57, %c1_58] : memref<8x10xf32, #tpu.memory_space<vmem>>, vector<8x8xf32>
    %c8_59 = arith.constant 8 : index
    %c0_60 = arith.constant 0 : index
    %87 = vector.load %arg12[%c8_59, %c0_60] : memref<24x8xf32, #tpu.memory_space<vmem>>, vector<8x8xf32>
    tpu.vector_store %arg12[%c8_59, %c0_60], %86 {strides = array<i32>} : memref<24x8xf32, #tpu.memory_space<vmem>>, vector<8x8xf32>,
    %c0_61 = arith.constant 0 : index
    %c2_62 = arith.constant 2 : index
    %88 = vector.load %arg11[%c0_61, %c2_62] : memref<8x10xf32, #tpu.memory_space<vmem>>, vector<8x8xf32>
    %c16_63 = arith.constant 16 : index
    %c0_64 = arith.constant 0 : index
    %89 = vector.load %arg12[%c16_63, %c0_64] : memref<24x8xf32, #tpu.memory_space<vmem>>, vector<8x8xf32>
    tpu.vector_store %arg12[%c16_63, %c0_64], %88 {strides = array<i32>} : memref<24x8xf32, #tpu.memory_space<vmem>>, vector<8x8xf32>,
    %c0_65 = arith.constant 0 : index
    %c0_66 = arith.constant 0 : index
    %90 = vector.load %arg7[%c0_65, %c0_66] : memref<8x24xbf16, #tpu.memory_space<vmem>>, vector<8x24xbf16>
    %c0_67 = arith.constant 0 : index
    %c0_68 = arith.constant 0 : index
    %91 = vector.load %arg12[%c0_67, %c0_68] : memref<24x8xf32, #tpu.memory_space<vmem>>, vector<24x8xf32>
    %92 = arith.truncf %91 : vector<24x8xf32> to vector<24x8xbf16>
    %cst_69 = arith.constant dense<0.000000e+00> : vector<8x8xf32>
    %93 = tpu.matmul %90, %92, %cst_69 {dimension_numbers = #tpu.dot_dimension_numbers<[1], [0], [0], [1], [0, 0, 1, 1], [], []>} : vector<8x24xbf16>, vector<24x8xbf16>, vector<8x8xf32> -> vector<8x8xf32>
    %c0_70 = arith.constant 0 : index
    %c0_71 = arith.constant 0 : index
    %94 = vector.load %arg8[%c0_70, %c0_71] : memref<8x1xf32, #tpu.memory_space<vmem>>, vector<8x1xf32>
    %95 = vector.broadcast %94 : vector<8x1xf32> to vector<8x8xf32>
    %96 = arith.addf %93, %95 : vector<8x8xf32>
    %c0_72 = arith.constant 0 : index
    %c0_73 = arith.constant 0 : index
    %c0_74 = arith.constant 0 : index
    %c1_75 = arith.constant 1 : index
    %97 = vector.load %arg1[%c0_72, %c0_73, %c0_74, %c1_75] : memref<1x1x8x10xf32, #tpu.memory_space<vmem>>, vector<1x1x8x8xf32>
    %98 = vector.shape_cast %97 : vector<1x1x8x8xf32> to vector<8x8xf32>
    %99 = arith.addf %96, %98 : vector<8x8xf32>
    %c0_76 = arith.constant 0 : index
    %c0_77 = arith.constant 0 : index
    %c0_78 = arith.constant 0 : index
    %100 = vector.load %arg9[%c0_76, %c0_77, %c0_78] : memref<1x8x8xf32, #tpu.memory_space<vmem>>, vector<1x8x8xf32>
    %101 = vector.shape_cast %100 : vector<1x8x8xf32> to vector<8x8xf32>
    %102 = vector.shape_cast %99 : vector<8x8xf32> to vector<1x8x8xf32>
    tpu.vector_store %arg9[%c0_76, %c0_77, %c0_78], %102 {strides = array<i32>} : memref<1x8x8xf32, #tpu.memory_space<vmem>>, vector<1x8x8xf32>,
    return
  }
  func.func @transform_0(%arg0: i32) -> (i32, i32, i32, i32) {
    %c0_i32 = arith.constant 0 : i32
    %c0_i32_0 = arith.constant 0 : i32
    %c0_i32_1 = arith.constant 0 : i32
    %c0_i32_2 = arith.constant 0 : i32
    return %arg0, %c0_i32, %c0_i32_0, %c0_i32_1 : i32, i32, i32, i32
  }
  func.func @transform_1(%arg0: i32) -> (i32, i32) {
    %c0_i32 = arith.constant 0 : i32
    %c0_i32_0 = arith.constant 0 : i32
    %c0_i32_1 = arith.constant 0 : i32
    return %c0_i32, %c0_i32_0 : i32, i32
  }
  func.func @transform_2(%arg0: i32) -> (i32, i32) {
    %c0_i32 = arith.constant 0 : i32
    %c0_i32_0 = arith.constant 0 : i32
    %c0_i32_1 = arith.constant 0 : i32
    return %c0_i32, %c0_i32_0 : i32, i32
  }
  func.func @transform_3(%arg0: i32) -> (i32, i32) {
    %c0_i32 = arith.constant 0 : i32
    %c0_i32_0 = arith.constant 0 : i32
    %c0_i32_1 = arith.constant 0 : i32
    return %c0_i32, %c0_i32_0 : i32, i32
  }
  func.func @transform_4(%arg0: i32) -> (i32, i32) {
    %c0_i32 = arith.constant 0 : i32
    %c0_i32_0 = arith.constant 0 : i32
    %c0_i32_1 = arith.constant 0 : i32
    return %c0_i32, %c0_i32_0 : i32, i32
  }
  func.func @transform_5(%arg0: i32) -> (i32, i32) {
    %c0_i32 = arith.constant 0 : i32
    %c0_i32_0 = arith.constant 0 : i32
    %c0_i32_1 = arith.constant 0 : i32
    return %c0_i32, %c0_i32_0 : i32, i32
  }
  func.func @transform_6(%arg0: i32) -> (i32, i32) {
    %c0_i32 = arith.constant 0 : i32
    %c0_i32_0 = arith.constant 0 : i32
    %c0_i32_1 = arith.constant 0 : i32
    return %c0_i32, %c0_i32_0 : i32, i32
  }
  func.func @transform_7(%arg0: i32) -> (i32, i32) {
    %c0_i32 = arith.constant 0 : i32
    %c0_i32_0 = arith.constant 0 : i32
    %c0_i32_1 = arith.constant 0 : i32
    return %c0_i32, %c0_i32_0 : i32, i32
  }
  func.func @transform_8(%arg0: i32) -> (i32, i32, i32) {
    %c0_i32 = arith.constant 0 : i32
    %c0_i32_0 = arith.constant 0 : i32
    %c0_i32_1 = arith.constant 0 : i32
    return %arg0, %c0_i32, %c0_i32_0 : i32, i32, i32
  }
}

module attributes {stable_mosaic.version = 11 : i64} {
  func.func @kernel(%arg0: i32, %arg1: memref<1x2x8x5xf32, #tpu.memory_space<vmem>>, %arg2: memref<8x1xf32, #tpu.memory_space<vmem>>, %arg3: memref<8x1xf32, #tpu.memory_space<vmem>>, %arg4: memref<8x24xbf16, #tpu.memory_space<vmem>>, %arg5: memref<8x1xf32, #tpu.memory_space<vmem>>, %arg6: memref<8x1xf32, #tpu.memory_space<vmem>>, %arg7: memref<8x24xbf16, #tpu.memory_space<vmem>>, %arg8: memref<8x1xf32, #tpu.memory_space<vmem>>, %arg9: memref<1x2x8x4xf32, #tpu.memory_space<vmem>>, %arg10: memref<1x8x4xf32, #tpu.memory_space<vmem>>, %arg11: memref<24x4xf32, #tpu.memory_space<vmem>>, %arg12: memref<8x6xf32, #tpu.memory_space<vmem>>, %arg13: memref<24x4xf32, #tpu.memory_space<vmem>>) attributes {dimension_semantics = [#tpu.dimension_semantics<parallel>], iteration_bounds = array<i64: 2>, scalar_prefetch = 0 : i64, scratch_operands = 3 : i64, tpu.core_type = #tpu.core_type<tc>, window_params = [{transform_indices = @transform_0, window_bounds = array<i64: 1, 2, 8, 5>}, {pipeline_mode = #tpu.pipeline_mode<synchronous>, transform_indices = @transform_1, window_bounds = array<i64: 8, 1>}, {pipeline_mode = #tpu.pipeline_mode<synchronous>, transform_indices = @transform_2, window_bounds = array<i64: 8, 1>}, {pipeline_mode = #tpu.pipeline_mode<synchronous>, transform_indices = @transform_3, window_bounds = array<i64: 8, 24>}, {pipeline_mode = #tpu.pipeline_mode<synchronous>, transform_indices = @transform_4, window_bounds = array<i64: 8, 1>}, {pipeline_mode = #tpu.pipeline_mode<synchronous>, transform_indices = @transform_5, window_bounds = array<i64: 8, 1>}, {pipeline_mode = #tpu.pipeline_mode<synchronous>, transform_indices = @transform_6, window_bounds = array<i64: 8, 24>}, {pipeline_mode = #tpu.pipeline_mode<synchronous>, transform_indices = @transform_7, window_bounds = array<i64: 8, 1>}, {transform_indices = @transform_8, window_bounds = array<i64: 1, 2, 8, 4>}, {transform_indices = @transform_9, window_bounds = array<i64: 1, 8, 4>}]} {
    %c0 = arith.constant 0 : index
    %c0_0 = arith.constant 0 : index
    %c0_1 = arith.constant 0 : index
    %c0_2 = arith.constant 0 : index
    %0 = vector.load %arg1[%c0, %c0_0, %c0_1, %c0_2] : memref<1x2x8x5xf32, #tpu.memory_space<vmem>>, vector<1x1x8x4xf32>
    %1 = vector.shape_cast %0 : vector<1x1x8x4xf32> to vector<8x4xf32>
    %c0_3 = arith.constant 0 : index
    %c0_4 = arith.constant 0 : index
    %2 = vector.load %arg2[%c0_3, %c0_4] : memref<8x1xf32, #tpu.memory_space<vmem>>, vector<8x1xf32>
    %3 = vector.broadcast %2 : vector<8x1xf32> to vector<8x4xf32>
    %4 = arith.mulf %1, %3 : vector<8x4xf32>
    %c0_5 = arith.constant 0 : index
    %c0_6 = arith.constant 0 : index
    %5 = vector.load %arg3[%c0_5, %c0_6] : memref<8x1xf32, #tpu.memory_space<vmem>>, vector<8x1xf32>
    %6 = vector.broadcast %5 : vector<8x1xf32> to vector<8x4xf32>
    %7 = arith.addf %4, %6 : vector<8x4xf32>
    %cst = arith.constant 0.000000e+00 : f32
    %8 = vector.broadcast %cst : f32 to vector<8x4xf32>
    %9 = arith.maximumf %7, %8 : vector<8x4xf32>
    %10 = tpu.iota {dimensions = array<i32: 1>} : vector<8x4xi32>
    %c2_i32 = arith.constant 2 : i32
    %11 = vector.broadcast %c2_i32 : i32 to vector<8x4xi32>
    %12 = arith.muli %11, %10 : vector<8x4xi32>
    %c0_i32 = arith.constant 0 : i32
    %13 = vector.broadcast %c0_i32 : i32 to vector<8x4xi32>
    %14 = arith.addi %13, %12 : vector<8x4xi32>
    %c0_i32_7 = arith.constant 0 : i32
    %15 = vector.broadcast %c0_i32_7 : i32 to vector<8x4xi32>
    %16 = arith.cmpi sge, %14, %15 : vector<8x4xi32>
    %c8_i32 = arith.constant 8 : i32
    %17 = vector.broadcast %c8_i32 : i32 to vector<8x4xi32>
    %18 = arith.cmpi slt, %14, %17 : vector<8x4xi32>
    %19 = arith.andi %16, %18 : vector<8x4xi1>
    %cst_8 = arith.constant 0.000000e+00 : f32
    %20 = vector.broadcast %cst_8 : f32 to vector<8x4xf32>
    %21 = arith.select %19, %9, %20 : vector<8x4xi1>, vector<8x4xf32>
    %c0_9 = arith.constant 0 : index
    %c0_10 = arith.constant 0 : index
    %22 = vector.load %arg11[%c0_9, %c0_10] : memref<24x4xf32, #tpu.memory_space<vmem>>, vector<8x4xf32>
    tpu.vector_store %arg11[%c0_9, %c0_10], %21 {strides = array<i32>} : memref<24x4xf32, #tpu.memory_space<vmem>>, vector<8x4xf32>,
    %c0_11 = arith.constant 0 : index
    %c1 = arith.constant 1 : index
    %c0_12 = arith.constant 0 : index
    %c0_13 = arith.constant 0 : index
    %23 = vector.load %arg1[%c0_11, %c1, %c0_12, %c0_13] : memref<1x2x8x5xf32, #tpu.memory_space<vmem>>, vector<1x1x8x4xf32>
    %24 = vector.shape_cast %23 : vector<1x1x8x4xf32> to vector<8x4xf32>
    %c0_14 = arith.constant 0 : index
    %c0_15 = arith.constant 0 : index
    %25 = vector.load %arg2[%c0_14, %c0_15] : memref<8x1xf32, #tpu.memory_space<vmem>>, vector<8x1xf32>
    %26 = vector.broadcast %25 : vector<8x1xf32> to vector<8x4xf32>
    %27 = arith.mulf %24, %26 : vector<8x4xf32>
    %c0_16 = arith.constant 0 : index
    %c0_17 = arith.constant 0 : index
    %28 = vector.load %arg3[%c0_16, %c0_17] : memref<8x1xf32, #tpu.memory_space<vmem>>, vector<8x1xf32>
    %29 = vector.broadcast %28 : vector<8x1xf32> to vector<8x4xf32>
    %30 = arith.addf %27, %29 : vector<8x4xf32>
    %cst_18 = arith.constant 0.000000e+00 : f32
    %31 = vector.broadcast %cst_18 : f32 to vector<8x4xf32>
    %32 = arith.maximumf %30, %31 : vector<8x4xf32>
    %33 = tpu.iota {dimensions = array<i32: 1>} : vector<8x4xi32>
    %c2_i32_19 = arith.constant 2 : i32
    %34 = vector.broadcast %c2_i32_19 : i32 to vector<8x4xi32>
    %35 = arith.muli %34, %33 : vector<8x4xi32>
    %c1_i32 = arith.constant 1 : i32
    %36 = vector.broadcast %c1_i32 : i32 to vector<8x4xi32>
    %37 = arith.addi %36, %35 : vector<8x4xi32>
    %c0_i32_20 = arith.constant 0 : i32
    %38 = vector.broadcast %c0_i32_20 : i32 to vector<8x4xi32>
    %39 = arith.cmpi sge, %37, %38 : vector<8x4xi32>
    %c8_i32_21 = arith.constant 8 : i32
    %40 = vector.broadcast %c8_i32_21 : i32 to vector<8x4xi32>
    %41 = arith.cmpi slt, %37, %40 : vector<8x4xi32>
    %42 = arith.andi %39, %41 : vector<8x4xi1>
    %cst_22 = arith.constant 0.000000e+00 : f32
    %43 = vector.broadcast %cst_22 : f32 to vector<8x4xf32>
    %44 = arith.select %42, %32, %43 : vector<8x4xi1>, vector<8x4xf32>
    %c8 = arith.constant 8 : index
    %c0_23 = arith.constant 0 : index
    %45 = vector.load %arg11[%c8, %c0_23] : memref<24x4xf32, #tpu.memory_space<vmem>>, vector<8x4xf32>
    tpu.vector_store %arg11[%c8, %c0_23], %44 {strides = array<i32>} : memref<24x4xf32, #tpu.memory_space<vmem>>, vector<8x4xf32>,
    %c0_24 = arith.constant 0 : index
    %c0_25 = arith.constant 0 : index
    %c0_26 = arith.constant 0 : index
    %c1_27 = arith.constant 1 : index
    %46 = vector.load %arg1[%c0_24, %c0_25, %c0_26, %c1_27] : memref<1x2x8x5xf32, #tpu.memory_space<vmem>>, vector<1x1x8x4xf32>
    %47 = vector.shape_cast %46 : vector<1x1x8x4xf32> to vector<8x4xf32>
    %c0_28 = arith.constant 0 : index
    %c0_29 = arith.constant 0 : index
    %48 = vector.load %arg2[%c0_28, %c0_29] : memref<8x1xf32, #tpu.memory_space<vmem>>, vector<8x1xf32>
    %49 = vector.broadcast %48 : vector<8x1xf32> to vector<8x4xf32>
    %50 = arith.mulf %47, %49 : vector<8x4xf32>
    %c0_30 = arith.constant 0 : index
    %c0_31 = arith.constant 0 : index
    %51 = vector.load %arg3[%c0_30, %c0_31] : memref<8x1xf32, #tpu.memory_space<vmem>>, vector<8x1xf32>
    %52 = vector.broadcast %51 : vector<8x1xf32> to vector<8x4xf32>
    %53 = arith.addf %50, %52 : vector<8x4xf32>
    %cst_32 = arith.constant 0.000000e+00 : f32
    %54 = vector.broadcast %cst_32 : f32 to vector<8x4xf32>
    %55 = arith.maximumf %53, %54 : vector<8x4xf32>
    %56 = tpu.iota {dimensions = array<i32: 1>} : vector<8x4xi32>
    %c2_i32_33 = arith.constant 2 : i32
    %57 = vector.broadcast %c2_i32_33 : i32 to vector<8x4xi32>
    %58 = arith.muli %57, %56 : vector<8x4xi32>
    %c2_i32_34 = arith.constant 2 : i32
    %59 = vector.broadcast %c2_i32_34 : i32 to vector<8x4xi32>
    %60 = arith.addi %59, %58 : vector<8x4xi32>
    %c0_i32_35 = arith.constant 0 : i32
    %61 = vector.broadcast %c0_i32_35 : i32 to vector<8x4xi32>
    %62 = arith.cmpi sge, %60, %61 : vector<8x4xi32>
    %c8_i32_36 = arith.constant 8 : i32
    %63 = vector.broadcast %c8_i32_36 : i32 to vector<8x4xi32>
    %64 = arith.cmpi slt, %60, %63 : vector<8x4xi32>
    %65 = arith.andi %62, %64 : vector<8x4xi1>
    %cst_37 = arith.constant 0.000000e+00 : f32
    %66 = vector.broadcast %cst_37 : f32 to vector<8x4xf32>
    %67 = arith.select %65, %55, %66 : vector<8x4xi1>, vector<8x4xf32>
    %c16 = arith.constant 16 : index
    %c0_38 = arith.constant 0 : index
    %68 = vector.load %arg11[%c16, %c0_38] : memref<24x4xf32, #tpu.memory_space<vmem>>, vector<8x4xf32>
    tpu.vector_store %arg11[%c16, %c0_38], %67 {strides = array<i32>} : memref<24x4xf32, #tpu.memory_space<vmem>>, vector<8x4xf32>,
    %c0_39 = arith.constant 0 : index
    %c0_40 = arith.constant 0 : index
    %69 = vector.load %arg4[%c0_39, %c0_40] : memref<8x24xbf16, #tpu.memory_space<vmem>>, vector<8x24xbf16>
    %c0_41 = arith.constant 0 : index
    %c0_42 = arith.constant 0 : index
    %70 = vector.load %arg11[%c0_41, %c0_42] : memref<24x4xf32, #tpu.memory_space<vmem>>, vector<24x4xf32>
    %71 = arith.truncf %70 : vector<24x4xf32> to vector<24x4xbf16>
    %cst_43 = arith.constant dense<0.000000e+00> : vector<8x4xf32>
    %72 = tpu.matmul %69, %71, %cst_43 {dimension_numbers = #tpu.dot_dimension_numbers<[1], [0], [0], [1], [0, 0, 1, 1], [], []>} : vector<8x24xbf16>, vector<24x4xbf16>, vector<8x4xf32> -> vector<8x4xf32>
    %c0_44 = arith.constant 0 : index
    %c0_45 = arith.constant 0 : index
    %73 = vector.load %arg5[%c0_44, %c0_45] : memref<8x1xf32, #tpu.memory_space<vmem>>, vector<8x1xf32>
    %74 = vector.broadcast %73 : vector<8x1xf32> to vector<8x4xf32>
    %75 = arith.mulf %72, %74 : vector<8x4xf32>
    %c0_46 = arith.constant 0 : index
    %c0_47 = arith.constant 0 : index
    %76 = vector.load %arg6[%c0_46, %c0_47] : memref<8x1xf32, #tpu.memory_space<vmem>>, vector<8x1xf32>
    %77 = vector.broadcast %76 : vector<8x1xf32> to vector<8x4xf32>
    %78 = arith.addf %75, %77 : vector<8x4xf32>
    %cst_48 = arith.constant 0.000000e+00 : f32
    %79 = vector.broadcast %cst_48 : f32 to vector<8x4xf32>
    %80 = arith.maximumf %78, %79 : vector<8x4xf32>
    %cst_49 = arith.constant 0.000000e+00 : f32
    %81 = vector.broadcast %cst_49 : f32 to vector<8x6xf32>
    %c0_50 = arith.constant 0 : index
    %c0_51 = arith.constant 0 : index
    %82 = vector.load %arg12[%c0_50, %c0_51] : memref<8x6xf32, #tpu.memory_space<vmem>>, vector<8x6xf32>
    tpu.vector_store %arg12[%c0_50, %c0_51], %81 {strides = array<i32>} : memref<8x6xf32, #tpu.memory_space<vmem>>, vector<8x6xf32>,
    %c0_52 = arith.constant 0 : index
    %c1_53 = arith.constant 1 : index
    %83 = vector.load %arg12[%c0_52, %c1_53] : memref<8x6xf32, #tpu.memory_space<vmem>>, vector<8x4xf32>
    tpu.vector_store %arg12[%c0_52, %c1_53], %80 {strides = array<i32>} : memref<8x6xf32, #tpu.memory_space<vmem>>, vector<8x4xf32>,
    %c0_54 = arith.constant 0 : index
    %c0_55 = arith.constant 0 : index
    %84 = vector.load %arg12[%c0_54, %c0_55] : memref<8x6xf32, #tpu.memory_space<vmem>>, vector<8x4xf32>
    %c0_56 = arith.constant 0 : index
    %c0_57 = arith.constant 0 : index
    %85 = vector.load %arg13[%c0_56, %c0_57] : memref<24x4xf32, #tpu.memory_space<vmem>>, vector<8x4xf32>
    tpu.vector_store %arg13[%c0_56, %c0_57], %84 {strides = array<i32>} : memref<24x4xf32, #tpu.memory_space<vmem>>, vector<8x4xf32>,
    %c0_58 = arith.constant 0 : index
    %c1_59 = arith.constant 1 : index
    %86 = vector.load %arg12[%c0_58, %c1_59] : memref<8x6xf32, #tpu.memory_space<vmem>>, vector<8x4xf32>
    %c8_60 = arith.constant 8 : index
    %c0_61 = arith.constant 0 : index
    %87 = vector.load %arg13[%c8_60, %c0_61] : memref<24x4xf32, #tpu.memory_space<vmem>>, vector<8x4xf32>
    tpu.vector_store %arg13[%c8_60, %c0_61], %86 {strides = array<i32>} : memref<24x4xf32, #tpu.memory_space<vmem>>, vector<8x4xf32>,
    %c0_62 = arith.constant 0 : index
    %c2 = arith.constant 2 : index
    %88 = vector.load %arg12[%c0_62, %c2] : memref<8x6xf32, #tpu.memory_space<vmem>>, vector<8x4xf32>
    %c16_63 = arith.constant 16 : index
    %c0_64 = arith.constant 0 : index
    %89 = vector.load %arg13[%c16_63, %c0_64] : memref<24x4xf32, #tpu.memory_space<vmem>>, vector<8x4xf32>
    tpu.vector_store %arg13[%c16_63, %c0_64], %88 {strides = array<i32>} : memref<24x4xf32, #tpu.memory_space<vmem>>, vector<8x4xf32>,
    %c0_65 = arith.constant 0 : index
    %c0_66 = arith.constant 0 : index
    %90 = vector.load %arg7[%c0_65, %c0_66] : memref<8x24xbf16, #tpu.memory_space<vmem>>, vector<8x24xbf16>
    %c0_67 = arith.constant 0 : index
    %c0_68 = arith.constant 0 : index
    %91 = vector.load %arg13[%c0_67, %c0_68] : memref<24x4xf32, #tpu.memory_space<vmem>>, vector<24x4xf32>
    %92 = arith.truncf %91 : vector<24x4xf32> to vector<24x4xbf16>
    %cst_69 = arith.constant dense<0.000000e+00> : vector<8x4xf32>
    %93 = tpu.matmul %90, %92, %cst_69 {dimension_numbers = #tpu.dot_dimension_numbers<[1], [0], [0], [1], [0, 0, 1, 1], [], []>} : vector<8x24xbf16>, vector<24x4xbf16>, vector<8x4xf32> -> vector<8x4xf32>
    %c0_70 = arith.constant 0 : index
    %c0_71 = arith.constant 0 : index
    %94 = vector.load %arg8[%c0_70, %c0_71] : memref<8x1xf32, #tpu.memory_space<vmem>>, vector<8x1xf32>
    %95 = vector.broadcast %94 : vector<8x1xf32> to vector<8x4xf32>
    %96 = arith.addf %93, %95 : vector<8x4xf32>
    %c0_72 = arith.constant 0 : index
    %c0_73 = arith.constant 0 : index
    %c0_74 = arith.constant 0 : index
    %c0_75 = arith.constant 0 : index
    %97 = vector.load %arg9[%c0_72, %c0_73, %c0_74, %c0_75] : memref<1x2x8x4xf32, #tpu.memory_space<vmem>>, vector<1x1x8x4xf32>
    %98 = vector.shape_cast %97 : vector<1x1x8x4xf32> to vector<8x4xf32>
    %c0_76 = arith.constant 0 : index
    %c1_77 = arith.constant 1 : index
    %c0_78 = arith.constant 0 : index
    %c0_79 = arith.constant 0 : index
    %99 = vector.load %arg9[%c0_76, %c1_77, %c0_78, %c0_79] : memref<1x2x8x4xf32, #tpu.memory_space<vmem>>, vector<1x1x8x4xf32>
    %100 = vector.shape_cast %99 : vector<1x1x8x4xf32> to vector<8x4xf32>
    %101 = arith.maximumf %98, %100 : vector<8x4xf32>
    %102 = arith.addf %96, %101 : vector<8x4xf32>
    %c0_80 = arith.constant 0 : index
    %c0_81 = arith.constant 0 : index
    %c0_82 = arith.constant 0 : index
    %103 = vector.load %arg10[%c0_80, %c0_81, %c0_82] : memref<1x8x4xf32, #tpu.memory_space<vmem>>, vector<1x8x4xf32>
    %104 = vector.shape_cast %103 : vector<1x8x4xf32> to vector<8x4xf32>
    %105 = vector.shape_cast %102 : vector<8x4xf32> to vector<1x8x4xf32>
    tpu.vector_store %arg10[%c0_80, %c0_81, %c0_82], %105 {strides = array<i32>} : memref<1x8x4xf32, #tpu.memory_space<vmem>>, vector<1x8x4xf32>,
    return
  }
  func.func @transform_0(%arg0: i32) -> (i32, i32, i32, i32) {
    %c0_i32 = arith.constant 0 : i32
    %c0_i32_0 = arith.constant 0 : i32
    %c0_i32_1 = arith.constant 0 : i32
    %c0_i32_2 = arith.constant 0 : i32
    return %arg0, %c0_i32, %c0_i32_0, %c0_i32_1 : i32, i32, i32, i32
  }
  func.func @transform_1(%arg0: i32) -> (i32, i32) {
    %c0_i32 = arith.constant 0 : i32
    %c0_i32_0 = arith.constant 0 : i32
    %c0_i32_1 = arith.constant 0 : i32
    return %c0_i32, %c0_i32_0 : i32, i32
  }
  func.func @transform_2(%arg0: i32) -> (i32, i32) {
    %c0_i32 = arith.constant 0 : i32
    %c0_i32_0 = arith.constant 0 : i32
    %c0_i32_1 = arith.constant 0 : i32
    return %c0_i32, %c0_i32_0 : i32, i32
  }
  func.func @transform_3(%arg0: i32) -> (i32, i32) {
    %c0_i32 = arith.constant 0 : i32
    %c0_i32_0 = arith.constant 0 : i32
    %c0_i32_1 = arith.constant 0 : i32
    return %c0_i32, %c0_i32_0 : i32, i32
  }
  func.func @transform_4(%arg0: i32) -> (i32, i32) {
    %c0_i32 = arith.constant 0 : i32
    %c0_i32_0 = arith.constant 0 : i32
    %c0_i32_1 = arith.constant 0 : i32
    return %c0_i32, %c0_i32_0 : i32, i32
  }
  func.func @transform_5(%arg0: i32) -> (i32, i32) {
    %c0_i32 = arith.constant 0 : i32
    %c0_i32_0 = arith.constant 0 : i32
    %c0_i32_1 = arith.constant 0 : i32
    return %c0_i32, %c0_i32_0 : i32, i32
  }
  func.func @transform_6(%arg0: i32) -> (i32, i32) {
    %c0_i32 = arith.constant 0 : i32
    %c0_i32_0 = arith.constant 0 : i32
    %c0_i32_1 = arith.constant 0 : i32
    return %c0_i32, %c0_i32_0 : i32, i32
  }
  func.func @transform_7(%arg0: i32) -> (i32, i32) {
    %c0_i32 = arith.constant 0 : i32
    %c0_i32_0 = arith.constant 0 : i32
    %c0_i32_1 = arith.constant 0 : i32
    return %c0_i32, %c0_i32_0 : i32, i32
  }
  func.func @transform_8(%arg0: i32) -> (i32, i32, i32, i32) {
    %c0_i32 = arith.constant 0 : i32
    %c0_i32_0 = arith.constant 0 : i32
    %c0_i32_1 = arith.constant 0 : i32
    %c0_i32_2 = arith.constant 0 : i32
    return %arg0, %c0_i32, %c0_i32_0, %c0_i32_1 : i32, i32, i32, i32
  }
  func.func @transform_9(%arg0: i32) -> (i32, i32, i32) {
    %c0_i32 = arith.constant 0 : i32
    %c0_i32_0 = arith.constant 0 : i32
    %c0_i32_1 = arith.constant 0 : i32
    return %arg0, %c0_i32, %c0_i32_0 : i32, i32, i32
  }
}

module attributes {stable_mosaic.version = 11 : i64} {
  func.func @kernel(%arg0: i32, %arg1: memref<2x16x4xf32, #tpu.memory_space<vmem>>, %arg2: memref<16x1xf32, #tpu.memory_space<vmem>>, %arg3: memref<16x1xf32, #tpu.memory_space<vmem>>, %arg4: memref<2x16xf32, #tpu.memory_space<vmem>>) attributes {dimension_semantics = [#tpu.dimension_semantics<arbitrary>], iteration_bounds = array<i64: 1>, scalar_prefetch = 0 : i64, scratch_operands = 0 : i64, tpu.core_type = #tpu.core_type<tc>, window_params = [{pipeline_mode = #tpu.pipeline_mode<synchronous>, transform_indices = @transform_0, window_bounds = array<i64: 2, 16, 4>}, {pipeline_mode = #tpu.pipeline_mode<synchronous>, transform_indices = @transform_1, window_bounds = array<i64: 16, 1>}, {pipeline_mode = #tpu.pipeline_mode<synchronous>, transform_indices = @transform_2, window_bounds = array<i64: 16, 1>}, {pipeline_mode = #tpu.pipeline_mode<synchronous>, transform_indices = @transform_3, window_bounds = array<i64: 2, 16>}]} {
    %c0 = arith.constant 0 : index
    %c0_0 = arith.constant 0 : index
    %c0_1 = arith.constant 0 : index
    %0 = vector.load %arg1[%c0, %c0_0, %c0_1] : memref<2x16x4xf32, #tpu.memory_space<vmem>>, vector<2x16x4xf32>
    %c0_2 = arith.constant 0 : index
    %c0_3 = arith.constant 0 : index
    %1 = vector.load %arg2[%c0_2, %c0_3] : memref<16x1xf32, #tpu.memory_space<vmem>>, vector<16x1xf32>
    %2 = vector.shape_cast %1 : vector<16x1xf32> to vector<1x16x1xf32>
    %3 = vector.broadcast %2 : vector<1x16x1xf32> to vector<2x16x4xf32>
    %4 = arith.mulf %0, %3 : vector<2x16x4xf32>
    %c0_4 = arith.constant 0 : index
    %c0_5 = arith.constant 0 : index
    %5 = vector.load %arg3[%c0_4, %c0_5] : memref<16x1xf32, #tpu.memory_space<vmem>>, vector<16x1xf32>
    %6 = vector.shape_cast %5 : vector<16x1xf32> to vector<1x16x1xf32>
    %7 = vector.broadcast %6 : vector<1x16x1xf32> to vector<2x16x4xf32>
    %8 = arith.addf %4, %7 : vector<2x16x4xf32>
    %cst = arith.constant 0.000000e+00 : f32
    %9 = vector.broadcast %cst : f32 to vector<2x16x4xf32>
    %10 = arith.maximumf %8, %9 : vector<2x16x4xf32>
    %cst_6 = arith.constant dense<0.000000e+00> : vector<2x16xf32>
    %11 = vector.multi_reduction <add>, %10, %cst_6 [2] : vector<2x16x4xf32> to vector<2x16xf32>
    %cst_7 = arith.constant 4.000000e+00 : f32
    %12 = vector.broadcast %cst_7 : f32 to vector<2x16xf32>
    %13 = arith.divf %11, %12 : vector<2x16xf32>
    %c0_8 = arith.constant 0 : index
    %c0_9 = arith.constant 0 : index
    %14 = vector.load %arg4[%c0_8, %c0_9] : memref<2x16xf32, #tpu.memory_space<vmem>>, vector<2x16xf32>
    tpu.vector_store %arg4[%c0_8, %c0_9], %13 {strides = array<i32>} : memref<2x16xf32, #tpu.memory_space<vmem>>, vector<2x16xf32>,
    return
  }
  func.func @transform_0(%arg0: i32) -> (i32, i32, i32) {
    %c0_i32 = arith.constant 0 : i32
    %c0_i32_0 = arith.constant 0 : i32
    %c0_i32_1 = arith.constant 0 : i32
    %c0_i32_2 = arith.constant 0 : i32
    return %c0_i32, %c0_i32_0, %c0_i32_1 : i32, i32, i32
  }
  func.func @transform_1(%arg0: i32) -> (i32, i32) {
    %c0_i32 = arith.constant 0 : i32
    %c0_i32_0 = arith.constant 0 : i32
    %c0_i32_1 = arith.constant 0 : i32
    return %c0_i32, %c0_i32_0 : i32, i32
  }
  func.func @transform_2(%arg0: i32) -> (i32, i32) {
    %c0_i32 = arith.constant 0 : i32
    %c0_i32_0 = arith.constant 0 : i32
    %c0_i32_1 = arith.constant 0 : i32
    return %c0_i32, %c0_i32_0 : i32, i32
  }
  func.func @transform_3(%arg0: i32) -> (i32, i32) {
    %c0_i32 = arith.constant 0 : i32
    %c0_i32_0 = arith.constant 0 : i32
    %c0_i32_1 = arith.constant 0 : i32
    return %c0_i32, %c0_i32_0 : i32, i32
  }
}

module attributes {stable_mosaic.version = 11 : i64} {
  func.func @kernel(%arg0: i32, %arg1: memref<1x1x8x6xf32, #tpu.memory_space<vmem>>, %arg2: memref<8x1xf32, #tpu.memory_space<vmem>>, %arg3: memref<8x1xf32, #tpu.memory_space<vmem>>, %arg4: memref<16x24xbf16, #tpu.memory_space<vmem>>, %arg5: memref<16x1xf32, #tpu.memory_space<vmem>>, %arg6: memref<16x1xf32, #tpu.memory_space<vmem>>, %arg7: memref<16x48xbf16, #tpu.memory_space<vmem>>, %arg8: memref<16x1xf32, #tpu.memory_space<vmem>>, %arg9: memref<1x16x4xf32, #tpu.memory_space<vmem>>, %arg10: memref<24x4xf32, #tpu.memory_space<vmem>>, %arg11: memref<16x6xf32, #tpu.memory_space<vmem>>, %arg12: memref<48x4xf32, #tpu.memory_space<vmem>>) attributes {dimension_semantics = [#tpu.dimension_semantics<parallel>], iteration_bounds = array<i64: 2>, scalar_prefetch = 0 : i64, scratch_operands = 3 : i64, tpu.core_type = #tpu.core_type<tc>, window_params = [{transform_indices = @transform_0, window_bounds = array<i64: 1, 1, 8, 6>}, {pipeline_mode = #tpu.pipeline_mode<synchronous>, transform_indices = @transform_1, window_bounds = array<i64: 8, 1>}, {pipeline_mode = #tpu.pipeline_mode<synchronous>, transform_indices = @transform_2, window_bounds = array<i64: 8, 1>}, {pipeline_mode = #tpu.pipeline_mode<synchronous>, transform_indices = @transform_3, window_bounds = array<i64: 16, 24>}, {pipeline_mode = #tpu.pipeline_mode<synchronous>, transform_indices = @transform_4, window_bounds = array<i64: 16, 1>}, {pipeline_mode = #tpu.pipeline_mode<synchronous>, transform_indices = @transform_5, window_bounds = array<i64: 16, 1>}, {pipeline_mode = #tpu.pipeline_mode<synchronous>, transform_indices = @transform_6, window_bounds = array<i64: 16, 48>}, {pipeline_mode = #tpu.pipeline_mode<synchronous>, transform_indices = @transform_7, window_bounds = array<i64: 16, 1>}, {transform_indices = @transform_8, window_bounds = array<i64: 1, 16, 4>}]} {
    %c0 = arith.constant 0 : index
    %c0_0 = arith.constant 0 : index
    %c0_1 = arith.constant 0 : index
    %c0_2 = arith.constant 0 : index
    %0 = vector.load %arg1[%c0, %c0_0, %c0_1, %c0_2] : memref<1x1x8x6xf32, #tpu.memory_space<vmem>>, vector<1x1x8x4xf32>
    %1 = vector.shape_cast %0 : vector<1x1x8x4xf32> to vector<8x4xf32>
    %c0_3 = arith.constant 0 : index
    %c0_4 = arith.constant 0 : index
    %2 = vector.load %arg2[%c0_3, %c0_4] : memref<8x1xf32, #tpu.memory_space<vmem>>, vector<8x1xf32>
    %3 = vector.broadcast %2 : vector<8x1xf32> to vector<8x4xf32>
    %4 = arith.mulf %1, %3 : vector<8x4xf32>
    %c0_5 = arith.constant 0 : index
    %c0_6 = arith.constant 0 : index
    %5 = vector.load %arg3[%c0_5, %c0_6] : memref<8x1xf32, #tpu.memory_space<vmem>>, vector<8x1xf32>
    %6 = vector.broadcast %5 : vector<8x1xf32> to vector<8x4xf32>
    %7 = arith.addf %4, %6 : vector<8x4xf32>
    %cst = arith.constant 0.000000e+00 : f32
    %8 = vector.broadcast %cst : f32 to vector<8x4xf32>
    %9 = arith.maximumf %7, %8 : vector<8x4xf32>
    %10 = tpu.iota {dimensions = array<i32: 1>} : vector<8x4xi32>
    %c1_i32 = arith.constant 1 : i32
    %11 = vector.broadcast %c1_i32 : i32 to vector<8x4xi32>
    %12 = arith.muli %11, %10 : vector<8x4xi32>
    %c0_i32 = arith.constant 0 : i32
    %13 = vector.broadcast %c0_i32 : i32 to vector<8x4xi32>
    %14 = arith.addi %13, %12 : vector<8x4xi32>
    %c1_i32_7 = arith.constant 1 : i32
    %15 = vector.broadcast %c1_i32_7 : i32 to vector<8x4xi32>
    %16 = arith.cmpi sge, %14, %15 : vector<8x4xi32>
    %c5_i32 = arith.constant 5 : i32
    %17 = vector.broadcast %c5_i32 : i32 to vector<8x4xi32>
    %18 = arith.cmpi slt, %14, %17 : vector<8x4xi32>
    %19 = arith.andi %16, %18 : vector<8x4xi1>
    %cst_8 = arith.constant 0.000000e+00 : f32
    %20 = vector.broadcast %cst_8 : f32 to vector<8x4xf32>
    %21 = arith.select %19, %9, %20 : vector<8x4xi1>, vector<8x4xf32>
    %c0_9 = arith.constant 0 : index
    %c0_10 = arith.constant 0 : index
    %22 = vector.load %arg10[%c0_9, %c0_10] : memref<24x4xf32, #tpu.memory_space<vmem>>, vector<8x4xf32>
    tpu.vector_store %arg10[%c0_9, %c0_10], %21 {strides = array<i32>} : memref<24x4xf32, #tpu.memory_space<vmem>>, vector<8x4xf32>,
    %c0_11 = arith.constant 0 : index
    %c0_12 = arith.constant 0 : index
    %c0_13 = arith.constant 0 : index
    %c1 = arith.constant 1 : index
    %23 = vector.load %arg1[%c0_11, %c0_12, %c0_13, %c1] : memref<1x1x8x6xf32, #tpu.memory_space<vmem>>, vector<1x1x8x4xf32>
    %24 = vector.shape_cast %23 : vector<1x1x8x4xf32> to vector<8x4xf32>
    %c0_14 = arith.constant 0 : index
    %c0_15 = arith.constant 0 : index
    %25 = vector.load %arg2[%c0_14, %c0_15] : memref<8x1xf32, #tpu.memory_space<vmem>>, vector<8x1xf32>
    %26 = vector.broadcast %25 : vector<8x1xf32> to vector<8x4xf32>
    %27 = arith.mulf %24, %26 : vector<8x4xf32>
    %c0_16 = arith.constant 0 : index
    %c0_17 = arith.constant 0 : index
    %28 = vector.load %arg3[%c0_16, %c0_17] : memref<8x1xf32, #tpu.memory_space<vmem>>, vector<8x1xf32>
    %29 = vector.broadcast %28 : vector<8x1xf32> to vector<8x4xf32>
    %30 = arith.addf %27, %29 : vector<8x4xf32>
    %cst_18 = arith.constant 0.000000e+00 : f32
    %31 = vector.broadcast %cst_18 : f32 to vector<8x4xf32>
    %32 = arith.maximumf %30, %31 : vector<8x4xf32>
    %33 = tpu.iota {dimensions = array<i32: 1>} : vector<8x4xi32>
    %c1_i32_19 = arith.constant 1 : i32
    %34 = vector.broadcast %c1_i32_19 : i32 to vector<8x4xi32>
    %35 = arith.muli %34, %33 : vector<8x4xi32>
    %c1_i32_20 = arith.constant 1 : i32
    %36 = vector.broadcast %c1_i32_20 : i32 to vector<8x4xi32>
    %37 = arith.addi %36, %35 : vector<8x4xi32>
    %c1_i32_21 = arith.constant 1 : i32
    %38 = vector.broadcast %c1_i32_21 : i32 to vector<8x4xi32>
    %39 = arith.cmpi sge, %37, %38 : vector<8x4xi32>
    %c5_i32_22 = arith.constant 5 : i32
    %40 = vector.broadcast %c5_i32_22 : i32 to vector<8x4xi32>
    %41 = arith.cmpi slt, %37, %40 : vector<8x4xi32>
    %42 = arith.andi %39, %41 : vector<8x4xi1>
    %cst_23 = arith.constant 0.000000e+00 : f32
    %43 = vector.broadcast %cst_23 : f32 to vector<8x4xf32>
    %44 = arith.select %42, %32, %43 : vector<8x4xi1>, vector<8x4xf32>
    %c8 = arith.constant 8 : index
    %c0_24 = arith.constant 0 : index
    %45 = vector.load %arg10[%c8, %c0_24] : memref<24x4xf32, #tpu.memory_space<vmem>>, vector<8x4xf32>
    tpu.vector_store %arg10[%c8, %c0_24], %44 {strides = array<i32>} : memref<24x4xf32, #tpu.memory_space<vmem>>, vector<8x4xf32>,
    %c0_25 = arith.constant 0 : index
    %c0_26 = arith.constant 0 : index
    %c0_27 = arith.constant 0 : index
    %c2 = arith.constant 2 : index
    %46 = vector.load %arg1[%c0_25, %c0_26, %c0_27, %c2] : memref<1x1x8x6xf32, #tpu.memory_space<vmem>>, vector<1x1x8x4xf32>
    %47 = vector.shape_cast %46 : vector<1x1x8x4xf32> to vector<8x4xf32>
    %c0_28 = arith.constant 0 : index
    %c0_29 = arith.constant 0 : index
    %48 = vector.load %arg2[%c0_28, %c0_29] : memref<8x1xf32, #tpu.memory_space<vmem>>, vector<8x1xf32>
    %49 = vector.broadcast %48 : vector<8x1xf32> to vector<8x4xf32>
    %50 = arith.mulf %47, %49 : vector<8x4xf32>
    %c0_30 = arith.constant 0 : index
    %c0_31 = arith.constant 0 : index
    %51 = vector.load %arg3[%c0_30, %c0_31] : memref<8x1xf32, #tpu.memory_space<vmem>>, vector<8x1xf32>
    %52 = vector.broadcast %51 : vector<8x1xf32> to vector<8x4xf32>
    %53 = arith.addf %50, %52 : vector<8x4xf32>
    %cst_32 = arith.constant 0.000000e+00 : f32
    %54 = vector.broadcast %cst_32 : f32 to vector<8x4xf32>
    %55 = arith.maximumf %53, %54 : vector<8x4xf32>
    %56 = tpu.iota {dimensions = array<i32: 1>} : vector<8x4xi32>
    %c1_i32_33 = arith.constant 1 : i32
    %57 = vector.broadcast %c1_i32_33 : i32 to vector<8x4xi32>
    %58 = arith.muli %57, %56 : vector<8x4xi32>
    %c2_i32 = arith.constant 2 : i32
    %59 = vector.broadcast %c2_i32 : i32 to vector<8x4xi32>
    %60 = arith.addi %59, %58 : vector<8x4xi32>
    %c1_i32_34 = arith.constant 1 : i32
    %61 = vector.broadcast %c1_i32_34 : i32 to vector<8x4xi32>
    %62 = arith.cmpi sge, %60, %61 : vector<8x4xi32>
    %c5_i32_35 = arith.constant 5 : i32
    %63 = vector.broadcast %c5_i32_35 : i32 to vector<8x4xi32>
    %64 = arith.cmpi slt, %60, %63 : vector<8x4xi32>
    %65 = arith.andi %62, %64 : vector<8x4xi1>
    %cst_36 = arith.constant 0.000000e+00 : f32
    %66 = vector.broadcast %cst_36 : f32 to vector<8x4xf32>
    %67 = arith.select %65, %55, %66 : vector<8x4xi1>, vector<8x4xf32>
    %c16 = arith.constant 16 : index
    %c0_37 = arith.constant 0 : index
    %68 = vector.load %arg10[%c16, %c0_37] : memref<24x4xf32, #tpu.memory_space<vmem>>, vector<8x4xf32>
    tpu.vector_store %arg10[%c16, %c0_37], %67 {strides = array<i32>} : memref<24x4xf32, #tpu.memory_space<vmem>>, vector<8x4xf32>,
    %c0_38 = arith.constant 0 : index
    %c0_39 = arith.constant 0 : index
    %69 = vector.load %arg4[%c0_38, %c0_39] : memref<16x24xbf16, #tpu.memory_space<vmem>>, vector<16x24xbf16>
    %c0_40 = arith.constant 0 : index
    %c0_41 = arith.constant 0 : index
    %70 = vector.load %arg10[%c0_40, %c0_41] : memref<24x4xf32, #tpu.memory_space<vmem>>, vector<24x4xf32>
    %71 = arith.truncf %70 : vector<24x4xf32> to vector<24x4xbf16>
    %cst_42 = arith.constant dense<0.000000e+00> : vector<16x4xf32>
    %72 = tpu.matmul %69, %71, %cst_42 {dimension_numbers = #tpu.dot_dimension_numbers<[1], [0], [0], [1], [0, 0, 1, 1], [], []>} : vector<16x24xbf16>, vector<24x4xbf16>, vector<16x4xf32> -> vector<16x4xf32>
    %c0_43 = arith.constant 0 : index
    %c0_44 = arith.constant 0 : index
    %73 = vector.load %arg5[%c0_43, %c0_44] : memref<16x1xf32, #tpu.memory_space<vmem>>, vector<16x1xf32>
    %74 = vector.broadcast %73 : vector<16x1xf32> to vector<16x4xf32>
    %75 = arith.mulf %72, %74 : vector<16x4xf32>
    %c0_45 = arith.constant 0 : index
    %c0_46 = arith.constant 0 : index
    %76 = vector.load %arg6[%c0_45, %c0_46] : memref<16x1xf32, #tpu.memory_space<vmem>>, vector<16x1xf32>
    %77 = vector.broadcast %76 : vector<16x1xf32> to vector<16x4xf32>
    %78 = arith.addf %75, %77 : vector<16x4xf32>
    %cst_47 = arith.constant 0.000000e+00 : f32
    %79 = vector.broadcast %cst_47 : f32 to vector<16x4xf32>
    %80 = arith.maximumf %78, %79 : vector<16x4xf32>
    %cst_48 = arith.constant 0.000000e+00 : f32
    %81 = vector.broadcast %cst_48 : f32 to vector<16x6xf32>
    %c0_49 = arith.constant 0 : index
    %c0_50 = arith.constant 0 : index
    %82 = vector.load %arg11[%c0_49, %c0_50] : memref<16x6xf32, #tpu.memory_space<vmem>>, vector<16x6xf32>
    tpu.vector_store %arg11[%c0_49, %c0_50], %81 {strides = array<i32>} : memref<16x6xf32, #tpu.memory_space<vmem>>, vector<16x6xf32>,
    %c0_51 = arith.constant 0 : index
    %c1_52 = arith.constant 1 : index
    %83 = vector.load %arg11[%c0_51, %c1_52] : memref<16x6xf32, #tpu.memory_space<vmem>>, vector<16x4xf32>
    tpu.vector_store %arg11[%c0_51, %c1_52], %80 {strides = array<i32>} : memref<16x6xf32, #tpu.memory_space<vmem>>, vector<16x4xf32>,
    %c0_53 = arith.constant 0 : index
    %c0_54 = arith.constant 0 : index
    %84 = vector.load %arg11[%c0_53, %c0_54] : memref<16x6xf32, #tpu.memory_space<vmem>>, vector<16x4xf32>
    %c0_55 = arith.constant 0 : index
    %c0_56 = arith.constant 0 : index
    %85 = vector.load %arg12[%c0_55, %c0_56] : memref<48x4xf32, #tpu.memory_space<vmem>>, vector<16x4xf32>
    tpu.vector_store %arg12[%c0_55, %c0_56], %84 {strides = array<i32>} : memref<48x4xf32, #tpu.memory_space<vmem>>, vector<16x4xf32>,
    %c0_57 = arith.constant 0 : index
    %c1_58 = arith.constant 1 : index
    %86 = vector.load %arg11[%c0_57, %c1_58] : memref<16x6xf32, #tpu.memory_space<vmem>>, vector<16x4xf32>
    %c16_59 = arith.constant 16 : index
    %c0_60 = arith.constant 0 : index
    %87 = vector.load %arg12[%c16_59, %c0_60] : memref<48x4xf32, #tpu.memory_space<vmem>>, vector<16x4xf32>
    tpu.vector_store %arg12[%c16_59, %c0_60], %86 {strides = array<i32>} : memref<48x4xf32, #tpu.memory_space<vmem>>, vector<16x4xf32>,
    %c0_61 = arith.constant 0 : index
    %c2_62 = arith.constant 2 : index
    %88 = vector.load %arg11[%c0_61, %c2_62] : memref<16x6xf32, #tpu.memory_space<vmem>>, vector<16x4xf32>
    %c32 = arith.constant 32 : index
    %c0_63 = arith.constant 0 : index
    %89 = vector.load %arg12[%c32, %c0_63] : memref<48x4xf32, #tpu.memory_space<vmem>>, vector<16x4xf32>
    tpu.vector_store %arg12[%c32, %c0_63], %88 {strides = array<i32>} : memref<48x4xf32, #tpu.memory_space<vmem>>, vector<16x4xf32>,
    %c0_64 = arith.constant 0 : index
    %c0_65 = arith.constant 0 : index
    %90 = vector.load %arg7[%c0_64, %c0_65] : memref<16x48xbf16, #tpu.memory_space<vmem>>, vector<16x48xbf16>
    %c0_66 = arith.constant 0 : index
    %c0_67 = arith.constant 0 : index
    %91 = vector.load %arg12[%c0_66, %c0_67] : memref<48x4xf32, #tpu.memory_space<vmem>>, vector<48x4xf32>
    %92 = arith.truncf %91 : vector<48x4xf32> to vector<48x4xbf16>
    %cst_68 = arith.constant dense<0.000000e+00> : vector<16x4xf32>
    %93 = tpu.matmul %90, %92, %cst_68 {dimension_numbers = #tpu.dot_dimension_numbers<[1], [0], [0], [1], [0, 0, 1, 1], [], []>} : vector<16x48xbf16>, vector<48x4xbf16>, vector<16x4xf32> -> vector<16x4xf32>
    %c0_69 = arith.constant 0 : index
    %c0_70 = arith.constant 0 : index
    %94 = vector.load %arg8[%c0_69, %c0_70] : memref<16x1xf32, #tpu.memory_space<vmem>>, vector<16x1xf32>
    %95 = vector.broadcast %94 : vector<16x1xf32> to vector<16x4xf32>
    %96 = arith.addf %93, %95 : vector<16x4xf32>
    %c0_71 = arith.constant 0 : index
    %c0_72 = arith.constant 0 : index
    %c0_73 = arith.constant 0 : index
    %c1_74 = arith.constant 1 : index
    %97 = vector.load %arg1[%c0_71, %c0_72, %c0_73, %c1_74] : memref<1x1x8x6xf32, #tpu.memory_space<vmem>>, vector<1x1x8x4xf32>
    %98 = vector.shape_cast %97 : vector<1x1x8x4xf32> to vector<8x4xf32>
    %c0_75 = arith.constant 0 : index
    %c0_76 = arith.constant 0 : index
    %c0_77 = arith.constant 0 : index
    %99 = vector.load %arg9[%c0_75, %c0_76, %c0_77] : memref<1x16x4xf32, #tpu.memory_space<vmem>>, vector<1x16x4xf32>
    %100 = vector.shape_cast %99 : vector<1x16x4xf32> to vector<16x4xf32>
    %101 = vector.shape_cast %96 : vector<16x4xf32> to vector<1x16x4xf32>
    tpu.vector_store %arg9[%c0_75, %c0_76, %c0_77], %101 {strides = array<i32>} : memref<1x16x4xf32, #tpu.memory_space<vmem>>, vector<1x16x4xf32>,
    %102 = vector.extract_strided_slice %96 {offsets = [4, 0], sizes = [8, 4], strides = [1, 1]} : vector<16x4xf32> to vector<8x4xf32>
    %103 = arith.addf %102, %98 : vector<8x4xf32>
    %c0_78 = arith.constant 0 : index
    %c4 = arith.constant 4 : index
    %c0_79 = arith.constant 0 : index
    %104 = vector.load %arg9[%c0_78, %c4, %c0_79] : memref<1x16x4xf32, #tpu.memory_space<vmem>>, vector<1x8x4xf32>
    %105 = vector.shape_cast %104 : vector<1x8x4xf32> to vector<8x4xf32>
    %106 = vector.shape_cast %103 : vector<8x4xf32> to vector<1x8x4xf32>
    tpu.vector_store %arg9[%c0_78, %c4, %c0_79], %106 {strides = array<i32>} : memref<1x16x4xf32, #tpu.memory_space<vmem>>, vector<1x8x4xf32>,
    return
  }
  func.func @transform_0(%arg0: i32) -> (i32, i32, i32, i32) {
    %c0_i32 = arith.constant 0 : i32
    %c0_i32_0 = arith.constant 0 : i32
    %c0_i32_1 = arith.constant 0 : i32
    %c0_i32_2 = arith.constant 0 : i32
    return %arg0, %c0_i32, %c0_i32_0, %c0_i32_1 : i32, i32, i32, i32
  }
  func.func @transform_1(%arg0: i32) -> (i32, i32) {
    %c0_i32 = arith.constant 0 : i32
    %c0_i32_0 = arith.constant 0 : i32
    %c0_i32_1 = arith.constant 0 : i32
    return %c0_i32, %c0_i32_0 : i32, i32
  }
  func.func @transform_2(%arg0: i32) -> (i32, i32) {
    %c0_i32 = arith.constant 0 : i32
    %c0_i32_0 = arith.constant 0 : i32
    %c0_i32_1 = arith.constant 0 : i32
    return %c0_i32, %c0_i32_0 : i32, i32
  }
  func.func @transform_3(%arg0: i32) -> (i32, i32) {
    %c0_i32 = arith.constant 0 : i32
    %c0_i32_0 = arith.constant 0 : i32
    %c0_i32_1 = arith.constant 0 : i32
    return %c0_i32, %c0_i32_0 : i32, i32
  }
  func.func @transform_4(%arg0: i32) -> (i32, i32) {
    %c0_i32 = arith.constant 0 : i32
    %c0_i32_0 = arith.constant 0 : i32
    %c0_i32_1 = arith.constant 0 : i32
    return %c0_i32, %c0_i32_0 : i32, i32
  }
  func.func @transform_5(%arg0: i32) -> (i32, i32) {
    %c0_i32 = arith.constant 0 : i32
    %c0_i32_0 = arith.constant 0 : i32
    %c0_i32_1 = arith.constant 0 : i32
    return %c0_i32, %c0_i32_0 : i32, i32
  }
  func.func @transform_6(%arg0: i32) -> (i32, i32) {
    %c0_i32 = arith.constant 0 : i32
    %c0_i32_0 = arith.constant 0 : i32
    %c0_i32_1 = arith.constant 0 : i32
    return %c0_i32, %c0_i32_0 : i32, i32
  }
  func.func @transform_7(%arg0: i32) -> (i32, i32) {
    %c0_i32 = arith.constant 0 : i32
    %c0_i32_0 = arith.constant 0 : i32
    %c0_i32_1 = arith.constant 0 : i32
    return %c0_i32, %c0_i32_0 : i32, i32
  }
  func.func @transform_8(%arg0: i32) -> (i32, i32, i32) {
    %c0_i32 = arith.constant 0 : i32
    %c0_i32_0 = arith.constant 0 : i32
    %c0_i32_1 = arith.constant 0 : i32
    return %arg0, %c0_i32, %c0_i32_0 : i32, i32, i32
  }
}

</mosaic_0001>

<llo_original>
// kernel: resnet1d_encoder_forward.7
$region0: #{resnet1d_encoder_forward.7}
  #allocation0 [shape = 'u32[]', space=smem, size = 0x4, offset = 0x4, fixed_abs, tag = 'smem constant byte address 0x4 - core index']
  #allocation1 [shape = 'u32[144,128]{1,0:T(1,128)}', space=vmem, size = 0x12000, scoped, tag = 'internal scratch']
  #allocation2 [shape = 'f32[12,16]{1,0:T(8,128)}', space=vmem, size = 0x2000, scoped, tag = 'scratch operand']
  %s0 = inlined_call_operand.vmem [shape: f32[2,4,18], index: 0, kind: input, shape index: {}]
  %s1 = inlined_call_operand.vmem [shape: bf16[8,12], index: 1, kind: input, shape index: {}]
  %s2 = inlined_call_operand.vmem [shape: f32[8,1], index: 2, kind: input, shape index: {}]
  %s3 = inlined_call_operand.vmem [shape: f32[8,1], index: 3, kind: input, shape index: {}]
  %s4 = inlined_call_operand.vmem [shape: f32[2,8,16], index: 4, kind: output, shape index: {}]
  %s5 = sld [smem:[#allocation0]]
  $region49: #{resnet1d_encoder_forward.7} parent=0
    _
  %s7 = ssub.s32 1, %s5
  %s8 = scalar_select 0, %s7, %s5
  loop: start=0, step=1, limit=4
  $region2: #{resnet1d_encoder_forward.7} parent=0 // loop_pre_header
    _
  $region3: #{resnet1d_encoder_forward.7} parent=0 // loop_header
    %s10 = sphi 0, %s14
    %p11 = scmp.ge.s32.totalorder %s10, 4
    %s20 = sphi 0, %s22
    %s23 = sphi 0, %s20
    %s24 = sphi 0, %s23
    %s40 = sphi 0, %s24
    %s44 = sphi 0, %s44
    %s46 = sphi 0, %s44
    %s47 = sphi 0, %s46
    %s61 = sphi 0, %s47
    %s65 = sphi 0, %s65
    %s67 = sphi 0, %s65
    %s68 = sphi 0, %s67
    %s82 = sphi 0, %s68
    %s86 = sphi 0, %s86
    %s88 = sphi 0, %s86
    %s89 = sphi 0, %s88
    %s103 = sphi 0, %s89
    %s109 = sphi 0, %s111
    %s112 = sphi 0, %s109
    %s113 = sphi 0, %s112
    %s129 = sphi 0, %s113
  $region4: #{resnet1d_encoder_forward.7} parent=0 // loop_header_branch
    %13 = sbr.rel (%p11) target = $region8
  $region5: #{resnet1d_encoder_forward.7} parent=0 // loop_body
    %s15 = ssub.s32 %s10, 1
    %s16 = ssub.s32 %s10, 2
    %s17 = sadd.s32 %s10, 1
    %s18 = ssub.s32 %s10, %s17
    %p19 = scmp.eq.s32.totalorder %s18, 0
    %s21 = sadd.s32 %s20, 1
    %s22 = scalar_select %p19, %s20, %s21
    %p25 = pneg %p19
    %p26 = scmp.eq.s32.totalorder %s10, 1
    %p27 = por %p25, %p26
    %p28 = scmp.ne.s32.totalorder %s20, %s23
    %p29 = scmp.eq.s32.totalorder %s10, 0
    %p30 = por %p28, %p29
    %p31 = scmp.ne.s32.totalorder %s20, %s23
    %p32 = scmp.eq.s32.totalorder %s15, 1
    %p33 = por %p31, %p32
    %p34 = scmp.ne.s32.totalorder %s23, %s24
    %p35 = scmp.eq.s32.totalorder %s15, 0
    %p36 = por %p34, %p35
    %p37 = scmp.ne.s32.totalorder %s23, %s24
    %p38 = scmp.eq.s32.totalorder %s16, 1
    %p39 = por %p37, %p38
    %p41 = scmp.ne.s32.totalorder %s24, %s40
    %p42 = scmp.eq.s32.totalorder %s16, 0
    %p43 = por %p41, %p42
    %s45 = sadd.s32 %s44, 1
    %p48 = scmp.eq.s32.totalorder %s10, 1
    %p49 = scmp.ne.s32.totalorder %s44, %s46
    %p50 = scmp.eq.s32.totalorder %s10, 0
    %p51 = por %p49, %p50
    %p52 = scmp.ne.s32.totalorder %s44, %s46
    %p53 = scmp.eq.s32.totalorder %s15, 1
    %p54 = por %p52, %p53
    %p55 = scmp.ne.s32.totalorder %s46, %s47
    %p56 = scmp.eq.s32.totalorder %s15, 0
    %p57 = por %p55, %p56
    %p58 = scmp.ne.s32.totalorder %s46, %s47
    %p59 = scmp.eq.s32.totalorder %s16, 1
    %p60 = por %p58, %p59
    %p62 = scmp.ne.s32.totalorder %s47, %s61
    %p63 = scmp.eq.s32.totalorder %s16, 0
    %p64 = por %p62, %p63
    %s66 = sadd.s32 %s65, 1
    %p69 = scmp.eq.s32.totalorder %s10, 1
    %p70 = scmp.ne.s32.totalorder %s65, %s67
    %p71 = scmp.eq.s32.totalorder %s10, 0
    %p72 = por %p70, %p71
    %p73 = scmp.ne.s32.totalorder %s65, %s67
    %p74 = scmp.eq.s32.totalorder %s15, 1
    %p75 = por %p73, %p74
    %p76 = scmp.ne.s32.totalorder %s67, %s68
    %p77 = scmp.eq.s32.totalorder %s15, 0
    %p78 = por %p76, %p77
    %p79 = scmp.ne.s32.totalorder %s67, %s68
    %p80 = scmp.eq.s32.totalorder %s16, 1
    %p81 = por %p79, %p80
    %p83 = scmp.ne.s32.totalorder %s68, %s82
    %p84 = scmp.eq.s32.totalorder %s16, 0
    %p85 = por %p83, %p84
    %s87 = sadd.s32 %s86, 1
    %p90 = scmp.eq.s32.totalorder %s10, 1
    %p91 = scmp.ne.s32.totalorder %s86, %s88
    %p92 = scmp.eq.s32.totalorder %s10, 0
    %p93 = por %p91, %p92
    %p94 = scmp.ne.s32.totalorder %s86, %s88
    %p95 = scmp.eq.s32.totalorder %s15, 1
    %p96 = por %p94, %p95
    %p97 = scmp.ne.s32.totalorder %s88, %s89
    %p98 = scmp.eq.s32.totalorder %s15, 0
    %p99 = por %p97, %p98
    %p100 = scmp.ne.s32.totalorder %s88, %s89
    %p101 = scmp.eq.s32.totalorder %s16, 1
    %p102 = por %p100, %p101
    %p104 = scmp.ne.s32.totalorder %s89, %s103
    %p105 = scmp.eq.s32.totalorder %s16, 0
    %p106 = por %p104, %p105
    %s107 = ssub.s32 %s10, %s17
    %p108 = scmp.eq.s32.totalorder %s107, 0
    %s110 = sadd.s32 %s109, 1
    %s111 = scalar_select %p108, %s109, %s110
    %p114 = pneg %p108
    %p115 = scmp.eq.s32.totalorder %s10, 1
    %p116 = por %p114, %p115
    %p117 = scmp.ne.s32.totalorder %s109, %s112
    %p118 = scmp.eq.s32.totalorder %s10, 0
    %p119 = por %p117, %p118
    %p120 = scmp.ne.s32.totalorder %s109, %s112
    %p121 = scmp.eq.s32.totalorder %s15, 1
    %p122 = por %p120, %p121
    %p123 = scmp.ne.s32.totalorder %s112, %s113
    %p124 = scmp.eq.s32.totalorder %s15, 0
    %p125 = por %p123, %p124
    %p126 = scmp.ne.s32.totalorder %s112, %s113
    %p127 = scmp.eq.s32.totalorder %s16, 1
    %p128 = por %p126, %p127
    %p130 = scmp.ne.s32.totalorder %s113, %s129
    %p131 = scmp.eq.s32.totalorder %s16, 0
    %p132 = por %p130, %p131
    %p133 = scmp.le.s32.totalorder 1, %s10
    %p134 = scmp.lt.s32.totalorder %s10, 3
    %p135 = pnand %p133, %p134
    %p136 = pneg %p135
    // Predicated region
    $region9: #{resnet1d_encoder_forward.7} parent=5 // pred_check
      _
    $region10: #{resnet1d_encoder_forward.7} parent=5 // pred_check_branch
      %138 = sbr.rel (%p135) target = $region12
    $region11: #{resnet1d_encoder_forward.7} parent=5 // pred_region
      %s139 = ssub.s32 %s10, 1
      // Predicated region
      $region13: #{resnet1d_encoder_forward.7} parent=11 // pred_check
        %p140 = pneg %p57
      $region14: #{resnet1d_encoder_forward.7} parent=11 // pred_check_branch
        %142 = sbr.rel (%p140) target = $region16
      $region15: #{resnet1d_encoder_forward.7} parent=11 // pred_region
        _
      $region16: #{resnet1d_encoder_forward.7} parent=11 // pred_fallthru
        _
      // Predicated region
      $region17: #{resnet1d_encoder_forward.7} parent=11 // pred_check
        %p143 = pneg %p78
      $region18: #{resnet1d_encoder_forward.7} parent=11 // pred_check_branch
        %145 = sbr.rel (%p143) target = $region20
      $region19: #{resnet1d_encoder_forward.7} parent=11 // pred_region
        _
      $region20: #{resnet1d_encoder_forward.7} parent=11 // pred_fallthru
        _
      // Predicated region
      $region21: #{resnet1d_encoder_forward.7} parent=11 // pred_check
        %p146 = pneg %p99
      $region22: #{resnet1d_encoder_forward.7} parent=11 // pred_check_branch
        %148 = sbr.rel (%p146) target = $region24
      $region23: #{resnet1d_encoder_forward.7} parent=11 // pred_region
        _
      $region24: #{resnet1d_encoder_forward.7} parent=11 // pred_fallthru
        _
    $region12: #{resnet1d_encoder_forward.7} parent=5 // pred_fallthru
      _
    %p149 = scmp.lt.s32.totalorder %s10, 2
    // Predicated region
    $region25: #{resnet1d_encoder_forward.7} parent=5 // pred_check
      %p150 = pneg %p149
    $region26: #{resnet1d_encoder_forward.7} parent=5 // pred_check_branch
      %152 = sbr.rel (%p150) target = $region28
    $region27: #{resnet1d_encoder_forward.7} parent=5 // pred_region
      // Predicated region
      $region29: #{resnet1d_encoder_forward.7} parent=27 // pred_check
        %p153 = pneg %p30
      $region30: #{resnet1d_encoder_forward.7} parent=27 // pred_check_branch
        %155 = sbr.rel (%p153) target = $region32
      $region31: #{resnet1d_encoder_forward.7} parent=27 // pred_region
        %p156 = scmp.lt.s32.totalorder %s10, 1
        %s157 = scalar_select %p156, %s10, 1
        %s158 = smul.addr %s157, 4
        %s159 = scalar_lea.vmem %s0, %s158
      $region32: #{resnet1d_encoder_forward.7} parent=27 // pred_fallthru
        _
    $region28: #{resnet1d_encoder_forward.7} parent=5 // pred_fallthru
      _
    %p160 = scmp.le.s32.totalorder 1, %s10
    %p161 = scmp.lt.s32.totalorder %s10, 3
    %p162 = pnand %p160, %p161
    %p163 = pneg %p162
    // Predicated region
    $region33: #{resnet1d_encoder_forward.7} parent=5 // pred_check
      _
    $region34: #{resnet1d_encoder_forward.7} parent=5 // pred_check_branch
      %165 = sbr.rel (%p162) target = $region36
    $region35: #{resnet1d_encoder_forward.7} parent=5 // pred_region
      %s166 = ssub.s32 %s10, 1
      %p167 = scmp.lt.s32.totalorder %s15, 1
      %s168 = scalar_select %p167, %s15, 1
      %s169 = smul.addr %s168, 4
      %s170 = scalar_lea.vmem %s0, %s169
      %p171 = pneg %p36
      %p172 = pneg %p33
      %p173 = pneg %p57
      %p174 = pneg %p54
      %p175 = pneg %p78
      %p176 = pneg %p75
      %p177 = pneg %p99
      %p178 = pneg %p96
      %p179 = pneg %p125
      %p180 = pneg %p122
      %p181 = scmp.lt.s32.totalorder %s15, 1
      %s182 = scalar_select %p181, %s15, 1
      %s183 = smul.addr %s182, 8
      %s184 = scalar_lea.vmem %s4, %s183
      %p185 = scmp.lt.s32.totalorder %s15, 1
      %s186 = scalar_select %p185, %s15, 1
      %s187 = smul.addr %s186, 4
      %s188 = scalar_lea.vmem %s0, %s187
      %p189 = scmp.lt.s32.totalorder %s15, 1
      %s190 = scalar_select %p189, %s15, 1
      %s191 = smul.addr %s190, 8
      %s192 = scalar_lea.vmem %s4, %s191
      %v194 = vld [vmem:[%s188] sm:$0xf]
      %vm195 = vcmask 125952
      %196 = vst.msk [vmem:[#allocation2] sm:$0xf] %vm195, %v194
      %v197 = vld [vmem:[%s188] sm:$0xf]
      %199 = vrot.lane.b32.xlu0 %v197, 127
      %v200 = vpop.permute.xlu0 %199
      %202 = vst.msk [vmem:[#allocation2 + $0x4] sm:$0xf] %vm195, %v200
      %v203 = vld [vmem:[%s188] sm:$0xf]
      %205 = vrot.lane.b32.xlu0 %v203, 126
      %v206 = vpop.permute.xlu0 %205
      %208 = vst.msk [vmem:[#allocation2 + $0x8] sm:$0xf] %vm195, %v206
      %v209 = vld [vmem:[%s1] sm:$0xf]
      %v210 = vld [vmem:[#allocation2] sm:$0xff]
      %v211 = vld [vmem:[#allocation2 + $0x8] sm:$0xf]
      %v212 = vpack.c.bf16 %v211, %v210
      %vm213 = vcmask 97280
      %v215 = vsel %vm213, %v209, 0
      %vm217 = vcmask 1045504
      %v219 = vsel %vm217, %v212, 0
      %221 = vmatprep.subr.bf16.mxu0 0
      %222 = vmatpush1.bf16.msra.mxu0 %v219
      %223 = vmatprep.subr.bf16.mxu0 0
      %224 = vmatpush1.bf16.msra.mxu0 0
      %225 = vmatprep.subr.bf16.mxu0 0
      %226 = vmatpush1.bf16.msra.mxu0 0
      %227 = vmatprep.subr.bf16.mxu0 0
      %228 = vmatpush1.bf16.msra.mxu0 0
      %229 = vmatprep.subr.bf16.mxu0 0
      %230 = vmatpush1.bf16.msra.mxu0 0
      %231 = vmatprep.subr.bf16.mxu0 0
      %232 = vmatpush1.bf16.msra.mxu0 0
      %233 = vmatprep.subr.bf16.mxu0 0
      %234 = vmatpush1.bf16.msra.mxu0 0
      %235 = vmatprep.subr.bf16.mxu0 0
      %236 = vmatpush1.bf16.msra.mxu0 0
      %237 = vmatprep.subr.bf16.mxu0 0
      %238 = vmatpush1.bf16.msra.mxu0 0
      %239 = vmatprep.subr.bf16.mxu0 0
      %240 = vmatpush1.bf16.msra.mxu0 0
      %241 = vmatprep.subr.bf16.mxu0 0
      %242 = vmatpush1.bf16.msra.mxu0 0
      %243 = vmatprep.subr.bf16.mxu0 0
      %244 = vmatpush1.bf16.msra.mxu0 0
      %245 = vmatprep.subr.bf16.mxu0 0
      %246 = vmatpush1.bf16.msra.mxu0 0
      %247 = vmatprep.subr.bf16.mxu0 0
      %248 = vmatpush1.bf16.msra.mxu0 0
      %249 = vmatprep.subr.bf16.mxu0 0
      %250 = vmatpush1.bf16.msra.mxu0 0
      %251 = vmatprep.subr.bf16.mxu0 0
      %252 = vmatpush1.bf16.msra.mxu0 0
      %253 = vmatprep.mubr.bf16.mxu0 0
      %254 = vmatmul.mubr.bf16.gmra.mrb[0].mxu0 %v215
      %v255 = vpop.f32.mrb[0].mxu0
      %v256 = vadd.f32 0.0, %v255
      %v257 = vpop.f32.mrb[0].mxu0
      %v258 = vpop.f32.mrb[0].mxu0
      %v259 = vpop.f32.mrb[0].mxu0
      %260 = vdwg.mxu0
      %v261 = vld [vmem:[%s2] sm:$0xff]
      %263 = vset.pattern.permute.xlu0 0
      %264 = vperm.xlu0 %263, %v261
      %v265 = vpop.permute.xlu0 %264
      %v267 = vmul.f32 %v256, %v265
      %v268 = vld [vmem:[%s3] sm:$0xff]
      %270 = vset.pattern.permute.xlu0 0
      %271 = vperm.xlu0 %270, %v268
      %v272 = vpop.permute.xlu0 %271
      %v274 = vadd.f32 %v267, %v272
      %v275 = vmax.f32 %v274, 0.0
      %vm276 = vcmask 130048
      %277 = vst.msk [vmem:[%s192] sm:$0xff] %vm276, %v275
      %p278 = scmp.lt.s32.totalorder %s15, 1
      %s279 = scalar_select %p278, %s15, 1
      %s280 = smul.addr %s279, 8
      %s281 = scalar_lea.vmem %s4, %s280
      // Predicated region
      $region37: #{resnet1d_encoder_forward.7} parent=35 // pred_check
        %p282 = pneg %p122
      $region38: #{resnet1d_encoder_forward.7} parent=35 // pred_check_branch
        %284 = sbr.rel (%p282) target = $region40
      $region39: #{resnet1d_encoder_forward.7} parent=35 // pred_region
        _
      $region40: #{resnet1d_encoder_forward.7} parent=35 // pred_fallthru
        _
    $region36: #{resnet1d_encoder_forward.7} parent=5 // pred_fallthru
      _
    %p285 = scmp.le.s32.totalorder 2, %s10
    // Predicated region
    $region41: #{resnet1d_encoder_forward.7} parent=5 // pred_check
      %p286 = pneg %p285
    $region42: #{resnet1d_encoder_forward.7} parent=5 // pred_check_branch
      %288 = sbr.rel (%p286) target = $region44
    $region43: #{resnet1d_encoder_forward.7} parent=5 // pred_region
      %s289 = ssub.s32 %s10, 2
      // Predicated region
      $region45: #{resnet1d_encoder_forward.7} parent=43 // pred_check
        %p290 = pneg %p128
      $region46: #{resnet1d_encoder_forward.7} parent=43 // pred_check_branch
        %292 = sbr.rel (%p290) target = $region48
      $region47: #{resnet1d_encoder_forward.7} parent=43 // pred_region
        %p293 = scmp.lt.s32.totalorder %s16, 1
        %s294 = scalar_select %p293, %s16, 1
        %s295 = smul.addr %s294, 8
        %s296 = scalar_lea.vmem %s4, %s295
      $region48: #{resnet1d_encoder_forward.7} parent=43 // pred_fallthru
        _
    $region44: #{resnet1d_encoder_forward.7} parent=5 // pred_fallthru
      _
  $region6: #{resnet1d_encoder_forward.7} parent=0 // loop_footer
    %s14 = sadd.s32 1, %s10
  $region7: #{resnet1d_encoder_forward.7} parent=0 // loop_footer_branch
    %9 = sbr.rel target = $region3
  $region8: #{resnet1d_encoder_forward.7} parent=0 // loop_exit
    _

// kernel: resnet1d_encoder_forward.8
$region0: #{resnet1d_encoder_forward.8}
  #allocation0 [shape = 'u32[]', space=smem, size = 0x4, offset = 0x4, fixed_abs, tag = 'smem constant byte address 0x4 - core index']
  #allocation1 [shape = 'u32[144,128]{1,0:T(1,128)}', space=vmem, size = 0x12000, scoped, tag = 'internal scratch']
  #allocation2 [shape = 'f32[24,16]{1,0:T(8,128)}', space=vmem, size = 0x3000, scoped, tag = 'scratch operand']
  #allocation3 [shape = 'f32[8,18]{1,0:T(8,128)}', space=vmem, size = 0x1000, scoped, tag = 'scratch operand']
  #allocation4 [shape = 'f32[24,16]{1,0:T(8,128)}', space=vmem, size = 0x3000, scoped, tag = 'scratch operand']
  %s0 = inlined_call_operand.vmem [shape: f32[2,1,8,18], index: 0, kind: input, shape index: {}]
  %s1 = inlined_call_operand.vmem [shape: bf16[8,24], index: 1, kind: input, shape index: {}]
  %s2 = inlined_call_operand.vmem [shape: f32[8,1], index: 2, kind: input, shape index: {}]
  %s3 = inlined_call_operand.vmem [shape: f32[8,1], index: 3, kind: input, shape index: {}]
  %s4 = inlined_call_operand.vmem [shape: bf16[8,24], index: 4, kind: input, shape index: {}]
  %s5 = inlined_call_operand.vmem [shape: f32[8,1], index: 5, kind: input, shape index: {}]
  %s6 = inlined_call_operand.vmem [shape: f32[2,8,16], index: 6, kind: output, shape index: {}]
  %s7 = sld [smem:[#allocation0]]
  $region57: #{resnet1d_encoder_forward.8} parent=0
    _
  %s9 = ssub.s32 1, %s7
  %s10 = scalar_select 0, %s9, %s7
  loop: start=0, step=1, limit=4
  $region2: #{resnet1d_encoder_forward.8} parent=0 // loop_pre_header
    _
  $region3: #{resnet1d_encoder_forward.8} parent=0 // loop_header
    %s12 = sphi 0, %s16
    %p13 = scmp.ge.s32.totalorder %s12, 4
    %s22 = sphi 0, %s24
    %s25 = sphi 0, %s22
    %s26 = sphi 0, %s25
    %s42 = sphi 0, %s26
    %s46 = sphi 0, %s46
    %s48 = sphi 0, %s46
    %s49 = sphi 0, %s48
    %s63 = sphi 0, %s49
    %s67 = sphi 0, %s67
    %s69 = sphi 0, %s67
    %s70 = sphi 0, %s69
    %s84 = sphi 0, %s70
    %s88 = sphi 0, %s88
    %s90 = sphi 0, %s88
    %s91 = sphi 0, %s90
    %s105 = sphi 0, %s91
    %s109 = sphi 0, %s109
    %s111 = sphi 0, %s109
    %s112 = sphi 0, %s111
    %s126 = sphi 0, %s112
    %s130 = sphi 0, %s130
    %s132 = sphi 0, %s130
    %s133 = sphi 0, %s132
    %s147 = sphi 0, %s133
    %s153 = sphi 0, %s155
    %s156 = sphi 0, %s153
    %s157 = sphi 0, %s156
    %s173 = sphi 0, %s157
  $region4: #{resnet1d_encoder_forward.8} parent=0 // loop_header_branch
    %15 = sbr.rel (%p13) target = $region8
  $region5: #{resnet1d_encoder_forward.8} parent=0 // loop_body
    %s17 = ssub.s32 %s12, 1
    %s18 = ssub.s32 %s12, 2
    %s19 = sadd.s32 %s12, 1
    %s20 = ssub.s32 %s12, %s19
    %p21 = scmp.eq.s32.totalorder %s20, 0
    %s23 = sadd.s32 %s22, 1
    %s24 = scalar_select %p21, %s22, %s23
    %p27 = pneg %p21
    %p28 = scmp.eq.s32.totalorder %s12, 1
    %p29 = por %p27, %p28
    %p30 = scmp.ne.s32.totalorder %s22, %s25
    %p31 = scmp.eq.s32.totalorder %s12, 0
    %p32 = por %p30, %p31
    %p33 = scmp.ne.s32.totalorder %s22, %s25
    %p34 = scmp.eq.s32.totalorder %s17, 1
    %p35 = por %p33, %p34
    %p36 = scmp.ne.s32.totalorder %s25, %s26
    %p37 = scmp.eq.s32.totalorder %s17, 0
    %p38 = por %p36, %p37
    %p39 = scmp.ne.s32.totalorder %s25, %s26
    %p40 = scmp.eq.s32.totalorder %s18, 1
    %p41 = por %p39, %p40
    %p43 = scmp.ne.s32.totalorder %s26, %s42
    %p44 = scmp.eq.s32.totalorder %s18, 0
    %p45 = por %p43, %p44
    %s47 = sadd.s32 %s46, 1
    %p50 = scmp.eq.s32.totalorder %s12, 1
    %p51 = scmp.ne.s32.totalorder %s46, %s48
    %p52 = scmp.eq.s32.totalorder %s12, 0
    %p53 = por %p51, %p52
    %p54 = scmp.ne.s32.totalorder %s46, %s48
    %p55 = scmp.eq.s32.totalorder %s17, 1
    %p56 = por %p54, %p55
    %p57 = scmp.ne.s32.totalorder %s48, %s49
    %p58 = scmp.eq.s32.totalorder %s17, 0
    %p59 = por %p57, %p58
    %p60 = scmp.ne.s32.totalorder %s48, %s49
    %p61 = scmp.eq.s32.totalorder %s18, 1
    %p62 = por %p60, %p61
    %p64 = scmp.ne.s32.totalorder %s49, %s63
    %p65 = scmp.eq.s32.totalorder %s18, 0
    %p66 = por %p64, %p65
    %s68 = sadd.s32 %s67, 1
    %p71 = scmp.eq.s32.totalorder %s12, 1
    %p72 = scmp.ne.s32.totalorder %s67, %s69
    %p73 = scmp.eq.s32.totalorder %s12, 0
    %p74 = por %p72, %p73
    %p75 = scmp.ne.s32.totalorder %s67, %s69
    %p76 = scmp.eq.s32.totalorder %s17, 1
    %p77 = por %p75, %p76
    %p78 = scmp.ne.s32.totalorder %s69, %s70
    %p79 = scmp.eq.s32.totalorder %s17, 0
    %p80 = por %p78, %p79
    %p81 = scmp.ne.s32.totalorder %s69, %s70
    %p82 = scmp.eq.s32.totalorder %s18, 1
    %p83 = por %p81, %p82
    %p85 = scmp.ne.s32.totalorder %s70, %s84
    %p86 = scmp.eq.s32.totalorder %s18, 0
    %p87 = por %p85, %p86
    %s89 = sadd.s32 %s88, 1
    %p92 = scmp.eq.s32.totalorder %s12, 1
    %p93 = scmp.ne.s32.totalorder %s88, %s90
    %p94 = scmp.eq.s32.totalorder %s12, 0
    %p95 = por %p93, %p94
    %p96 = scmp.ne.s32.totalorder %s88, %s90
    %p97 = scmp.eq.s32.totalorder %s17, 1
    %p98 = por %p96, %p97
    %p99 = scmp.ne.s32.totalorder %s90, %s91
    %p100 = scmp.eq.s32.totalorder %s17, 0
    %p101 = por %p99, %p100
    %p102 = scmp.ne.s32.totalorder %s90, %s91
    %p103 = scmp.eq.s32.totalorder %s18, 1
    %p104 = por %p102, %p103
    %p106 = scmp.ne.s32.totalorder %s91, %s105
    %p107 = scmp.eq.s32.totalorder %s18, 0
    %p108 = por %p106, %p107
    %s110 = sadd.s32 %s109, 1
    %p113 = scmp.eq.s32.totalorder %s12, 1
    %p114 = scmp.ne.s32.totalorder %s109, %s111
    %p115 = scmp.eq.s32.totalorder %s12, 0
    %p116 = por %p114, %p115
    %p117 = scmp.ne.s32.totalorder %s109, %s111
    %p118 = scmp.eq.s32.totalorder %s17, 1
    %p119 = por %p117, %p118
    %p120 = scmp.ne.s32.totalorder %s111, %s112
    %p121 = scmp.eq.s32.totalorder %s17, 0
    %p122 = por %p120, %p121
    %p123 = scmp.ne.s32.totalorder %s111, %s112
    %p124 = scmp.eq.s32.totalorder %s18, 1
    %p125 = por %p123, %p124
    %p127 = scmp.ne.s32.totalorder %s112, %s126
    %p128 = scmp.eq.s32.totalorder %s18, 0
    %p129 = por %p127, %p128
    %s131 = sadd.s32 %s130, 1
    %p134 = scmp.eq.s32.totalorder %s12, 1
    %p135 = scmp.ne.s32.totalorder %s130, %s132
    %p136 = scmp.eq.s32.totalorder %s12, 0
    %p137 = por %p135, %p136
    %p138 = scmp.ne.s32.totalorder %s130, %s132
    %p139 = scmp.eq.s32.totalorder %s17, 1
    %p140 = por %p138, %p139
    %p141 = scmp.ne.s32.totalorder %s132, %s133
    %p142 = scmp.eq.s32.totalorder %s17, 0
    %p143 = por %p141, %p142
    %p144 = scmp.ne.s32.totalorder %s132, %s133
    %p145 = scmp.eq.s32.totalorder %s18, 1
    %p146 = por %p144, %p145
    %p148 = scmp.ne.s32.totalorder %s133, %s147
    %p149 = scmp.eq.s32.totalorder %s18, 0
    %p150 = por %p148, %p149
    %s151 = ssub.s32 %s12, %s19
    %p152 = scmp.eq.s32.totalorder %s151, 0
    %s154 = sadd.s32 %s153, 1
    %s155 = scalar_select %p152, %s153, %s154
    %p158 = pneg %p152
    %p159 = scmp.eq.s32.totalorder %s12, 1
    %p160 = por %p158, %p159
    %p161 = scmp.ne.s32.totalorder %s153, %s156
    %p162 = scmp.eq.s32.totalorder %s12, 0
    %p163 = por %p161, %p162
    %p164 = scmp.ne.s32.totalorder %s153, %s156
    %p165 = scmp.eq.s32.totalorder %s17, 1
    %p166 = por %p164, %p165
    %p167 = scmp.ne.s32.totalorder %s156, %s157
    %p168 = scmp.eq.s32.totalorder %s17, 0
    %p169 = por %p167, %p168
    %p170 = scmp.ne.s32.totalorder %s156, %s157
    %p171 = scmp.eq.s32.totalorder %s18, 1
    %p172 = por %p170, %p171
    %p174 = scmp.ne.s32.totalorder %s157, %s173
    %p175 = scmp.eq.s32.totalorder %s18, 0
    %p176 = por %p174, %p175
    %p177 = scmp.le.s32.totalorder 1, %s12
    %p178 = scmp.lt.s32.totalorder %s12, 3
    %p179 = pnand %p177, %p178
    %p180 = pneg %p179
    // Predicated region
    $region9: #{resnet1d_encoder_forward.8} parent=5 // pred_check
      _
    $region10: #{resnet1d_encoder_forward.8} parent=5 // pred_check_branch
      %182 = sbr.rel (%p179) target = $region12
    $region11: #{resnet1d_encoder_forward.8} parent=5 // pred_region
      %s183 = ssub.s32 %s12, 1
      // Predicated region
      $region13: #{resnet1d_encoder_forward.8} parent=11 // pred_check
        %p184 = pneg %p59
      $region14: #{resnet1d_encoder_forward.8} parent=11 // pred_check_branch
        %186 = sbr.rel (%p184) target = $region16
      $region15: #{resnet1d_encoder_forward.8} parent=11 // pred_region
        _
      $region16: #{resnet1d_encoder_forward.8} parent=11 // pred_fallthru
        _
      // Predicated region
      $region17: #{resnet1d_encoder_forward.8} parent=11 // pred_check
        %p187 = pneg %p80
      $region18: #{resnet1d_encoder_forward.8} parent=11 // pred_check_branch
        %189 = sbr.rel (%p187) target = $region20
      $region19: #{resnet1d_encoder_forward.8} parent=11 // pred_region
        _
      $region20: #{resnet1d_encoder_forward.8} parent=11 // pred_fallthru
        _
      // Predicated region
      $region21: #{resnet1d_encoder_forward.8} parent=11 // pred_check
        %p190 = pneg %p101
      $region22: #{resnet1d_encoder_forward.8} parent=11 // pred_check_branch
        %192 = sbr.rel (%p190) target = $region24
      $region23: #{resnet1d_encoder_forward.8} parent=11 // pred_region
        _
      $region24: #{resnet1d_encoder_forward.8} parent=11 // pred_fallthru
        _
      // Predicated region
      $region25: #{resnet1d_encoder_forward.8} parent=11 // pred_check
        %p193 = pneg %p122
      $region26: #{resnet1d_encoder_forward.8} parent=11 // pred_check_branch
        %195 = sbr.rel (%p193) target = $region28
      $region27: #{resnet1d_encoder_forward.8} parent=11 // pred_region
        _
      $region28: #{resnet1d_encoder_forward.8} parent=11 // pred_fallthru
        _
      // Predicated region
      $region29: #{resnet1d_encoder_forward.8} parent=11 // pred_check
        %p196 = pneg %p143
      $region30: #{resnet1d_encoder_forward.8} parent=11 // pred_check_branch
        %198 = sbr.rel (%p196) target = $region32
      $region31: #{resnet1d_encoder_forward.8} parent=11 // pred_region
        _
      $region32: #{resnet1d_encoder_forward.8} parent=11 // pred_fallthru
        _
    $region12: #{resnet1d_encoder_forward.8} parent=5 // pred_fallthru
      _
    %p199 = scmp.lt.s32.totalorder %s12, 2
    // Predicated region
    $region33: #{resnet1d_encoder_forward.8} parent=5 // pred_check
      %p200 = pneg %p199
    $region34: #{resnet1d_encoder_forward.8} parent=5 // pred_check_branch
      %202 = sbr.rel (%p200) target = $region36
    $region35: #{resnet1d_encoder_forward.8} parent=5 // pred_region
      // Predicated region
      $region37: #{resnet1d_encoder_forward.8} parent=35 // pred_check
        %p203 = pneg %p32
      $region38: #{resnet1d_encoder_forward.8} parent=35 // pred_check_branch
        %205 = sbr.rel (%p203) target = $region40
      $region39: #{resnet1d_encoder_forward.8} parent=35 // pred_region
        %p206 = scmp.lt.s32.totalorder %s12, 1
        %s207 = scalar_select %p206, %s12, 1
        %s208 = smul.addr %s207, 8
        %s209 = scalar_lea.vmem %s0, %s208
      $region40: #{resnet1d_encoder_forward.8} parent=35 // pred_fallthru
        _
    $region36: #{resnet1d_encoder_forward.8} parent=5 // pred_fallthru
      _
    %p210 = scmp.le.s32.totalorder 1, %s12
    %p211 = scmp.lt.s32.totalorder %s12, 3
    %p212 = pnand %p210, %p211
    %p213 = pneg %p212
    // Predicated region
    $region41: #{resnet1d_encoder_forward.8} parent=5 // pred_check
      _
    $region42: #{resnet1d_encoder_forward.8} parent=5 // pred_check_branch
      %215 = sbr.rel (%p212) target = $region44
    $region43: #{resnet1d_encoder_forward.8} parent=5 // pred_region
      %s216 = ssub.s32 %s12, 1
      %p217 = scmp.lt.s32.totalorder %s17, 1
      %s218 = scalar_select %p217, %s17, 1
      %s219 = smul.addr %s218, 8
      %s220 = scalar_lea.vmem %s0, %s219
      %p221 = pneg %p38
      %p222 = pneg %p35
      %p223 = pneg %p59
      %p224 = pneg %p56
      %p225 = pneg %p80
      %p226 = pneg %p77
      %p227 = pneg %p101
      %p228 = pneg %p98
      %p229 = pneg %p122
      %p230 = pneg %p119
      %p231 = pneg %p143
      %p232 = pneg %p140
      %p233 = pneg %p169
      %p234 = pneg %p166
      %p235 = scmp.lt.s32.totalorder %s17, 1
      %s236 = scalar_select %p235, %s17, 1
      %s237 = smul.addr %s236, 8
      %s238 = scalar_lea.vmem %s6, %s237
      %p239 = scmp.lt.s32.totalorder %s17, 1
      %s240 = scalar_select %p239, %s17, 1
      %s241 = smul.addr %s240, 8
      %s242 = scalar_lea.vmem %s0, %s241
      %p243 = scmp.lt.s32.totalorder %s17, 1
      %s244 = scalar_select %p243, %s17, 1
      %s245 = smul.addr %s244, 8
      %s246 = scalar_lea.vmem %s6, %s245
      %v248 = vld [vmem:[%s242] sm:$0xff]
      %vm249 = vcmask 130048
      %250 = vst.msk [vmem:[#allocation2] sm:$0xff] %vm249, %v248
      %v251 = vld [vmem:[%s242] sm:$0xff]
      %253 = vrot.lane.b32.xlu0 %v251, 127
      %v254 = vpop.permute.xlu0 %253
      %256 = vst.msk [vmem:[#allocation2 + $0x8] sm:$0xff] %vm249, %v254
      %v257 = vld [vmem:[%s242] sm:$0xff]
      %259 = vrot.lane.b32.xlu0 %v257, 126
      %v260 = vpop.permute.xlu0 %259
      %262 = vst.msk [vmem:[#allocation2 + $0x10] sm:$0xff] %vm249, %v260
      %v263 = vld [vmem:[%s1] sm:$0xf]
      %v264 = vld [vmem:[#allocation2] sm:$0xff]
      %v265 = vld [vmem:[#allocation2 + $0x8] sm:$0xff]
      %v266 = vld [vmem:[#allocation2 + $0x10] sm:$0xff]
      %v267 = vpack.c.bf16 %v265, %v264
      %v268 = vpack.c.bf16 %v266, %v266
      %vm269 = vcmask 195584
      %v271 = vsel %vm269, %v263, 0
      %vm273 = vcmask 1043456
      %v275 = vsel %vm273, %v268, 0
      %277 = vmatprep.subr.bf16.mxu0 0
      %278 = vmatpush1.bf16.msra.mxu0 %v267
      %279 = vmatprep.subr.bf16.mxu0 0
      %280 = vmatpush1.bf16.msra.mxu0 %v275
      %281 = vmatprep.subr.bf16.mxu0 0
      %282 = vmatpush1.bf16.msra.mxu0 0
      %283 = vmatprep.subr.bf16.mxu0 0
      %284 = vmatpush1.bf16.msra.mxu0 0
      %285 = vmatprep.subr.bf16.mxu0 0
      %286 = vmatpush1.bf16.msra.mxu0 0
      %287 = vmatprep.subr.bf16.mxu0 0
      %288 = vmatpush1.bf16.msra.mxu0 0
      %289 = vmatprep.subr.bf16.mxu0 0
      %290 = vmatpush1.bf16.msra.mxu0 0
      %291 = vmatprep.subr.bf16.mxu0 0
      %292 = vmatpush1.bf16.msra.mxu0 0
      %293 = vmatprep.subr.bf16.mxu0 0
      %294 = vmatpush1.bf16.msra.mxu0 0
      %295 = vmatprep.subr.bf16.mxu0 0
      %296 = vmatpush1.bf16.msra.mxu0 0
      %297 = vmatprep.subr.bf16.mxu0 0
      %298 = vmatpush1.bf16.msra.mxu0 0
      %299 = vmatprep.subr.bf16.mxu0 0
      %300 = vmatpush1.bf16.msra.mxu0 0
      %301 = vmatprep.subr.bf16.mxu0 0
      %302 = vmatpush1.bf16.msra.mxu0 0
      %303 = vmatprep.subr.bf16.mxu0 0
      %304 = vmatpush1.bf16.msra.mxu0 0
      %305 = vmatprep.subr.bf16.mxu0 0
      %306 = vmatpush1.bf16.msra.mxu0 0
      %307 = vmatprep.subr.bf16.mxu0 0
      %308 = vmatpush1.bf16.msra.mxu0 0
      %309 = vmatprep.mubr.bf16.mxu0 0
      %310 = vmatmul.mubr.bf16.gmra.mrb[0].mxu0 %v271
      %v311 = vpop.f32.mrb[0].mxu0
      %v312 = vadd.f32 0.0, %v311
      %v313 = vpop.f32.mrb[0].mxu0
      %v314 = vpop.f32.mrb[0].mxu0
      %v315 = vpop.f32.mrb[0].mxu0
      %316 = vdwg.mxu0
      %v317 = vld [vmem:[%s2] sm:$0xff]
      %319 = vset.pattern.permute.xlu0 0
      %320 = vperm.xlu0 %319, %v317
      %v321 = vpop.permute.xlu0 %320
      %v323 = vmul.f32 %v312, %v321
      %v324 = vld [vmem:[%s3] sm:$0xff]
      %326 = vset.pattern.permute.xlu0 0
      %327 = vperm.xlu0 %326, %v324
      %v328 = vpop.permute.xlu0 %327
      %v330 = vadd.f32 %v323, %v328
      %v331 = vmax.f32 %v330, 0.0
      %vm332 = vcmask 146432
      %333 = vst.msk [vmem:[#allocation3] sm:$0xff] %vm332, 0.0
      %335 = vrot.lane.b32.xlu0 %v331, 1
      %v336 = vpop.permute.xlu0 %335
      %vm338 = vcmask 138248
      %339 = vst.msk [vmem:[#allocation3] sm:$0xff] %vm338, %v336
      %v340 = vld [vmem:[#allocation3] sm:$0xff]
      %341 = vst.msk [vmem:[#allocation4] sm:$0xff] %vm249, %v340
      %v342 = vld [vmem:[#allocation3] sm:$0xff]
      %344 = vrot.lane.b32.xlu0 %v342, 127
      %v345 = vpop.permute.xlu0 %344
      %347 = vst.msk [vmem:[#allocation4 + $0x8] sm:$0xff] %vm249, %v345
      %v348 = vld [vmem:[#allocation3] sm:$0xff]
      %350 = vrot.lane.b32.xlu0 %v348, 126
      %v351 = vpop.permute.xlu0 %350
      %353 = vst.msk [vmem:[#allocation4 + $0x10] sm:$0xff] %vm249, %v351
      %v354 = vld [vmem:[%s4] sm:$0xf]
      %v355 = vld [vmem:[#allocation4] sm:$0xff]
      %v356 = vld [vmem:[#allocation4 + $0x8] sm:$0xff]
      %v357 = vld [vmem:[#allocation4 + $0x10] sm:$0xff]
      %v358 = vpack.c.bf16 %v356, %v355
      %v359 = vpack.c.bf16 %v357, %v357
      %v360 = vld [vmem:[%s5] sm:$0xff]
      %362 = vset.pattern.permute.xlu0 0
      %363 = vperm.xlu0 %362, %v360
      %v364 = vpop.permute.xlu0 %363
      %v367 = vsel %vm269, %v354, 0
      %v370 = vsel %vm273, %v359, 0
      %372 = vmatprep.subr.bf16.mxu0 0
      %373 = vmatpush1.bf16.msra.mxu0 %v358
      %374 = vmatprep.subr.bf16.mxu0 0
      %375 = vmatpush1.bf16.msra.mxu0 %v370
      %376 = vmatprep.subr.bf16.mxu0 0
      %377 = vmatpush1.bf16.msra.mxu0 0
      %378 = vmatprep.subr.bf16.mxu0 0
      %379 = vmatpush1.bf16.msra.mxu0 0
      %380 = vmatprep.subr.bf16.mxu0 0
      %381 = vmatpush1.bf16.msra.mxu0 0
      %382 = vmatprep.subr.bf16.mxu0 0
      %383 = vmatpush1.bf16.msra.mxu0 0
      %384 = vmatprep.subr.bf16.mxu0 0
      %385 = vmatpush1.bf16.msra.mxu0 0
      %386 = vmatprep.subr.bf16.mxu0 0
      %387 = vmatpush1.bf16.msra.mxu0 0
      %388 = vmatprep.subr.bf16.mxu0 0
      %389 = vmatpush1.bf16.msra.mxu0 0
      %390 = vmatprep.subr.bf16.mxu0 0
      %391 = vmatpush1.bf16.msra.mxu0 0
      %392 = vmatprep.subr.bf16.mxu0 0
      %393 = vmatpush1.bf16.msra.mxu0 0
      %394 = vmatprep.subr.bf16.mxu0 0
      %395 = vmatpush1.bf16.msra.mxu0 0
      %396 = vmatprep.subr.bf16.mxu0 0
      %397 = vmatpush1.bf16.msra.mxu0 0
      %398 = vmatprep.subr.bf16.mxu0 0
      %399 = vmatpush1.bf16.msra.mxu0 0
      %400 = vmatprep.subr.bf16.mxu0 0
      %401 = vmatpush1.bf16.msra.mxu0 0
      %402 = vmatprep.subr.bf16.mxu0 0
      %403 = vmatpush1.bf16.msra.mxu0 0
      %404 = vmatprep.mubr.bf16.mxu0 0
      %405 = vmatmul.mubr.bf16.gmra.mrb[0].mxu0 %v367
      %v406 = vpop.f32.mrb[0].mxu0
      %v407 = vadd.f32 %v364, %v406
      %v408 = vpop.f32.mrb[0].mxu0
      %v409 = vpop.f32.mrb[0].mxu0
      %v410 = vpop.f32.mrb[0].mxu0
      %411 = vdwg.mxu0
      %v412 = vld [vmem:[%s242] sm:$0xff]
      %414 = vrot.lane.b32.xlu0 %v412, 127
      %v415 = vpop.permute.xlu0 %414
      %v417 = vadd.f32 %v407, %v415
      %418 = vst.msk [vmem:[%s246] sm:$0xff] %vm249, %v417
      %p419 = scmp.lt.s32.totalorder %s17, 1
      %s420 = scalar_select %p419, %s17, 1
      %s421 = smul.addr %s420, 8
      %s422 = scalar_lea.vmem %s6, %s421
      // Predicated region
      $region45: #{resnet1d_encoder_forward.8} parent=43 // pred_check
        %p423 = pneg %p166
      $region46: #{resnet1d_encoder_forward.8} parent=43 // pred_check_branch
        %425 = sbr.rel (%p423) target = $region48
      $region47: #{resnet1d_encoder_forward.8} parent=43 // pred_region
        _
      $region48: #{resnet1d_encoder_forward.8} parent=43 // pred_fallthru
        _
    $region44: #{resnet1d_encoder_forward.8} parent=5 // pred_fallthru
      _
    %p426 = scmp.le.s32.totalorder 2, %s12
    // Predicated region
    $region49: #{resnet1d_encoder_forward.8} parent=5 // pred_check
      %p427 = pneg %p426
    $region50: #{resnet1d_encoder_forward.8} parent=5 // pred_check_branch
      %429 = sbr.rel (%p427) target = $region52
    $region51: #{resnet1d_encoder_forward.8} parent=5 // pred_region
      %s430 = ssub.s32 %s12, 2
      // Predicated region
      $region53: #{resnet1d_encoder_forward.8} parent=51 // pred_check
        %p431 = pneg %p172
      $region54: #{resnet1d_encoder_forward.8} parent=51 // pred_check_branch
        %433 = sbr.rel (%p431) target = $region56
      $region55: #{resnet1d_encoder_forward.8} parent=51 // pred_region
        %p434 = scmp.lt.s32.totalorder %s18, 1
        %s435 = scalar_select %p434, %s18, 1
        %s436 = smul.addr %s435, 8
        %s437 = scalar_lea.vmem %s6, %s436
      $region56: #{resnet1d_encoder_forward.8} parent=51 // pred_fallthru
        _
    $region52: #{resnet1d_encoder_forward.8} parent=5 // pred_fallthru
      _
  $region6: #{resnet1d_encoder_forward.8} parent=0 // loop_footer
    %s16 = sadd.s32 1, %s12
  $region7: #{resnet1d_encoder_forward.8} parent=0 // loop_footer_branch
    %11 = sbr.rel target = $region3
  $region8: #{resnet1d_encoder_forward.8} parent=0 // loop_exit
    _

// kernel: resnet1d_encoder_forward.9
$region0: #{resnet1d_encoder_forward.9}
  #allocation0 [shape = 'u32[]', space=smem, size = 0x4, offset = 0x4, fixed_abs, tag = 'smem constant byte address 0x4 - core index']
  #allocation1 [shape = 'u32[144,128]{1,0:T(1,128)}', space=vmem, size = 0x12000, scoped, tag = 'internal scratch']
  #allocation2 [shape = 'f32[24,8]{1,0:T(8,128)}', space=vmem, size = 0x3000, scoped, tag = 'scratch operand']
  #allocation3 [shape = 'f32[8,10]{1,0:T(8,128)}', space=vmem, size = 0x1000, scoped, tag = 'scratch operand']
  #allocation4 [shape = 'f32[24,8]{1,0:T(8,128)}', space=vmem, size = 0x3000, scoped, tag = 'scratch operand']
  %s0 = inlined_call_operand.vmem [shape: f32[2,2,8,9], index: 0, kind: input, shape index: {}]
  %s1 = inlined_call_operand.vmem [shape: f32[8,1], index: 1, kind: input, shape index: {}]
  %s2 = inlined_call_operand.vmem [shape: f32[8,1], index: 2, kind: input, shape index: {}]
  %s3 = inlined_call_operand.vmem [shape: bf16[8,24], index: 3, kind: input, shape index: {}]
  %s4 = inlined_call_operand.vmem [shape: f32[8,1], index: 4, kind: input, shape index: {}]
  %s5 = inlined_call_operand.vmem [shape: f32[8,1], index: 5, kind: input, shape index: {}]
  %s6 = inlined_call_operand.vmem [shape: bf16[8,24], index: 6, kind: input, shape index: {}]
  %s7 = inlined_call_operand.vmem [shape: f32[8,1], index: 7, kind: input, shape index: {}]
  %s8 = inlined_call_operand.vmem [shape: f32[2,2,8,8], index: 8, kind: input, shape index: {}]
  %s9 = inlined_call_operand.vmem [shape: f32[2,8,8], index: 9, kind: output, shape index: {}]
  %s10 = sld [smem:[#allocation0]]
  $region69: #{resnet1d_encoder_forward.9} parent=0
    _
  %s12 = ssub.s32 1, %s10
  %s13 = scalar_select 0, %s12, %s10
  loop: start=0, step=1, limit=4
  $region2: #{resnet1d_encoder_forward.9} parent=0 // loop_pre_header
    _
  $region3: #{resnet1d_encoder_forward.9} parent=0 // loop_header
    %s15 = sphi 0, %s19
    %p16 = scmp.ge.s32.totalorder %s15, 4
    %s25 = sphi 0, %s27
    %s28 = sphi 0, %s25
    %s29 = sphi 0, %s28
    %s45 = sphi 0, %s29
    %s49 = sphi 0, %s49
    %s51 = sphi 0, %s49
    %s52 = sphi 0, %s51
    %s66 = sphi 0, %s52
    %s70 = sphi 0, %s70
    %s72 = sphi 0, %s70
    %s73 = sphi 0, %s72
    %s87 = sphi 0, %s73
    %s91 = sphi 0, %s91
    %s93 = sphi 0, %s91
    %s94 = sphi 0, %s93
    %s108 = sphi 0, %s94
    %s112 = sphi 0, %s112
    %s114 = sphi 0, %s112
    %s115 = sphi 0, %s114
    %s129 = sphi 0, %s115
    %s133 = sphi 0, %s133
    %s135 = sphi 0, %s133
    %s136 = sphi 0, %s135
    %s150 = sphi 0, %s136
    %s154 = sphi 0, %s154
    %s156 = sphi 0, %s154
    %s157 = sphi 0, %s156
    %s171 = sphi 0, %s157
    %s175 = sphi 0, %s175
    %s177 = sphi 0, %s175
    %s178 = sphi 0, %s177
    %s192 = sphi 0, %s178
    %s198 = sphi 0, %s200
    %s201 = sphi 0, %s198
    %s202 = sphi 0, %s201
    %s218 = sphi 0, %s202
    %s224 = sphi 0, %s226
    %s227 = sphi 0, %s224
    %s228 = sphi 0, %s227
    %s244 = sphi 0, %s228
  $region4: #{resnet1d_encoder_forward.9} parent=0 // loop_header_branch
    %18 = sbr.rel (%p16) target = $region8
  $region5: #{resnet1d_encoder_forward.9} parent=0 // loop_body
    %s20 = ssub.s32 %s15, 1
    %s21 = ssub.s32 %s15, 2
    %s22 = sadd.s32 %s15, 1
    %s23 = ssub.s32 %s15, %s22
    %p24 = scmp.eq.s32.totalorder %s23, 0
    %s26 = sadd.s32 %s25, 1
    %s27 = scalar_select %p24, %s25, %s26
    %p30 = pneg %p24
    %p31 = scmp.eq.s32.totalorder %s15, 1
    %p32 = por %p30, %p31
    %p33 = scmp.ne.s32.totalorder %s25, %s28
    %p34 = scmp.eq.s32.totalorder %s15, 0
    %p35 = por %p33, %p34
    %p36 = scmp.ne.s32.totalorder %s25, %s28
    %p37 = scmp.eq.s32.totalorder %s20, 1
    %p38 = por %p36, %p37
    %p39 = scmp.ne.s32.totalorder %s28, %s29
    %p40 = scmp.eq.s32.totalorder %s20, 0
    %p41 = por %p39, %p40
    %p42 = scmp.ne.s32.totalorder %s28, %s29
    %p43 = scmp.eq.s32.totalorder %s21, 1
    %p44 = por %p42, %p43
    %p46 = scmp.ne.s32.totalorder %s29, %s45
    %p47 = scmp.eq.s32.totalorder %s21, 0
    %p48 = por %p46, %p47
    %s50 = sadd.s32 %s49, 1
    %p53 = scmp.eq.s32.totalorder %s15, 1
    %p54 = scmp.ne.s32.totalorder %s49, %s51
    %p55 = scmp.eq.s32.totalorder %s15, 0
    %p56 = por %p54, %p55
    %p57 = scmp.ne.s32.totalorder %s49, %s51
    %p58 = scmp.eq.s32.totalorder %s20, 1
    %p59 = por %p57, %p58
    %p60 = scmp.ne.s32.totalorder %s51, %s52
    %p61 = scmp.eq.s32.totalorder %s20, 0
    %p62 = por %p60, %p61
    %p63 = scmp.ne.s32.totalorder %s51, %s52
    %p64 = scmp.eq.s32.totalorder %s21, 1
    %p65 = por %p63, %p64
    %p67 = scmp.ne.s32.totalorder %s52, %s66
    %p68 = scmp.eq.s32.totalorder %s21, 0
    %p69 = por %p67, %p68
    %s71 = sadd.s32 %s70, 1
    %p74 = scmp.eq.s32.totalorder %s15, 1
    %p75 = scmp.ne.s32.totalorder %s70, %s72
    %p76 = scmp.eq.s32.totalorder %s15, 0
    %p77 = por %p75, %p76
    %p78 = scmp.ne.s32.totalorder %s70, %s72
    %p79 = scmp.eq.s32.totalorder %s20, 1
    %p80 = por %p78, %p79
    %p81 = scmp.ne.s32.totalorder %s72, %s73
    %p82 = scmp.eq.s32.totalorder %s20, 0
    %p83 = por %p81, %p82
    %p84 = scmp.ne.s32.totalorder %s72, %s73
    %p85 = scmp.eq.s32.totalorder %s21, 1
    %p86 = por %p84, %p85
    %p88 = scmp.ne.s32.totalorder %s73, %s87
    %p89 = scmp.eq.s32.totalorder %s21, 0
    %p90 = por %p88, %p89
    %s92 = sadd.s32 %s91, 1
    %p95 = scmp.eq.s32.totalorder %s15, 1
    %p96 = scmp.ne.s32.totalorder %s91, %s93
    %p97 = scmp.eq.s32.totalorder %s15, 0
    %p98 = por %p96, %p97
    %p99 = scmp.ne.s32.totalorder %s91, %s93
    %p100 = scmp.eq.s32.totalorder %s20, 1
    %p101 = por %p99, %p100
    %p102 = scmp.ne.s32.totalorder %s93, %s94
    %p103 = scmp.eq.s32.totalorder %s20, 0
    %p104 = por %p102, %p103
    %p105 = scmp.ne.s32.totalorder %s93, %s94
    %p106 = scmp.eq.s32.totalorder %s21, 1
    %p107 = por %p105, %p106
    %p109 = scmp.ne.s32.totalorder %s94, %s108
    %p110 = scmp.eq.s32.totalorder %s21, 0
    %p111 = por %p109, %p110
    %s113 = sadd.s32 %s112, 1
    %p116 = scmp.eq.s32.totalorder %s15, 1
    %p117 = scmp.ne.s32.totalorder %s112, %s114
    %p118 = scmp.eq.s32.totalorder %s15, 0
    %p119 = por %p117, %p118
    %p120 = scmp.ne.s32.totalorder %s112, %s114
    %p121 = scmp.eq.s32.totalorder %s20, 1
    %p122 = por %p120, %p121
    %p123 = scmp.ne.s32.totalorder %s114, %s115
    %p124 = scmp.eq.s32.totalorder %s20, 0
    %p125 = por %p123, %p124
    %p126 = scmp.ne.s32.totalorder %s114, %s115
    %p127 = scmp.eq.s32.totalorder %s21, 1
    %p128 = por %p126, %p127
    %p130 = scmp.ne.s32.totalorder %s115, %s129
    %p131 = scmp.eq.s32.totalorder %s21, 0
    %p132 = por %p130, %p131
    %s134 = sadd.s32 %s133, 1
    %p137 = scmp.eq.s32.totalorder %s15, 1
    %p138 = scmp.ne.s32.totalorder %s133, %s135
    %p139 = scmp.eq.s32.totalorder %s15, 0
    %p140 = por %p138, %p139
    %p141 = scmp.ne.s32.totalorder %s133, %s135
    %p142 = scmp.eq.s32.totalorder %s20, 1
    %p143 = por %p141, %p142
    %p144 = scmp.ne.s32.totalorder %s135, %s136
    %p145 = scmp.eq.s32.totalorder %s20, 0
    %p146 = por %p144, %p145
    %p147 = scmp.ne.s32.totalorder %s135, %s136
    %p148 = scmp.eq.s32.totalorder %s21, 1
    %p149 = por %p147, %p148
    %p151 = scmp.ne.s32.totalorder %s136, %s150
    %p152 = scmp.eq.s32.totalorder %s21, 0
    %p153 = por %p151, %p152
    %s155 = sadd.s32 %s154, 1
    %p158 = scmp.eq.s32.totalorder %s15, 1
    %p159 = scmp.ne.s32.totalorder %s154, %s156
    %p160 = scmp.eq.s32.totalorder %s15, 0
    %p161 = por %p159, %p160
    %p162 = scmp.ne.s32.totalorder %s154, %s156
    %p163 = scmp.eq.s32.totalorder %s20, 1
    %p164 = por %p162, %p163
    %p165 = scmp.ne.s32.totalorder %s156, %s157
    %p166 = scmp.eq.s32.totalorder %s20, 0
    %p167 = por %p165, %p166
    %p168 = scmp.ne.s32.totalorder %s156, %s157
    %p169 = scmp.eq.s32.totalorder %s21, 1
    %p170 = por %p168, %p169
    %p172 = scmp.ne.s32.totalorder %s157, %s171
    %p173 = scmp.eq.s32.totalorder %s21, 0
    %p174 = por %p172, %p173
    %s176 = sadd.s32 %s175, 1
    %p179 = scmp.eq.s32.totalorder %s15, 1
    %p180 = scmp.ne.s32.totalorder %s175, %s177
    %p181 = scmp.eq.s32.totalorder %s15, 0
    %p182 = por %p180, %p181
    %p183 = scmp.ne.s32.totalorder %s175, %s177
    %p184 = scmp.eq.s32.totalorder %s20, 1
    %p185 = por %p183, %p184
    %p186 = scmp.ne.s32.totalorder %s177, %s178
    %p187 = scmp.eq.s32.totalorder %s20, 0
    %p188 = por %p186, %p187
    %p189 = scmp.ne.s32.totalorder %s177, %s178
    %p190 = scmp.eq.s32.totalorder %s21, 1
    %p191 = por %p189, %p190
    %p193 = scmp.ne.s32.totalorder %s178, %s192
    %p194 = scmp.eq.s32.totalorder %s21, 0
    %p195 = por %p193, %p194
    %s196 = ssub.s32 %s15, %s22
    %p197 = scmp.eq.s32.totalorder %s196, 0
    %s199 = sadd.s32 %s198, 1
    %s200 = scalar_select %p197, %s198, %s199
    %p203 = pneg %p197
    %p204 = scmp.eq.s32.totalorder %s15, 1
    %p205 = por %p203, %p204
    %p206 = scmp.ne.s32.totalorder %s198, %s201
    %p207 = scmp.eq.s32.totalorder %s15, 0
    %p208 = por %p206, %p207
    %p209 = scmp.ne.s32.totalorder %s198, %s201
    %p210 = scmp.eq.s32.totalorder %s20, 1
    %p211 = por %p209, %p210
    %p212 = scmp.ne.s32.totalorder %s201, %s202
    %p213 = scmp.eq.s32.totalorder %s20, 0
    %p214 = por %p212, %p213
    %p215 = scmp.ne.s32.totalorder %s201, %s202
    %p216 = scmp.eq.s32.totalorder %s21, 1
    %p217 = por %p215, %p216
    %p219 = scmp.ne.s32.totalorder %s202, %s218
    %p220 = scmp.eq.s32.totalorder %s21, 0
    %p221 = por %p219, %p220
    %s222 = ssub.s32 %s15, %s22
    %p223 = scmp.eq.s32.totalorder %s222, 0
    %s225 = sadd.s32 %s224, 1
    %s226 = scalar_select %p223, %s224, %s225
    %p229 = pneg %p223
    %p230 = scmp.eq.s32.totalorder %s15, 1
    %p231 = por %p229, %p230
    %p232 = scmp.ne.s32.totalorder %s224, %s227
    %p233 = scmp.eq.s32.totalorder %s15, 0
    %p234 = por %p232, %p233
    %p235 = scmp.ne.s32.totalorder %s224, %s227
    %p236 = scmp.eq.s32.totalorder %s20, 1
    %p237 = por %p235, %p236
    %p238 = scmp.ne.s32.totalorder %s227, %s228
    %p239 = scmp.eq.s32.totalorder %s20, 0
    %p240 = por %p238, %p239
    %p241 = scmp.ne.s32.totalorder %s227, %s228
    %p242 = scmp.eq.s32.totalorder %s21, 1
    %p243 = por %p241, %p242
    %p245 = scmp.ne.s32.totalorder %s228, %s244
    %p246 = scmp.eq.s32.totalorder %s21, 0
    %p247 = por %p245, %p246
    %p248 = scmp.le.s32.totalorder 1, %s15
    %p249 = scmp.lt.s32.totalorder %s15, 3
    %p250 = pnand %p248, %p249
    %p251 = pneg %p250
    // Predicated region
    $region9: #{resnet1d_encoder_forward.9} parent=5 // pred_check
      _
    $region10: #{resnet1d_encoder_forward.9} parent=5 // pred_check_branch
      %253 = sbr.rel (%p250) target = $region12
    $region11: #{resnet1d_encoder_forward.9} parent=5 // pred_region
      %s254 = ssub.s32 %s15, 1
      // Predicated region
      $region13: #{resnet1d_encoder_forward.9} parent=11 // pred_check
        %p255 = pneg %p62
      $region14: #{resnet1d_encoder_forward.9} parent=11 // pred_check_branch
        %257 = sbr.rel (%p255) target = $region16
      $region15: #{resnet1d_encoder_forward.9} parent=11 // pred_region
        _
      $region16: #{resnet1d_encoder_forward.9} parent=11 // pred_fallthru
        _
      // Predicated region
      $region17: #{resnet1d_encoder_forward.9} parent=11 // pred_check
        %p258 = pneg %p83
      $region18: #{resnet1d_encoder_forward.9} parent=11 // pred_check_branch
        %260 = sbr.rel (%p258) target = $region20
      $region19: #{resnet1d_encoder_forward.9} parent=11 // pred_region
        _
      $region20: #{resnet1d_encoder_forward.9} parent=11 // pred_fallthru
        _
      // Predicated region
      $region21: #{resnet1d_encoder_forward.9} parent=11 // pred_check
        %p261 = pneg %p104
      $region22: #{resnet1d_encoder_forward.9} parent=11 // pred_check_branch
        %263 = sbr.rel (%p261) target = $region24
      $region23: #{resnet1d_encoder_forward.9} parent=11 // pred_region
        _
      $region24: #{resnet1d_encoder_forward.9} parent=11 // pred_fallthru
        _
      // Predicated region
      $region25: #{resnet1d_encoder_forward.9} parent=11 // pred_check
        %p264 = pneg %p125
      $region26: #{resnet1d_encoder_forward.9} parent=11 // pred_check_branch
        %266 = sbr.rel (%p264) target = $region28
      $region27: #{resnet1d_encoder_forward.9} parent=11 // pred_region
        _
      $region28: #{resnet1d_encoder_forward.9} parent=11 // pred_fallthru
        _
      // Predicated region
      $region29: #{resnet1d_encoder_forward.9} parent=11 // pred_check
        %p267 = pneg %p146
      $region30: #{resnet1d_encoder_forward.9} parent=11 // pred_check_branch
        %269 = sbr.rel (%p267) target = $region32
      $region31: #{resnet1d_encoder_forward.9} parent=11 // pred_region
        _
      $region32: #{resnet1d_encoder_forward.9} parent=11 // pred_fallthru
        _
      // Predicated region
      $region33: #{resnet1d_encoder_forward.9} parent=11 // pred_check
        %p270 = pneg %p167
      $region34: #{resnet1d_encoder_forward.9} parent=11 // pred_check_branch
        %272 = sbr.rel (%p270) target = $region36
      $region35: #{resnet1d_encoder_forward.9} parent=11 // pred_region
        _
      $region36: #{resnet1d_encoder_forward.9} parent=11 // pred_fallthru
        _
      // Predicated region
      $region37: #{resnet1d_encoder_forward.9} parent=11 // pred_check
        %p273 = pneg %p188
      $region38: #{resnet1d_encoder_forward.9} parent=11 // pred_check_branch
        %275 = sbr.rel (%p273) target = $region40
      $region39: #{resnet1d_encoder_forward.9} parent=11 // pred_region
        _
      $region40: #{resnet1d_encoder_forward.9} parent=11 // pred_fallthru
        _
    $region12: #{resnet1d_encoder_forward.9} parent=5 // pred_fallthru
      _
    %p276 = scmp.lt.s32.totalorder %s15, 2
    // Predicated region
    $region41: #{resnet1d_encoder_forward.9} parent=5 // pred_check
      %p277 = pneg %p276
    $region42: #{resnet1d_encoder_forward.9} parent=5 // pred_check_branch
      %279 = sbr.rel (%p277) target = $region44
    $region43: #{resnet1d_encoder_forward.9} parent=5 // pred_region
      // Predicated region
      $region45: #{resnet1d_encoder_forward.9} parent=43 // pred_check
        %p280 = pneg %p35
      $region46: #{resnet1d_encoder_forward.9} parent=43 // pred_check_branch
        %282 = sbr.rel (%p280) target = $region48
      $region47: #{resnet1d_encoder_forward.9} parent=43 // pred_region
        %p283 = scmp.lt.s32.totalorder %s15, 1
        %s284 = scalar_select %p283, %s15, 1
        %s285 = smul.addr %s284, 2
        %s286 = smul.addr %s285, 8
        %s287 = scalar_lea.vmem %s0, %s286
      $region48: #{resnet1d_encoder_forward.9} parent=43 // pred_fallthru
        _
      // Predicated region
      $region49: #{resnet1d_encoder_forward.9} parent=43 // pred_check
        %p288 = pneg %p208
      $region50: #{resnet1d_encoder_forward.9} parent=43 // pred_check_branch
        %290 = sbr.rel (%p288) target = $region52
      $region51: #{resnet1d_encoder_forward.9} parent=43 // pred_region
        %p291 = scmp.lt.s32.totalorder %s15, 1
        %s292 = scalar_select %p291, %s15, 1
        %s293 = smul.addr %s292, 2
        %s294 = smul.addr %s293, 8
        %s295 = scalar_lea.vmem %s8, %s294
      $region52: #{resnet1d_encoder_forward.9} parent=43 // pred_fallthru
        _
    $region44: #{resnet1d_encoder_forward.9} parent=5 // pred_fallthru
      _
    %p296 = scmp.le.s32.totalorder 1, %s15
    %p297 = scmp.lt.s32.totalorder %s15, 3
    %p298 = pnand %p296, %p297
    %p299 = pneg %p298
    // Predicated region
    $region53: #{resnet1d_encoder_forward.9} parent=5 // pred_check
      _
    $region54: #{resnet1d_encoder_forward.9} parent=5 // pred_check_branch
      %301 = sbr.rel (%p298) target = $region56
    $region55: #{resnet1d_encoder_forward.9} parent=5 // pred_region
      %s302 = ssub.s32 %s15, 1
      %p303 = scmp.lt.s32.totalorder %s20, 1
      %s304 = scalar_select %p303, %s20, 1
      %s305 = smul.addr %s304, 2
      %s306 = smul.addr %s305, 8
      %s307 = scalar_lea.vmem %s0, %s306
      %p308 = pneg %p41
      %p309 = pneg %p38
      %p310 = pneg %p62
      %p311 = pneg %p59
      %p312 = pneg %p83
      %p313 = pneg %p80
      %p314 = pneg %p104
      %p315 = pneg %p101
      %p316 = pneg %p125
      %p317 = pneg %p122
      %p318 = pneg %p146
      %p319 = pneg %p143
      %p320 = pneg %p167
      %p321 = pneg %p164
      %p322 = pneg %p188
      %p323 = pneg %p185
      %p324 = scmp.lt.s32.totalorder %s20, 1
      %s325 = scalar_select %p324, %s20, 1
      %s326 = smul.addr %s325, 2
      %s327 = smul.addr %s326, 8
      %s328 = scalar_lea.vmem %s8, %s327
      %p329 = pneg %p214
      %p330 = pneg %p211
      %p331 = pneg %p240
      %p332 = pneg %p237
      %p333 = scmp.lt.s32.totalorder %s20, 1
      %s334 = scalar_select %p333, %s20, 1
      %s335 = smul.addr %s334, 8
      %s336 = scalar_lea.vmem %s9, %s335
      %p337 = scmp.lt.s32.totalorder %s20, 1
      %s338 = scalar_select %p337, %s20, 1
      %s339 = smul.addr %s338, 2
      %s340 = smul.addr %s339, 8
      %s341 = scalar_lea.vmem %s0, %s340
      %p342 = scmp.lt.s32.totalorder %s20, 1
      %s343 = scalar_select %p342, %s20, 1
      %s344 = smul.addr %s343, 2
      %s345 = smul.addr %s344, 8
      %s346 = scalar_lea.vmem %s8, %s345
      %p347 = scmp.lt.s32.totalorder %s20, 1
      %s348 = scalar_select %p347, %s20, 1
      %s349 = smul.addr %s348, 8
      %s350 = scalar_lea.vmem %s9, %s349
      %v352 = vld [vmem:[%s341] sm:$0xff]
      %v353 = vld [vmem:[%s1] sm:$0xff]
      %355 = vset.pattern.permute.xlu0 0
      %356 = vperm.xlu0 %355, %v353
      %v357 = vpop.permute.xlu0 %356
      %v359 = vmul.f32 %v352, %v357
      %v360 = vld [vmem:[%s2] sm:$0xff]
      %362 = vset.pattern.permute.xlu0 0
      %363 = vperm.xlu0 %362, %v360
      %v364 = vpop.permute.xlu0 %363
      %v366 = vadd.f32 %v359, %v364
      %v367 = vmax.f32 %v366, 0.0
      %v368 = vlaneseq
      %v369 = vand.u32 %v368, 127
      %v370 = vmul.u32 %v369, 2
      %vm371 = vcmp.ge.s32.totalorder %v370, 0
      %vm372 = vcmp.lt.s32.totalorder %v370, 16
      %vm373 = vmand %vm371, %vm372
      %v374 = vsel %vm373, %v367, 0.0
      %vm375 = vcmask 64512
      %376 = vst.msk [vmem:[#allocation2] sm:$0xff] %vm375, %v374
      %s377 = scalar_lea.vmem %s341, 8
      %v378 = vld [vmem:[%s377] sm:$0xff]
      %v379 = vld [vmem:[%s1] sm:$0xff]
      %381 = vset.pattern.permute.xlu0 0
      %382 = vperm.xlu0 %381, %v379
      %v383 = vpop.permute.xlu0 %382
      %v385 = vmul.f32 %v378, %v383
      %v386 = vld [vmem:[%s2] sm:$0xff]
      %388 = vset.pattern.permute.xlu0 0
      %389 = vperm.xlu0 %388, %v386
      %v390 = vpop.permute.xlu0 %389
      %v392 = vadd.f32 %v385, %v390
      %v393 = vmax.f32 %v392, 0.0
      %v394 = vadd.s32 %v370, 1
      %vm395 = vcmp.ge.s32.totalorder %v394, 0
      %vm396 = vcmp.lt.s32.totalorder %v394, 16
      %vm397 = vmand %vm395, %vm396
      %v398 = vsel %vm397, %v393, 0.0
      %399 = vst.msk [vmem:[#allocation2 + $0x8] sm:$0xff] %vm375, %v398
      %v400 = vld [vmem:[%s341] sm:$0xff]
      %v401 = vld [vmem:[%s1] sm:$0xff]
      %403 = vset.pattern.permute.xlu0 0
      %404 = vperm.xlu0 %403, %v401
      %v405 = vpop.permute.xlu0 %404
      %v407 = vmul.f32 %v400, %v405
      %v408 = vld [vmem:[%s2] sm:$0xff]
      %410 = vset.pattern.permute.xlu0 0
      %411 = vperm.xlu0 %410, %v408
      %v412 = vpop.permute.xlu0 %411
      %v414 = vadd.f32 %v407, %v412
      %v415 = vmax.f32 %v414, 0.0
      %v416 = vadd.s32 %v370, 2
      %vm417 = vcmp.ge.s32.totalorder %v416, 0
      %vm418 = vcmp.lt.s32.totalorder %v416, 16
      %vm419 = vmand %vm417, %vm418
      %421 = vrot.lane.b32.xlu0 %v415, 127
      %v422 = vpop.permute.xlu0 %421
      %v424 = vsel %vm419, %v422, 0.0
      %425 = vst.msk [vmem:[#allocation2 + $0x10] sm:$0xff] %vm375, %v424
      %v426 = vld [vmem:[%s3] sm:$0xf]
      %v427 = vld [vmem:[#allocation2] sm:$0xff]
      %v428 = vld [vmem:[#allocation2 + $0x8] sm:$0xff]
      %v429 = vld [vmem:[#allocation2 + $0x10] sm:$0xff]
      %v430 = vpack.c.bf16 %v428, %v427
      %v431 = vpack.c.bf16 %v429, %v429
      %vm432 = vcmask 195584
      %v434 = vsel %vm432, %v426, 0
      %vm436 = vcmask 1043456
      %v438 = vsel %vm436, %v431, 0
      %440 = vmatprep.subr.bf16.mxu0 0
      %441 = vmatpush1.bf16.msra.mxu0 %v430
      %442 = vmatprep.subr.bf16.mxu0 0
      %443 = vmatpush1.bf16.msra.mxu0 %v438
      %444 = vmatprep.subr.bf16.mxu0 0
      %445 = vmatpush1.bf16.msra.mxu0 0
      %446 = vmatprep.subr.bf16.mxu0 0
      %447 = vmatpush1.bf16.msra.mxu0 0
      %448 = vmatprep.subr.bf16.mxu0 0
      %449 = vmatpush1.bf16.msra.mxu0 0
      %450 = vmatprep.subr.bf16.mxu0 0
      %451 = vmatpush1.bf16.msra.mxu0 0
      %452 = vmatprep.subr.bf16.mxu0 0
      %453 = vmatpush1.bf16.msra.mxu0 0
      %454 = vmatprep.subr.bf16.mxu0 0
      %455 = vmatpush1.bf16.msra.mxu0 0
      %456 = vmatprep.subr.bf16.mxu0 0
      %457 = vmatpush1.bf16.msra.mxu0 0
      %458 = vmatprep.subr.bf16.mxu0 0
      %459 = vmatpush1.bf16.msra.mxu0 0
      %460 = vmatprep.subr.bf16.mxu0 0
      %461 = vmatpush1.bf16.msra.mxu0 0
      %462 = vmatprep.subr.bf16.mxu0 0
      %463 = vmatpush1.bf16.msra.mxu0 0
      %464 = vmatprep.subr.bf16.mxu0 0
      %465 = vmatpush1.bf16.msra.mxu0 0
      %466 = vmatprep.subr.bf16.mxu0 0
      %467 = vmatpush1.bf16.msra.mxu0 0
      %468 = vmatprep.subr.bf16.mxu0 0
      %469 = vmatpush1.bf16.msra.mxu0 0
      %470 = vmatprep.subr.bf16.mxu0 0
      %471 = vmatpush1.bf16.msra.mxu0 0
      %472 = vmatprep.mubr.bf16.mxu0 0
      %473 = vmatmul.mubr.bf16.gmra.mrb[0].mxu0 %v434
      %v474 = vpop.f32.mrb[0].mxu0
      %v475 = vadd.f32 0.0, %v474
      %v476 = vpop.f32.mrb[0].mxu0
      %v477 = vpop.f32.mrb[0].mxu0
      %v478 = vpop.f32.mrb[0].mxu0
      %479 = vdwg.mxu0
      %v480 = vld [vmem:[%s4] sm:$0xff]
      %482 = vset.pattern.permute.xlu0 0
      %483 = vperm.xlu0 %482, %v480
      %v484 = vpop.permute.xlu0 %483
      %v486 = vmul.f32 %v475, %v484
      %v487 = vld [vmem:[%s5] sm:$0xff]
      %489 = vset.pattern.permute.xlu0 0
      %490 = vperm.xlu0 %489, %v487
      %v491 = vpop.permute.xlu0 %490
      %v493 = vadd.f32 %v486, %v491
      %v494 = vmax.f32 %v493, 0.0
      %vm495 = vcmask 80896
      %496 = vst.msk [vmem:[#allocation3] sm:$0xff] %vm495, 0.0
      %498 = vrot.lane.b32.xlu0 %v494, 1
      %v499 = vpop.permute.xlu0 %498
      %vm501 = vcmask 72712
      %502 = vst.msk [vmem:[#allocation3] sm:$0xff] %vm501, %v499
      %v503 = vld [vmem:[#allocation3] sm:$0xff]
      %504 = vst.msk [vmem:[#allocation4] sm:$0xff] %vm375, %v503
      %v505 = vld [vmem:[#allocation3] sm:$0xff]
      %507 = vrot.lane.b32.xlu0 %v505, 127
      %v508 = vpop.permute.xlu0 %507
      %510 = vst.msk [vmem:[#allocation4 + $0x8] sm:$0xff] %vm375, %v508
      %v511 = vld [vmem:[#allocation3] sm:$0xff]
      %513 = vrot.lane.b32.xlu0 %v511, 126
      %v514 = vpop.permute.xlu0 %513
      %516 = vst.msk [vmem:[#allocation4 + $0x10] sm:$0xff] %vm375, %v514
      %v517 = vld [vmem:[%s6] sm:$0xf]
      %v518 = vld [vmem:[#allocation4] sm:$0xff]
      %v519 = vld [vmem:[#allocation4 + $0x8] sm:$0xff]
      %v520 = vld [vmem:[#allocation4 + $0x10] sm:$0xff]
      %v521 = vpack.c.bf16 %v519, %v518
      %v522 = vpack.c.bf16 %v520, %v520
      %v523 = vld [vmem:[%s7] sm:$0xff]
      %525 = vset.pattern.permute.xlu0 0
      %526 = vperm.xlu0 %525, %v523
      %v527 = vpop.permute.xlu0 %526
      %v530 = vsel %vm432, %v517, 0
      %v533 = vsel %vm436, %v522, 0
      %535 = vmatprep.subr.bf16.mxu0 0
      %536 = vmatpush1.bf16.msra.mxu0 %v521
      %537 = vmatprep.subr.bf16.mxu0 0
      %538 = vmatpush1.bf16.msra.mxu0 %v533
      %539 = vmatprep.subr.bf16.mxu0 0
      %540 = vmatpush1.bf16.msra.mxu0 0
      %541 = vmatprep.subr.bf16.mxu0 0
      %542 = vmatpush1.bf16.msra.mxu0 0
      %543 = vmatprep.subr.bf16.mxu0 0
      %544 = vmatpush1.bf16.msra.mxu0 0
      %545 = vmatprep.subr.bf16.mxu0 0
      %546 = vmatpush1.bf16.msra.mxu0 0
      %547 = vmatprep.subr.bf16.mxu0 0
      %548 = vmatpush1.bf16.msra.mxu0 0
      %549 = vmatprep.subr.bf16.mxu0 0
      %550 = vmatpush1.bf16.msra.mxu0 0
      %551 = vmatprep.subr.bf16.mxu0 0
      %552 = vmatpush1.bf16.msra.mxu0 0
      %553 = vmatprep.subr.bf16.mxu0 0
      %554 = vmatpush1.bf16.msra.mxu0 0
      %555 = vmatprep.subr.bf16.mxu0 0
      %556 = vmatpush1.bf16.msra.mxu0 0
      %557 = vmatprep.subr.bf16.mxu0 0
      %558 = vmatpush1.bf16.msra.mxu0 0
      %559 = vmatprep.subr.bf16.mxu0 0
      %560 = vmatpush1.bf16.msra.mxu0 0
      %561 = vmatprep.subr.bf16.mxu0 0
      %562 = vmatpush1.bf16.msra.mxu0 0
      %563 = vmatprep.subr.bf16.mxu0 0
      %564 = vmatpush1.bf16.msra.mxu0 0
      %565 = vmatprep.subr.bf16.mxu0 0
      %566 = vmatpush1.bf16.msra.mxu0 0
      %567 = vmatprep.mubr.bf16.mxu0 0
      %568 = vmatmul.mubr.bf16.gmra.mrb[0].mxu0 %v530
      %v569 = vpop.f32.mrb[0].mxu0
      %v570 = vadd.f32 %v527, %v569
      %v571 = vpop.f32.mrb[0].mxu0
      %v572 = vpop.f32.mrb[0].mxu0
      %v573 = vpop.f32.mrb[0].mxu0
      %574 = vdwg.mxu0
      %v575 = vld [vmem:[%s346] sm:$0xff]
      %s576 = scalar_lea.vmem %s346, 8
      %v577 = vld [vmem:[%s576] sm:$0xff]
      %v578 = vmax.f32 %v575, %v577
      %v579 = vadd.f32 %v570, %v578
      %580 = vst.msk [vmem:[%s350] sm:$0xff] %vm375, %v579
      %p581 = scmp.lt.s32.totalorder %s20, 1
      %s582 = scalar_select %p581, %s20, 1
      %s583 = smul.addr %s582, 8
      %s584 = scalar_lea.vmem %s9, %s583
      // Predicated region
      $region57: #{resnet1d_encoder_forward.9} parent=55 // pred_check
        %p585 = pneg %p237
      $region58: #{resnet1d_encoder_forward.9} parent=55 // pred_check_branch
        %587 = sbr.rel (%p585) target = $region60
      $region59: #{resnet1d_encoder_forward.9} parent=55 // pred_region
        _
      $region60: #{resnet1d_encoder_forward.9} parent=55 // pred_fallthru
        _
    $region56: #{resnet1d_encoder_forward.9} parent=5 // pred_fallthru
      _
    %p588 = scmp.le.s32.totalorder 2, %s15
    // Predicated region
    $region61: #{resnet1d_encoder_forward.9} parent=5 // pred_check
      %p589 = pneg %p588
    $region62: #{resnet1d_encoder_forward.9} parent=5 // pred_check_branch
      %591 = sbr.rel (%p589) target = $region64
    $region63: #{resnet1d_encoder_forward.9} parent=5 // pred_region
      %s592 = ssub.s32 %s15, 2
      // Predicated region
      $region65: #{resnet1d_encoder_forward.9} parent=63 // pred_check
        %p593 = pneg %p243
      $region66: #{resnet1d_encoder_forward.9} parent=63 // pred_check_branch
        %595 = sbr.rel (%p593) target = $region68
      $region67: #{resnet1d_encoder_forward.9} parent=63 // pred_region
        %p596 = scmp.lt.s32.totalorder %s21, 1
        %s597 = scalar_select %p596, %s21, 1
        %s598 = smul.addr %s597, 8
        %s599 = scalar_lea.vmem %s9, %s598
      $region68: #{resnet1d_encoder_forward.9} parent=63 // pred_fallthru
        _
    $region64: #{resnet1d_encoder_forward.9} parent=5 // pred_fallthru
      _
  $region6: #{resnet1d_encoder_forward.9} parent=0 // loop_footer
    %s19 = sadd.s32 1, %s15
  $region7: #{resnet1d_encoder_forward.9} parent=0 // loop_footer_branch
    %14 = sbr.rel target = $region3
  $region8: #{resnet1d_encoder_forward.9} parent=0 // loop_exit
    _

// kernel: resnet1d_encoder_forward.10
$region0: #{resnet1d_encoder_forward.10}
  #allocation0 [shape = 'u32[]', space=smem, size = 0x4, offset = 0x4, fixed_abs, tag = 'smem constant byte address 0x4 - core index']
  #allocation1 [shape = 'u32[144,128]{1,0:T(1,128)}', space=vmem, size = 0x12000, scoped, tag = 'internal scratch']
  #allocation2 [shape = 'f32[24,8]{1,0:T(8,128)}', space=vmem, size = 0x3000, scoped, tag = 'scratch operand']
  #allocation3 [shape = 'f32[8,10]{1,0:T(8,128)}', space=vmem, size = 0x1000, scoped, tag = 'scratch operand']
  #allocation4 [shape = 'f32[24,8]{1,0:T(8,128)}', space=vmem, size = 0x3000, scoped, tag = 'scratch operand']
  %s0 = inlined_call_operand.vmem [shape: f32[2,1,8,10], index: 0, kind: input, shape index: {}]
  %s1 = inlined_call_operand.vmem [shape: f32[8,1], index: 1, kind: input, shape index: {}]
  %s2 = inlined_call_operand.vmem [shape: f32[8,1], index: 2, kind: input, shape index: {}]
  %s3 = inlined_call_operand.vmem [shape: bf16[8,24], index: 3, kind: input, shape index: {}]
  %s4 = inlined_call_operand.vmem [shape: f32[8,1], index: 4, kind: input, shape index: {}]
  %s5 = inlined_call_operand.vmem [shape: f32[8,1], index: 5, kind: input, shape index: {}]
  %s6 = inlined_call_operand.vmem [shape: bf16[8,24], index: 6, kind: input, shape index: {}]
  %s7 = inlined_call_operand.vmem [shape: f32[8,1], index: 7, kind: input, shape index: {}]
  %s8 = inlined_call_operand.vmem [shape: f32[2,8,8], index: 8, kind: output, shape index: {}]
  %s9 = sld [smem:[#allocation0]]
  $region65: #{resnet1d_encoder_forward.10} parent=0
    _
  %s11 = ssub.s32 1, %s9
  %s12 = scalar_select 0, %s11, %s9
  loop: start=0, step=1, limit=4
  $region2: #{resnet1d_encoder_forward.10} parent=0 // loop_pre_header
    _
  $region3: #{resnet1d_encoder_forward.10} parent=0 // loop_header
    %s14 = sphi 0, %s18
    %p15 = scmp.ge.s32.totalorder %s14, 4
    %s24 = sphi 0, %s26
    %s27 = sphi 0, %s24
    %s28 = sphi 0, %s27
    %s44 = sphi 0, %s28
    %s48 = sphi 0, %s48
    %s50 = sphi 0, %s48
    %s51 = sphi 0, %s50
    %s65 = sphi 0, %s51
    %s69 = sphi 0, %s69
    %s71 = sphi 0, %s69
    %s72 = sphi 0, %s71
    %s86 = sphi 0, %s72
    %s90 = sphi 0, %s90
    %s92 = sphi 0, %s90
    %s93 = sphi 0, %s92
    %s107 = sphi 0, %s93
    %s111 = sphi 0, %s111
    %s113 = sphi 0, %s111
    %s114 = sphi 0, %s113
    %s128 = sphi 0, %s114
    %s132 = sphi 0, %s132
    %s134 = sphi 0, %s132
    %s135 = sphi 0, %s134
    %s149 = sphi 0, %s135
    %s153 = sphi 0, %s153
    %s155 = sphi 0, %s153
    %s156 = sphi 0, %s155
    %s170 = sphi 0, %s156
    %s174 = sphi 0, %s174
    %s176 = sphi 0, %s174
    %s177 = sphi 0, %s176
    %s191 = sphi 0, %s177
    %s197 = sphi 0, %s199
    %s200 = sphi 0, %s197
    %s201 = sphi 0, %s200
    %s217 = sphi 0, %s201
  $region4: #{resnet1d_encoder_forward.10} parent=0 // loop_header_branch
    %17 = sbr.rel (%p15) target = $region8
  $region5: #{resnet1d_encoder_forward.10} parent=0 // loop_body
    %s19 = ssub.s32 %s14, 1
    %s20 = ssub.s32 %s14, 2
    %s21 = sadd.s32 %s14, 1
    %s22 = ssub.s32 %s14, %s21
    %p23 = scmp.eq.s32.totalorder %s22, 0
    %s25 = sadd.s32 %s24, 1
    %s26 = scalar_select %p23, %s24, %s25
    %p29 = pneg %p23
    %p30 = scmp.eq.s32.totalorder %s14, 1
    %p31 = por %p29, %p30
    %p32 = scmp.ne.s32.totalorder %s24, %s27
    %p33 = scmp.eq.s32.totalorder %s14, 0
    %p34 = por %p32, %p33
    %p35 = scmp.ne.s32.totalorder %s24, %s27
    %p36 = scmp.eq.s32.totalorder %s19, 1
    %p37 = por %p35, %p36
    %p38 = scmp.ne.s32.totalorder %s27, %s28
    %p39 = scmp.eq.s32.totalorder %s19, 0
    %p40 = por %p38, %p39
    %p41 = scmp.ne.s32.totalorder %s27, %s28
    %p42 = scmp.eq.s32.totalorder %s20, 1
    %p43 = por %p41, %p42
    %p45 = scmp.ne.s32.totalorder %s28, %s44
    %p46 = scmp.eq.s32.totalorder %s20, 0
    %p47 = por %p45, %p46
    %s49 = sadd.s32 %s48, 1
    %p52 = scmp.eq.s32.totalorder %s14, 1
    %p53 = scmp.ne.s32.totalorder %s48, %s50
    %p54 = scmp.eq.s32.totalorder %s14, 0
    %p55 = por %p53, %p54
    %p56 = scmp.ne.s32.totalorder %s48, %s50
    %p57 = scmp.eq.s32.totalorder %s19, 1
    %p58 = por %p56, %p57
    %p59 = scmp.ne.s32.totalorder %s50, %s51
    %p60 = scmp.eq.s32.totalorder %s19, 0
    %p61 = por %p59, %p60
    %p62 = scmp.ne.s32.totalorder %s50, %s51
    %p63 = scmp.eq.s32.totalorder %s20, 1
    %p64 = por %p62, %p63
    %p66 = scmp.ne.s32.totalorder %s51, %s65
    %p67 = scmp.eq.s32.totalorder %s20, 0
    %p68 = por %p66, %p67
    %s70 = sadd.s32 %s69, 1
    %p73 = scmp.eq.s32.totalorder %s14, 1
    %p74 = scmp.ne.s32.totalorder %s69, %s71
    %p75 = scmp.eq.s32.totalorder %s14, 0
    %p76 = por %p74, %p75
    %p77 = scmp.ne.s32.totalorder %s69, %s71
    %p78 = scmp.eq.s32.totalorder %s19, 1
    %p79 = por %p77, %p78
    %p80 = scmp.ne.s32.totalorder %s71, %s72
    %p81 = scmp.eq.s32.totalorder %s19, 0
    %p82 = por %p80, %p81
    %p83 = scmp.ne.s32.totalorder %s71, %s72
    %p84 = scmp.eq.s32.totalorder %s20, 1
    %p85 = por %p83, %p84
    %p87 = scmp.ne.s32.totalorder %s72, %s86
    %p88 = scmp.eq.s32.totalorder %s20, 0
    %p89 = por %p87, %p88
    %s91 = sadd.s32 %s90, 1
    %p94 = scmp.eq.s32.totalorder %s14, 1
    %p95 = scmp.ne.s32.totalorder %s90, %s92
    %p96 = scmp.eq.s32.totalorder %s14, 0
    %p97 = por %p95, %p96
    %p98 = scmp.ne.s32.totalorder %s90, %s92
    %p99 = scmp.eq.s32.totalorder %s19, 1
    %p100 = por %p98, %p99
    %p101 = scmp.ne.s32.totalorder %s92, %s93
    %p102 = scmp.eq.s32.totalorder %s19, 0
    %p103 = por %p101, %p102
    %p104 = scmp.ne.s32.totalorder %s92, %s93
    %p105 = scmp.eq.s32.totalorder %s20, 1
    %p106 = por %p104, %p105
    %p108 = scmp.ne.s32.totalorder %s93, %s107
    %p109 = scmp.eq.s32.totalorder %s20, 0
    %p110 = por %p108, %p109
    %s112 = sadd.s32 %s111, 1
    %p115 = scmp.eq.s32.totalorder %s14, 1
    %p116 = scmp.ne.s32.totalorder %s111, %s113
    %p117 = scmp.eq.s32.totalorder %s14, 0
    %p118 = por %p116, %p117
    %p119 = scmp.ne.s32.totalorder %s111, %s113
    %p120 = scmp.eq.s32.totalorder %s19, 1
    %p121 = por %p119, %p120
    %p122 = scmp.ne.s32.totalorder %s113, %s114
    %p123 = scmp.eq.s32.totalorder %s19, 0
    %p124 = por %p122, %p123
    %p125 = scmp.ne.s32.totalorder %s113, %s114
    %p126 = scmp.eq.s32.totalorder %s20, 1
    %p127 = por %p125, %p126
    %p129 = scmp.ne.s32.totalorder %s114, %s128
    %p130 = scmp.eq.s32.totalorder %s20, 0
    %p131 = por %p129, %p130
    %s133 = sadd.s32 %s132, 1
    %p136 = scmp.eq.s32.totalorder %s14, 1
    %p137 = scmp.ne.s32.totalorder %s132, %s134
    %p138 = scmp.eq.s32.totalorder %s14, 0
    %p139 = por %p137, %p138
    %p140 = scmp.ne.s32.totalorder %s132, %s134
    %p141 = scmp.eq.s32.totalorder %s19, 1
    %p142 = por %p140, %p141
    %p143 = scmp.ne.s32.totalorder %s134, %s135
    %p144 = scmp.eq.s32.totalorder %s19, 0
    %p145 = por %p143, %p144
    %p146 = scmp.ne.s32.totalorder %s134, %s135
    %p147 = scmp.eq.s32.totalorder %s20, 1
    %p148 = por %p146, %p147
    %p150 = scmp.ne.s32.totalorder %s135, %s149
    %p151 = scmp.eq.s32.totalorder %s20, 0
    %p152 = por %p150, %p151
    %s154 = sadd.s32 %s153, 1
    %p157 = scmp.eq.s32.totalorder %s14, 1
    %p158 = scmp.ne.s32.totalorder %s153, %s155
    %p159 = scmp.eq.s32.totalorder %s14, 0
    %p160 = por %p158, %p159
    %p161 = scmp.ne.s32.totalorder %s153, %s155
    %p162 = scmp.eq.s32.totalorder %s19, 1
    %p163 = por %p161, %p162
    %p164 = scmp.ne.s32.totalorder %s155, %s156
    %p165 = scmp.eq.s32.totalorder %s19, 0
    %p166 = por %p164, %p165
    %p167 = scmp.ne.s32.totalorder %s155, %s156
    %p168 = scmp.eq.s32.totalorder %s20, 1
    %p169 = por %p167, %p168
    %p171 = scmp.ne.s32.totalorder %s156, %s170
    %p172 = scmp.eq.s32.totalorder %s20, 0
    %p173 = por %p171, %p172
    %s175 = sadd.s32 %s174, 1
    %p178 = scmp.eq.s32.totalorder %s14, 1
    %p179 = scmp.ne.s32.totalorder %s174, %s176
    %p180 = scmp.eq.s32.totalorder %s14, 0
    %p181 = por %p179, %p180
    %p182 = scmp.ne.s32.totalorder %s174, %s176
    %p183 = scmp.eq.s32.totalorder %s19, 1
    %p184 = por %p182, %p183
    %p185 = scmp.ne.s32.totalorder %s176, %s177
    %p186 = scmp.eq.s32.totalorder %s19, 0
    %p187 = por %p185, %p186
    %p188 = scmp.ne.s32.totalorder %s176, %s177
    %p189 = scmp.eq.s32.totalorder %s20, 1
    %p190 = por %p188, %p189
    %p192 = scmp.ne.s32.totalorder %s177, %s191
    %p193 = scmp.eq.s32.totalorder %s20, 0
    %p194 = por %p192, %p193
    %s195 = ssub.s32 %s14, %s21
    %p196 = scmp.eq.s32.totalorder %s195, 0
    %s198 = sadd.s32 %s197, 1
    %s199 = scalar_select %p196, %s197, %s198
    %p202 = pneg %p196
    %p203 = scmp.eq.s32.totalorder %s14, 1
    %p204 = por %p202, %p203
    %p205 = scmp.ne.s32.totalorder %s197, %s200
    %p206 = scmp.eq.s32.totalorder %s14, 0
    %p207 = por %p205, %p206
    %p208 = scmp.ne.s32.totalorder %s197, %s200
    %p209 = scmp.eq.s32.totalorder %s19, 1
    %p210 = por %p208, %p209
    %p211 = scmp.ne.s32.totalorder %s200, %s201
    %p212 = scmp.eq.s32.totalorder %s19, 0
    %p213 = por %p211, %p212
    %p214 = scmp.ne.s32.totalorder %s200, %s201
    %p215 = scmp.eq.s32.totalorder %s20, 1
    %p216 = por %p214, %p215
    %p218 = scmp.ne.s32.totalorder %s201, %s217
    %p219 = scmp.eq.s32.totalorder %s20, 0
    %p220 = por %p218, %p219
    %p221 = scmp.le.s32.totalorder 1, %s14
    %p222 = scmp.lt.s32.totalorder %s14, 3
    %p223 = pnand %p221, %p222
    %p224 = pneg %p223
    // Predicated region
    $region9: #{resnet1d_encoder_forward.10} parent=5 // pred_check
      _
    $region10: #{resnet1d_encoder_forward.10} parent=5 // pred_check_branch
      %226 = sbr.rel (%p223) target = $region12
    $region11: #{resnet1d_encoder_forward.10} parent=5 // pred_region
      %s227 = ssub.s32 %s14, 1
      // Predicated region
      $region13: #{resnet1d_encoder_forward.10} parent=11 // pred_check
        %p228 = pneg %p61
      $region14: #{resnet1d_encoder_forward.10} parent=11 // pred_check_branch
        %230 = sbr.rel (%p228) target = $region16
      $region15: #{resnet1d_encoder_forward.10} parent=11 // pred_region
        _
      $region16: #{resnet1d_encoder_forward.10} parent=11 // pred_fallthru
        _
      // Predicated region
      $region17: #{resnet1d_encoder_forward.10} parent=11 // pred_check
        %p231 = pneg %p82
      $region18: #{resnet1d_encoder_forward.10} parent=11 // pred_check_branch
        %233 = sbr.rel (%p231) target = $region20
      $region19: #{resnet1d_encoder_forward.10} parent=11 // pred_region
        _
      $region20: #{resnet1d_encoder_forward.10} parent=11 // pred_fallthru
        _
      // Predicated region
      $region21: #{resnet1d_encoder_forward.10} parent=11 // pred_check
        %p234 = pneg %p103
      $region22: #{resnet1d_encoder_forward.10} parent=11 // pred_check_branch
        %236 = sbr.rel (%p234) target = $region24
      $region23: #{resnet1d_encoder_forward.10} parent=11 // pred_region
        _
      $region24: #{resnet1d_encoder_forward.10} parent=11 // pred_fallthru
        _
      // Predicated region
      $region25: #{resnet1d_encoder_forward.10} parent=11 // pred_check
        %p237 = pneg %p124
      $region26: #{resnet1d_encoder_forward.10} parent=11 // pred_check_branch
        %239 = sbr.rel (%p237) target = $region28
      $region27: #{resnet1d_encoder_forward.10} parent=11 // pred_region
        _
      $region28: #{resnet1d_encoder_forward.10} parent=11 // pred_fallthru
        _
      // Predicated region
      $region29: #{resnet1d_encoder_forward.10} parent=11 // pred_check
        %p240 = pneg %p145
      $region30: #{resnet1d_encoder_forward.10} parent=11 // pred_check_branch
        %242 = sbr.rel (%p240) target = $region32
      $region31: #{resnet1d_encoder_forward.10} parent=11 // pred_region
        _
      $region32: #{resnet1d_encoder_forward.10} parent=11 // pred_fallthru
        _
      // Predicated region
      $region33: #{resnet1d_encoder_forward.10} parent=11 // pred_check
        %p243 = pneg %p166
      $region34: #{resnet1d_encoder_forward.10} parent=11 // pred_check_branch
        %245 = sbr.rel (%p243) target = $region36
      $region35: #{resnet1d_encoder_forward.10} parent=11 // pred_region
        _
      $region36: #{resnet1d_encoder_forward.10} parent=11 // pred_fallthru
        _
      // Predicated region
      $region37: #{resnet1d_encoder_forward.10} parent=11 // pred_check
        %p246 = pneg %p187
      $region38: #{resnet1d_encoder_forward.10} parent=11 // pred_check_branch
        %248 = sbr.rel (%p246) target = $region40
      $region39: #{resnet1d_encoder_forward.10} parent=11 // pred_region
        _
      $region40: #{resnet1d_encoder_forward.10} parent=11 // pred_fallthru
        _
    $region12: #{resnet1d_encoder_forward.10} parent=5 // pred_fallthru
      _
    %p249 = scmp.lt.s32.totalorder %s14, 2
    // Predicated region
    $region41: #{resnet1d_encoder_forward.10} parent=5 // pred_check
      %p250 = pneg %p249
    $region42: #{resnet1d_encoder_forward.10} parent=5 // pred_check_branch
      %252 = sbr.rel (%p250) target = $region44
    $region43: #{resnet1d_encoder_forward.10} parent=5 // pred_region
      // Predicated region
      $region45: #{resnet1d_encoder_forward.10} parent=43 // pred_check
        %p253 = pneg %p34
      $region46: #{resnet1d_encoder_forward.10} parent=43 // pred_check_branch
        %255 = sbr.rel (%p253) target = $region48
      $region47: #{resnet1d_encoder_forward.10} parent=43 // pred_region
        %p256 = scmp.lt.s32.totalorder %s14, 1
        %s257 = scalar_select %p256, %s14, 1
        %s258 = smul.addr %s257, 8
        %s259 = scalar_lea.vmem %s0, %s258
      $region48: #{resnet1d_encoder_forward.10} parent=43 // pred_fallthru
        _
    $region44: #{resnet1d_encoder_forward.10} parent=5 // pred_fallthru
      _
    %p260 = scmp.le.s32.totalorder 1, %s14
    %p261 = scmp.lt.s32.totalorder %s14, 3
    %p262 = pnand %p260, %p261
    %p263 = pneg %p262
    // Predicated region
    $region49: #{resnet1d_encoder_forward.10} parent=5 // pred_check
      _
    $region50: #{resnet1d_encoder_forward.10} parent=5 // pred_check_branch
      %265 = sbr.rel (%p262) target = $region52
    $region51: #{resnet1d_encoder_forward.10} parent=5 // pred_region
      %s266 = ssub.s32 %s14, 1
      %p267 = scmp.lt.s32.totalorder %s19, 1
      %s268 = scalar_select %p267, %s19, 1
      %s269 = smul.addr %s268, 8
      %s270 = scalar_lea.vmem %s0, %s269
      %p271 = pneg %p40
      %p272 = pneg %p37
      %p273 = pneg %p61
      %p274 = pneg %p58
      %p275 = pneg %p82
      %p276 = pneg %p79
      %p277 = pneg %p103
      %p278 = pneg %p100
      %p279 = pneg %p124
      %p280 = pneg %p121
      %p281 = pneg %p145
      %p282 = pneg %p142
      %p283 = pneg %p166
      %p284 = pneg %p163
      %p285 = pneg %p187
      %p286 = pneg %p184
      %p287 = pneg %p213
      %p288 = pneg %p210
      %p289 = scmp.lt.s32.totalorder %s19, 1
      %s290 = scalar_select %p289, %s19, 1
      %s291 = smul.addr %s290, 8
      %s292 = scalar_lea.vmem %s8, %s291
      %p293 = scmp.lt.s32.totalorder %s19, 1
      %s294 = scalar_select %p293, %s19, 1
      %s295 = smul.addr %s294, 8
      %s296 = scalar_lea.vmem %s0, %s295
      %p297 = scmp.lt.s32.totalorder %s19, 1
      %s298 = scalar_select %p297, %s19, 1
      %s299 = smul.addr %s298, 8
      %s300 = scalar_lea.vmem %s8, %s299
      %v302 = vld [vmem:[%s296] sm:$0xff]
      %v303 = vld [vmem:[%s1] sm:$0xff]
      %305 = vset.pattern.permute.xlu0 0
      %306 = vperm.xlu0 %305, %v303
      %v307 = vpop.permute.xlu0 %306
      %v309 = vmul.f32 %v302, %v307
      %v310 = vld [vmem:[%s2] sm:$0xff]
      %312 = vset.pattern.permute.xlu0 0
      %313 = vperm.xlu0 %312, %v310
      %v314 = vpop.permute.xlu0 %313
      %v316 = vadd.f32 %v309, %v314
      %v317 = vmax.f32 %v316, 0.0
      %v318 = vlaneseq
      %v319 = vand.u32 %v318, 127
      %vm320 = vcmp.ge.s32.totalorder %v319, 1
      %vm321 = vcmp.lt.s32.totalorder %v319, 9
      %vm322 = vmand %vm320, %vm321
      %v323 = vsel %vm322, %v317, 0.0
      %vm324 = vcmask 64512
      %325 = vst.msk [vmem:[#allocation2] sm:$0xff] %vm324, %v323
      %v326 = vld [vmem:[%s296] sm:$0xff]
      %v327 = vld [vmem:[%s1] sm:$0xff]
      %329 = vset.pattern.permute.xlu0 0
      %330 = vperm.xlu0 %329, %v327
      %v331 = vpop.permute.xlu0 %330
      %v333 = vmul.f32 %v326, %v331
      %v334 = vld [vmem:[%s2] sm:$0xff]
      %336 = vset.pattern.permute.xlu0 0
      %337 = vperm.xlu0 %336, %v334
      %v338 = vpop.permute.xlu0 %337
      %v340 = vadd.f32 %v333, %v338
      %v341 = vmax.f32 %v340, 0.0
      %v342 = vadd.s32 %v319, 1
      %vm343 = vcmp.ge.s32.totalorder %v342, 1
      %vm344 = vcmp.lt.s32.totalorder %v342, 9
      %vm345 = vmand %vm343, %vm344
      %347 = vrot.lane.b32.xlu0 %v341, 127
      %v348 = vpop.permute.xlu0 %347
      %v350 = vsel %vm345, %v348, 0.0
      %351 = vst.msk [vmem:[#allocation2 + $0x8] sm:$0xff] %vm324, %v350
      %v352 = vld [vmem:[%s296] sm:$0xff]
      %v353 = vld [vmem:[%s1] sm:$0xff]
      %355 = vset.pattern.permute.xlu0 0
      %356 = vperm.xlu0 %355, %v353
      %v357 = vpop.permute.xlu0 %356
      %v359 = vmul.f32 %v352, %v357
      %v360 = vld [vmem:[%s2] sm:$0xff]
      %362 = vset.pattern.permute.xlu0 0
      %363 = vperm.xlu0 %362, %v360
      %v364 = vpop.permute.xlu0 %363
      %v366 = vadd.f32 %v359, %v364
      %v367 = vmax.f32 %v366, 0.0
      %v368 = vadd.s32 %v319, 2
      %vm369 = vcmp.ge.s32.totalorder %v368, 1
      %vm370 = vcmp.lt.s32.totalorder %v368, 9
      %vm371 = vmand %vm369, %vm370
      %373 = vrot.lane.b32.xlu0 %v367, 126
      %v374 = vpop.permute.xlu0 %373
      %v376 = vsel %vm371, %v374, 0.0
      %377 = vst.msk [vmem:[#allocation2 + $0x10] sm:$0xff] %vm324, %v376
      %v378 = vld [vmem:[%s3] sm:$0xf]
      %v379 = vld [vmem:[#allocation2] sm:$0xff]
      %v380 = vld [vmem:[#allocation2 + $0x8] sm:$0xff]
      %v381 = vld [vmem:[#allocation2 + $0x10] sm:$0xff]
      %v382 = vpack.c.bf16 %v380, %v379
      %v383 = vpack.c.bf16 %v381, %v381
      %vm384 = vcmask 195584
      %v386 = vsel %vm384, %v378, 0
      %vm388 = vcmask 1043456
      %v390 = vsel %vm388, %v383, 0
      %392 = vmatprep.subr.bf16.mxu0 0
      %393 = vmatpush1.bf16.msra.mxu0 %v382
      %394 = vmatprep.subr.bf16.mxu0 0
      %395 = vmatpush1.bf16.msra.mxu0 %v390
      %396 = vmatprep.subr.bf16.mxu0 0
      %397 = vmatpush1.bf16.msra.mxu0 0
      %398 = vmatprep.subr.bf16.mxu0 0
      %399 = vmatpush1.bf16.msra.mxu0 0
      %400 = vmatprep.subr.bf16.mxu0 0
      %401 = vmatpush1.bf16.msra.mxu0 0
      %402 = vmatprep.subr.bf16.mxu0 0
      %403 = vmatpush1.bf16.msra.mxu0 0
      %404 = vmatprep.subr.bf16.mxu0 0
      %405 = vmatpush1.bf16.msra.mxu0 0
      %406 = vmatprep.subr.bf16.mxu0 0
      %407 = vmatpush1.bf16.msra.mxu0 0
      %408 = vmatprep.subr.bf16.mxu0 0
      %409 = vmatpush1.bf16.msra.mxu0 0
      %410 = vmatprep.subr.bf16.mxu0 0
      %411 = vmatpush1.bf16.msra.mxu0 0
      %412 = vmatprep.subr.bf16.mxu0 0
      %413 = vmatpush1.bf16.msra.mxu0 0
      %414 = vmatprep.subr.bf16.mxu0 0
      %415 = vmatpush1.bf16.msra.mxu0 0
      %416 = vmatprep.subr.bf16.mxu0 0
      %417 = vmatpush1.bf16.msra.mxu0 0
      %418 = vmatprep.subr.bf16.mxu0 0
      %419 = vmatpush1.bf16.msra.mxu0 0
      %420 = vmatprep.subr.bf16.mxu0 0
      %421 = vmatpush1.bf16.msra.mxu0 0
      %422 = vmatprep.subr.bf16.mxu0 0
      %423 = vmatpush1.bf16.msra.mxu0 0
      %424 = vmatprep.mubr.bf16.mxu0 0
      %425 = vmatmul.mubr.bf16.gmra.mrb[0].mxu0 %v386
      %v426 = vpop.f32.mrb[0].mxu0
      %v427 = vadd.f32 0.0, %v426
      %v428 = vpop.f32.mrb[0].mxu0
      %v429 = vpop.f32.mrb[0].mxu0
      %v430 = vpop.f32.mrb[0].mxu0
      %431 = vdwg.mxu0
      %v432 = vld [vmem:[%s4] sm:$0xff]
      %434 = vset.pattern.permute.xlu0 0
      %435 = vperm.xlu0 %434, %v432
      %v436 = vpop.permute.xlu0 %435
      %v438 = vmul.f32 %v427, %v436
      %v439 = vld [vmem:[%s5] sm:$0xff]
      %441 = vset.pattern.permute.xlu0 0
      %442 = vperm.xlu0 %441, %v439
      %v443 = vpop.permute.xlu0 %442
      %v445 = vadd.f32 %v438, %v443
      %v446 = vmax.f32 %v445, 0.0
      %vm447 = vcmask 80896
      %448 = vst.msk [vmem:[#allocation3] sm:$0xff] %vm447, 0.0
      %450 = vrot.lane.b32.xlu0 %v446, 1
      %v451 = vpop.permute.xlu0 %450
      %vm453 = vcmask 72712
      %454 = vst.msk [vmem:[#allocation3] sm:$0xff] %vm453, %v451
      %v455 = vld [vmem:[#allocation3] sm:$0xff]
      %456 = vst.msk [vmem:[#allocation4] sm:$0xff] %vm324, %v455
      %v457 = vld [vmem:[#allocation3] sm:$0xff]
      %459 = vrot.lane.b32.xlu0 %v457, 127
      %v460 = vpop.permute.xlu0 %459
      %462 = vst.msk [vmem:[#allocation4 + $0x8] sm:$0xff] %vm324, %v460
      %v463 = vld [vmem:[#allocation3] sm:$0xff]
      %465 = vrot.lane.b32.xlu0 %v463, 126
      %v466 = vpop.permute.xlu0 %465
      %468 = vst.msk [vmem:[#allocation4 + $0x10] sm:$0xff] %vm324, %v466
      %v469 = vld [vmem:[%s6] sm:$0xf]
      %v470 = vld [vmem:[#allocation4] sm:$0xff]
      %v471 = vld [vmem:[#allocation4 + $0x8] sm:$0xff]
      %v472 = vld [vmem:[#allocation4 + $0x10] sm:$0xff]
      %v473 = vpack.c.bf16 %v471, %v470
      %v474 = vpack.c.bf16 %v472, %v472
      %v475 = vld [vmem:[%s7] sm:$0xff]
      %477 = vset.pattern.permute.xlu0 0
      %478 = vperm.xlu0 %477, %v475
      %v479 = vpop.permute.xlu0 %478
      %v482 = vsel %vm384, %v469, 0
      %v485 = vsel %vm388, %v474, 0
      %487 = vmatprep.subr.bf16.mxu0 0
      %488 = vmatpush1.bf16.msra.mxu0 %v473
      %489 = vmatprep.subr.bf16.mxu0 0
      %490 = vmatpush1.bf16.msra.mxu0 %v485
      %491 = vmatprep.subr.bf16.mxu0 0
      %492 = vmatpush1.bf16.msra.mxu0 0
      %493 = vmatprep.subr.bf16.mxu0 0
      %494 = vmatpush1.bf16.msra.mxu0 0
      %495 = vmatprep.subr.bf16.mxu0 0
      %496 = vmatpush1.bf16.msra.mxu0 0
      %497 = vmatprep.subr.bf16.mxu0 0
      %498 = vmatpush1.bf16.msra.mxu0 0
      %499 = vmatprep.subr.bf16.mxu0 0
      %500 = vmatpush1.bf16.msra.mxu0 0
      %501 = vmatprep.subr.bf16.mxu0 0
      %502 = vmatpush1.bf16.msra.mxu0 0
      %503 = vmatprep.subr.bf16.mxu0 0
      %504 = vmatpush1.bf16.msra.mxu0 0
      %505 = vmatprep.subr.bf16.mxu0 0
      %506 = vmatpush1.bf16.msra.mxu0 0
      %507 = vmatprep.subr.bf16.mxu0 0
      %508 = vmatpush1.bf16.msra.mxu0 0
      %509 = vmatprep.subr.bf16.mxu0 0
      %510 = vmatpush1.bf16.msra.mxu0 0
      %511 = vmatprep.subr.bf16.mxu0 0
      %512 = vmatpush1.bf16.msra.mxu0 0
      %513 = vmatprep.subr.bf16.mxu0 0
      %514 = vmatpush1.bf16.msra.mxu0 0
      %515 = vmatprep.subr.bf16.mxu0 0
      %516 = vmatpush1.bf16.msra.mxu0 0
      %517 = vmatprep.subr.bf16.mxu0 0
      %518 = vmatpush1.bf16.msra.mxu0 0
      %519 = vmatprep.mubr.bf16.mxu0 0
      %520 = vmatmul.mubr.bf16.gmra.mrb[0].mxu0 %v482
      %v521 = vpop.f32.mrb[0].mxu0
      %v522 = vadd.f32 %v479, %v521
      %v523 = vpop.f32.mrb[0].mxu0
      %v524 = vpop.f32.mrb[0].mxu0
      %v525 = vpop.f32.mrb[0].mxu0
      %526 = vdwg.mxu0
      %v527 = vld [vmem:[%s296] sm:$0xff]
      %529 = vrot.lane.b32.xlu0 %v527, 127
      %v530 = vpop.permute.xlu0 %529
      %v532 = vadd.f32 %v522, %v530
      %533 = vst.msk [vmem:[%s300] sm:$0xff] %vm324, %v532
      %p534 = scmp.lt.s32.totalorder %s19, 1
      %s535 = scalar_select %p534, %s19, 1
      %s536 = smul.addr %s535, 8
      %s537 = scalar_lea.vmem %s8, %s536
      // Predicated region
      $region53: #{resnet1d_encoder_forward.10} parent=51 // pred_check
        %p538 = pneg %p210
      $region54: #{resnet1d_encoder_forward.10} parent=51 // pred_check_branch
        %540 = sbr.rel (%p538) target = $region56
      $region55: #{resnet1d_encoder_forward.10} parent=51 // pred_region
        _
      $region56: #{resnet1d_encoder_forward.10} parent=51 // pred_fallthru
        _
    $region52: #{resnet1d_encoder_forward.10} parent=5 // pred_fallthru
      _
    %p541 = scmp.le.s32.totalorder 2, %s14
    // Predicated region
    $region57: #{resnet1d_encoder_forward.10} parent=5 // pred_check
      %p542 = pneg %p541
    $region58: #{resnet1d_encoder_forward.10} parent=5 // pred_check_branch
      %544 = sbr.rel (%p542) target = $region60
    $region59: #{resnet1d_encoder_forward.10} parent=5 // pred_region
      %s545 = ssub.s32 %s14, 2
      // Predicated region
      $region61: #{resnet1d_encoder_forward.10} parent=59 // pred_check
        %p546 = pneg %p216
      $region62: #{resnet1d_encoder_forward.10} parent=59 // pred_check_branch
        %548 = sbr.rel (%p546) target = $region64
      $region63: #{resnet1d_encoder_forward.10} parent=59 // pred_region
        %p549 = scmp.lt.s32.totalorder %s20, 1
        %s550 = scalar_select %p549, %s20, 1
        %s551 = smul.addr %s550, 8
        %s552 = scalar_lea.vmem %s8, %s551
      $region64: #{resnet1d_encoder_forward.10} parent=59 // pred_fallthru
        _
    $region60: #{resnet1d_encoder_forward.10} parent=5 // pred_fallthru
      _
  $region6: #{resnet1d_encoder_forward.10} parent=0 // loop_footer
    %s18 = sadd.s32 1, %s14
  $region7: #{resnet1d_encoder_forward.10} parent=0 // loop_footer_branch
    %13 = sbr.rel target = $region3
  $region8: #{resnet1d_encoder_forward.10} parent=0 // loop_exit
    _

// kernel: resnet1d_encoder_forward.13
$region0: #{resnet1d_encoder_forward.13}
  #allocation0 [shape = 'u32[]', space=smem, size = 0x4, offset = 0x4, fixed_abs, tag = 'smem constant byte address 0x4 - core index']
  #allocation1 [shape = 'u32[144,128]{1,0:T(1,128)}', space=vmem, size = 0x12000, scoped, tag = 'internal scratch']
  %s0 = inlined_call_operand.vmem [shape: f32[2,16,4], index: 0, kind: input, shape index: {}]
  %s1 = inlined_call_operand.vmem [shape: f32[16,1], index: 1, kind: input, shape index: {}]
  %s2 = inlined_call_operand.vmem [shape: f32[16,1], index: 2, kind: input, shape index: {}]
  %s3 = inlined_call_operand.hbm [shape: f32[2,16], index: 3, kind: output, shape index: {}]
  %s4 = sld [smem:[#allocation0]]
  $region22: #{resnet1d_encoder_forward.13} parent=0
    _
  %s6 = ssub.s32 1, %s4
  %s7 = scalar_select 0, %s6, %s4
  $region1: #{resnet1d_encoder_forward.13} parent=0
    #allocation2 [shape = 'u8[1024]{0}', space=vmem, size = 0x400, scoped, tag = 'output window, operand 0, single buffered']
    #allocation3 [shape = 's32[1]{0}', space=sflag, size = 0x4, scoped, tag = 'scoped memory for resnet1d_encoder_forward.13']
    %8 = vsyncpa [#allocation3], 0
    // Predicated region
    $region2: #{resnet1d_encoder_forward.13} parent=1 // pred_check
      _
    $region3: #{resnet1d_encoder_forward.13} parent=1 // pred_check_branch
      %10 = sbr.rel (0) target = $region5
    $region4: #{resnet1d_encoder_forward.13} parent=1 // pred_region
      _
    $region5: #{resnet1d_encoder_forward.13} parent=1 // pred_fallthru
      _
    // Predicated region
    $region6: #{resnet1d_encoder_forward.13} parent=1 // pred_check
      _
    $region7: #{resnet1d_encoder_forward.13} parent=1 // pred_check_branch
      %12 = sbr.rel (0) target = $region9
    $region8: #{resnet1d_encoder_forward.13} parent=1 // pred_region
      _
    $region9: #{resnet1d_encoder_forward.13} parent=1 // pred_fallthru
      _
    // Predicated region
    $region10: #{resnet1d_encoder_forward.13} parent=1 // pred_check
      _
    $region11: #{resnet1d_encoder_forward.13} parent=1 // pred_check_branch
      %14 = sbr.rel (0) target = $region13
    $region12: #{resnet1d_encoder_forward.13} parent=1 // pred_region
      _
    $region13: #{resnet1d_encoder_forward.13} parent=1 // pred_fallthru
      _
    %v15 = vld [vmem:[%s0] sm:$0xff]
    %v16 = vld [vmem:[%s0 + $0x8] sm:$0xff]
    %v17 = vld [vmem:[%s0 + $0x10] sm:$0xff]
    %v18 = vld [vmem:[%s0 + $0x18] sm:$0xff]
    %v19 = vld [vmem:[%s1] sm:$0xff]
    %v20 = vld [vmem:[%s1 + $0x8] sm:$0xff]
    %22 = vset.pattern.permute.xlu0 0
    %23 = vperm.xlu0 %22, %v19
    %v24 = vpop.permute.xlu0 %23
    %27 = vset.pattern.permute.xlu0 0
    %28 = vperm.xlu0 %27, %v20
    %v29 = vpop.permute.xlu0 %28
    %v31 = vmul.f32 %v15, %v24
    %v32 = vmul.f32 %v16, %v29
    %v33 = vmul.f32 %v17, %v24
    %v34 = vmul.f32 %v18, %v29
    %v35 = vld [vmem:[%s2] sm:$0xff]
    %v36 = vld [vmem:[%s2 + $0x8] sm:$0xff]
    %38 = vset.pattern.permute.xlu0 0
    %39 = vperm.xlu0 %38, %v35
    %v40 = vpop.permute.xlu0 %39
    %43 = vset.pattern.permute.xlu0 0
    %44 = vperm.xlu0 %43, %v36
    %v45 = vpop.permute.xlu0 %44
    %v47 = vadd.f32 %v31, %v40
    %v48 = vadd.f32 %v32, %v45
    %v49 = vadd.f32 %v33, %v40
    %v50 = vadd.f32 %v34, %v45
    %v51 = vmax.f32 %v47, 0.0
    %v52 = vmax.f32 %v48, 0.0
    %v53 = vmax.f32 %v49, 0.0
    %v54 = vmax.f32 %v50, 0.0
    %vm55 = vcmask 31744
    %v56 = vsel %vm55, %v51, 0.0
    %57 = vadd.xlane.f32.xlu0 %v56
    %v58 = vpop.xlane.xlu0 %57
    %v59 = vsel %vm55, %v52, 0.0
    %60 = vadd.xlane.f32.xlu0 %v59
    %v61 = vpop.xlane.xlu0 %60
    %v62 = vsel %vm55, %v53, 0.0
    %63 = vadd.xlane.f32.xlu0 %v62
    %v64 = vpop.xlane.xlu0 %63
    %v65 = vsel %vm55, %v54, 0.0
    %66 = vadd.xlane.f32.xlu0 %v65
    %v67 = vpop.xlane.xlu0 %66
    %v68 = vrcp.pop 4.0
    %v69 = vmul.f32 %v58, %v68
    %v70 = vmul.f32 %v61, %v68
    %v71 = vmul.f32 %v64, %v68
    %v72 = vmul.f32 %v67, %v68
    %v77 = vlaneseq
    %v78 = vand.u32 %v77, 127
    %v79 = vlaneseq
    %v80 = vshrl.u32 %v79, 7
    %v81 = vsub.s32 %v78, %v80
    %v82 = vrot.slane %v69, %v81
    %v83 = vadd.s32 %v78, 4294967288
    %v84 = vlaneseq
    %v85 = vshrl.u32 %v84, 7
    %v86 = vsub.s32 %v83, %v85
    %v87 = vrot.slane %v70, %v86
    %vm88 = vcmask 130112
    %v89 = vsel %vm88, %v87, %v82
    %v90 = vlaneseq
    %v91 = vshrl.u32 %v90, 7
    %v92 = vsub.s32 %v78, %v91
    %v93 = vrot.slane %v71, %v92
    %v94 = vlaneseq
    %v95 = vshrl.u32 %v94, 7
    %v96 = vsub.s32 %v83, %v95
    %v97 = vrot.slane %v72, %v96
    %v98 = vsel %vm88, %v97, %v93
    %vm99 = vcmask 1041409
    %v100 = vsel %vm99, %v98, %v89
    %vm102 = vcmask 123904
    %103 = vst.msk [vmem:[#allocation2] sm:$0x3] %vm102, %v100
    // Predicated region
    $region14: #{resnet1d_encoder_forward.13} parent=1 // pred_check
      _
    $region15: #{resnet1d_encoder_forward.13} parent=1 // pred_check_branch
      %105 = sbr.rel (0) target = $region17
    $region16: #{resnet1d_encoder_forward.13} parent=1 // pred_region
      %s107 = ssub.s32 32, 32
      %108 = vsyncadd [#allocation3], %s107
      %s110 = sshll.u32 [#allocation2], 4
      %s111 = int_to_ptr.vmem [resolvable:$true] %s110
      %113 = dma.vmem_to_hbm [thread:$0]  %s111, 32, %s3, [#allocation3]
    $region17: #{resnet1d_encoder_forward.13} parent=1 // pred_fallthru
      _
    // Predicated region
    $region18: #{resnet1d_encoder_forward.13} parent=1 // pred_check
      _
    $region19: #{resnet1d_encoder_forward.13} parent=1 // pred_check_branch
      %115 = sbr.rel (0) target = $region21
    $region20: #{resnet1d_encoder_forward.13} parent=1 // pred_region
      %116 = dma.done [#allocation3], 32
    $region21: #{resnet1d_encoder_forward.13} parent=1 // pred_fallthru
      _
    %117 = vsyncpa [#allocation3], 1

// kernel: resnet1d_encoder_forward.11
$region0: #{resnet1d_encoder_forward.11}
  #allocation0 [shape = 'u32[]', space=smem, size = 0x4, offset = 0x4, fixed_abs, tag = 'smem constant byte address 0x4 - core index']
  #allocation1 [shape = 'u32[144,128]{1,0:T(1,128)}', space=vmem, size = 0x12000, scoped, tag = 'internal scratch']
  #allocation2 [shape = 'f32[24,4]{1,0:T(8,128)}', space=vmem, size = 0x3000, scoped, tag = 'scratch operand']
  #allocation3 [shape = 'f32[8,6]{1,0:T(8,128)}', space=vmem, size = 0x1000, scoped, tag = 'scratch operand']
  #allocation4 [shape = 'f32[24,4]{1,0:T(8,128)}', space=vmem, size = 0x3000, scoped, tag = 'scratch operand']
  %s0 = inlined_call_operand.vmem [shape: f32[2,2,8,5], index: 0, kind: input, shape index: {}]
  %s1 = inlined_call_operand.vmem [shape: f32[8,1], index: 1, kind: input, shape index: {}]
  %s2 = inlined_call_operand.vmem [shape: f32[8,1], index: 2, kind: input, shape index: {}]
  %s3 = inlined_call_operand.vmem [shape: bf16[8,24], index: 3, kind: input, shape index: {}]
  %s4 = inlined_call_operand.vmem [shape: f32[8,1], index: 4, kind: input, shape index: {}]
  %s5 = inlined_call_operand.vmem [shape: f32[8,1], index: 5, kind: input, shape index: {}]
  %s6 = inlined_call_operand.vmem [shape: bf16[8,24], index: 6, kind: input, shape index: {}]
  %s7 = inlined_call_operand.vmem [shape: f32[8,1], index: 7, kind: input, shape index: {}]
  %s8 = inlined_call_operand.vmem [shape: f32[2,2,8,4], index: 8, kind: input, shape index: {}]
  %s9 = inlined_call_operand.vmem [shape: f32[2,8,4], index: 9, kind: output, shape index: {}]
  %s10 = sld [smem:[#allocation0]]
  $region69: #{resnet1d_encoder_forward.11} parent=0
    _
  %s12 = ssub.s32 1, %s10
  %s13 = scalar_select 0, %s12, %s10
  loop: start=0, step=1, limit=4
  $region2: #{resnet1d_encoder_forward.11} parent=0 // loop_pre_header
    _
  $region3: #{resnet1d_encoder_forward.11} parent=0 // loop_header
    %s15 = sphi 0, %s19
    %p16 = scmp.ge.s32.totalorder %s15, 4
    %s25 = sphi 0, %s27
    %s28 = sphi 0, %s25
    %s29 = sphi 0, %s28
    %s45 = sphi 0, %s29
    %s49 = sphi 0, %s49
    %s51 = sphi 0, %s49
    %s52 = sphi 0, %s51
    %s66 = sphi 0, %s52
    %s70 = sphi 0, %s70
    %s72 = sphi 0, %s70
    %s73 = sphi 0, %s72
    %s87 = sphi 0, %s73
    %s91 = sphi 0, %s91
    %s93 = sphi 0, %s91
    %s94 = sphi 0, %s93
    %s108 = sphi 0, %s94
    %s112 = sphi 0, %s112
    %s114 = sphi 0, %s112
    %s115 = sphi 0, %s114
    %s129 = sphi 0, %s115
    %s133 = sphi 0, %s133
    %s135 = sphi 0, %s133
    %s136 = sphi 0, %s135
    %s150 = sphi 0, %s136
    %s154 = sphi 0, %s154
    %s156 = sphi 0, %s154
    %s157 = sphi 0, %s156
    %s171 = sphi 0, %s157
    %s175 = sphi 0, %s175
    %s177 = sphi 0, %s175
    %s178 = sphi 0, %s177
    %s192 = sphi 0, %s178
    %s198 = sphi 0, %s200
    %s201 = sphi 0, %s198
    %s202 = sphi 0, %s201
    %s218 = sphi 0, %s202
    %s224 = sphi 0, %s226
    %s227 = sphi 0, %s224
    %s228 = sphi 0, %s227
    %s244 = sphi 0, %s228
  $region4: #{resnet1d_encoder_forward.11} parent=0 // loop_header_branch
    %18 = sbr.rel (%p16) target = $region8
  $region5: #{resnet1d_encoder_forward.11} parent=0 // loop_body
    %s20 = ssub.s32 %s15, 1
    %s21 = ssub.s32 %s15, 2
    %s22 = sadd.s32 %s15, 1
    %s23 = ssub.s32 %s15, %s22
    %p24 = scmp.eq.s32.totalorder %s23, 0
    %s26 = sadd.s32 %s25, 1
    %s27 = scalar_select %p24, %s25, %s26
    %p30 = pneg %p24
    %p31 = scmp.eq.s32.totalorder %s15, 1
    %p32 = por %p30, %p31
    %p33 = scmp.ne.s32.totalorder %s25, %s28
    %p34 = scmp.eq.s32.totalorder %s15, 0
    %p35 = por %p33, %p34
    %p36 = scmp.ne.s32.totalorder %s25, %s28
    %p37 = scmp.eq.s32.totalorder %s20, 1
    %p38 = por %p36, %p37
    %p39 = scmp.ne.s32.totalorder %s28, %s29
    %p40 = scmp.eq.s32.totalorder %s20, 0
    %p41 = por %p39, %p40
    %p42 = scmp.ne.s32.totalorder %s28, %s29
    %p43 = scmp.eq.s32.totalorder %s21, 1
    %p44 = por %p42, %p43
    %p46 = scmp.ne.s32.totalorder %s29, %s45
    %p47 = scmp.eq.s32.totalorder %s21, 0
    %p48 = por %p46, %p47
    %s50 = sadd.s32 %s49, 1
    %p53 = scmp.eq.s32.totalorder %s15, 1
    %p54 = scmp.ne.s32.totalorder %s49, %s51
    %p55 = scmp.eq.s32.totalorder %s15, 0
    %p56 = por %p54, %p55
    %p57 = scmp.ne.s32.totalorder %s49, %s51
    %p58 = scmp.eq.s32.totalorder %s20, 1
    %p59 = por %p57, %p58
    %p60 = scmp.ne.s32.totalorder %s51, %s52
    %p61 = scmp.eq.s32.totalorder %s20, 0
    %p62 = por %p60, %p61
    %p63 = scmp.ne.s32.totalorder %s51, %s52
    %p64 = scmp.eq.s32.totalorder %s21, 1
    %p65 = por %p63, %p64
    %p67 = scmp.ne.s32.totalorder %s52, %s66
    %p68 = scmp.eq.s32.totalorder %s21, 0
    %p69 = por %p67, %p68
    %s71 = sadd.s32 %s70, 1
    %p74 = scmp.eq.s32.totalorder %s15, 1
    %p75 = scmp.ne.s32.totalorder %s70, %s72
    %p76 = scmp.eq.s32.totalorder %s15, 0
    %p77 = por %p75, %p76
    %p78 = scmp.ne.s32.totalorder %s70, %s72
    %p79 = scmp.eq.s32.totalorder %s20, 1
    %p80 = por %p78, %p79
    %p81 = scmp.ne.s32.totalorder %s72, %s73
    %p82 = scmp.eq.s32.totalorder %s20, 0
    %p83 = por %p81, %p82
    %p84 = scmp.ne.s32.totalorder %s72, %s73
    %p85 = scmp.eq.s32.totalorder %s21, 1
    %p86 = por %p84, %p85
    %p88 = scmp.ne.s32.totalorder %s73, %s87
    %p89 = scmp.eq.s32.totalorder %s21, 0
    %p90 = por %p88, %p89
    %s92 = sadd.s32 %s91, 1
    %p95 = scmp.eq.s32.totalorder %s15, 1
    %p96 = scmp.ne.s32.totalorder %s91, %s93
    %p97 = scmp.eq.s32.totalorder %s15, 0
    %p98 = por %p96, %p97
    %p99 = scmp.ne.s32.totalorder %s91, %s93
    %p100 = scmp.eq.s32.totalorder %s20, 1
    %p101 = por %p99, %p100
    %p102 = scmp.ne.s32.totalorder %s93, %s94
    %p103 = scmp.eq.s32.totalorder %s20, 0
    %p104 = por %p102, %p103
    %p105 = scmp.ne.s32.totalorder %s93, %s94
    %p106 = scmp.eq.s32.totalorder %s21, 1
    %p107 = por %p105, %p106
    %p109 = scmp.ne.s32.totalorder %s94, %s108
    %p110 = scmp.eq.s32.totalorder %s21, 0
    %p111 = por %p109, %p110
    %s113 = sadd.s32 %s112, 1
    %p116 = scmp.eq.s32.totalorder %s15, 1
    %p117 = scmp.ne.s32.totalorder %s112, %s114
    %p118 = scmp.eq.s32.totalorder %s15, 0
    %p119 = por %p117, %p118
    %p120 = scmp.ne.s32.totalorder %s112, %s114
    %p121 = scmp.eq.s32.totalorder %s20, 1
    %p122 = por %p120, %p121
    %p123 = scmp.ne.s32.totalorder %s114, %s115
    %p124 = scmp.eq.s32.totalorder %s20, 0
    %p125 = por %p123, %p124
    %p126 = scmp.ne.s32.totalorder %s114, %s115
    %p127 = scmp.eq.s32.totalorder %s21, 1
    %p128 = por %p126, %p127
    %p130 = scmp.ne.s32.totalorder %s115, %s129
    %p131 = scmp.eq.s32.totalorder %s21, 0
    %p132 = por %p130, %p131
    %s134 = sadd.s32 %s133, 1
    %p137 = scmp.eq.s32.totalorder %s15, 1
    %p138 = scmp.ne.s32.totalorder %s133, %s135
    %p139 = scmp.eq.s32.totalorder %s15, 0
    %p140 = por %p138, %p139
    %p141 = scmp.ne.s32.totalorder %s133, %s135
    %p142 = scmp.eq.s32.totalorder %s20, 1
    %p143 = por %p141, %p142
    %p144 = scmp.ne.s32.totalorder %s135, %s136
    %p145 = scmp.eq.s32.totalorder %s20, 0
    %p146 = por %p144, %p145
    %p147 = scmp.ne.s32.totalorder %s135, %s136
    %p148 = scmp.eq.s32.totalorder %s21, 1
    %p149 = por %p147, %p148
    %p151 = scmp.ne.s32.totalorder %s136, %s150
    %p152 = scmp.eq.s32.totalorder %s21, 0
    %p153 = por %p151, %p152
    %s155 = sadd.s32 %s154, 1
    %p158 = scmp.eq.s32.totalorder %s15, 1
    %p159 = scmp.ne.s32.totalorder %s154, %s156
    %p160 = scmp.eq.s32.totalorder %s15, 0
    %p161 = por %p159, %p160
    %p162 = scmp.ne.s32.totalorder %s154, %s156
    %p163 = scmp.eq.s32.totalorder %s20, 1
    %p164 = por %p162, %p163
    %p165 = scmp.ne.s32.totalorder %s156, %s157
    %p166 = scmp.eq.s32.totalorder %s20, 0
    %p167 = por %p165, %p166
    %p168 = scmp.ne.s32.totalorder %s156, %s157
    %p169 = scmp.eq.s32.totalorder %s21, 1
    %p170 = por %p168, %p169
    %p172 = scmp.ne.s32.totalorder %s157, %s171
    %p173 = scmp.eq.s32.totalorder %s21, 0
    %p174 = por %p172, %p173
    %s176 = sadd.s32 %s175, 1
    %p179 = scmp.eq.s32.totalorder %s15, 1
    %p180 = scmp.ne.s32.totalorder %s175, %s177
    %p181 = scmp.eq.s32.totalorder %s15, 0
    %p182 = por %p180, %p181
    %p183 = scmp.ne.s32.totalorder %s175, %s177
    %p184 = scmp.eq.s32.totalorder %s20, 1
    %p185 = por %p183, %p184
    %p186 = scmp.ne.s32.totalorder %s177, %s178
    %p187 = scmp.eq.s32.totalorder %s20, 0
    %p188 = por %p186, %p187
    %p189 = scmp.ne.s32.totalorder %s177, %s178
    %p190 = scmp.eq.s32.totalorder %s21, 1
    %p191 = por %p189, %p190
    %p193 = scmp.ne.s32.totalorder %s178, %s192
    %p194 = scmp.eq.s32.totalorder %s21, 0
    %p195 = por %p193, %p194
    %s196 = ssub.s32 %s15, %s22
    %p197 = scmp.eq.s32.totalorder %s196, 0
    %s199 = sadd.s32 %s198, 1
    %s200 = scalar_select %p197, %s198, %s199
    %p203 = pneg %p197
    %p204 = scmp.eq.s32.totalorder %s15, 1
    %p205 = por %p203, %p204
    %p206 = scmp.ne.s32.totalorder %s198, %s201
    %p207 = scmp.eq.s32.totalorder %s15, 0
    %p208 = por %p206, %p207
    %p209 = scmp.ne.s32.totalorder %s198, %s201
    %p210 = scmp.eq.s32.totalorder %s20, 1
    %p211 = por %p209, %p210
    %p212 = scmp.ne.s32.totalorder %s201, %s202
    %p213 = scmp.eq.s32.totalorder %s20, 0
    %p214 = por %p212, %p213
    %p215 = scmp.ne.s32.totalorder %s201, %s202
    %p216 = scmp.eq.s32.totalorder %s21, 1
    %p217 = por %p215, %p216
    %p219 = scmp.ne.s32.totalorder %s202, %s218
    %p220 = scmp.eq.s32.totalorder %s21, 0
    %p221 = por %p219, %p220
    %s222 = ssub.s32 %s15, %s22
    %p223 = scmp.eq.s32.totalorder %s222, 0
    %s225 = sadd.s32 %s224, 1
    %s226 = scalar_select %p223, %s224, %s225
    %p229 = pneg %p223
    %p230 = scmp.eq.s32.totalorder %s15, 1
    %p231 = por %p229, %p230
    %p232 = scmp.ne.s32.totalorder %s224, %s227
    %p233 = scmp.eq.s32.totalorder %s15, 0
    %p234 = por %p232, %p233
    %p235 = scmp.ne.s32.totalorder %s224, %s227
    %p236 = scmp.eq.s32.totalorder %s20, 1
    %p237 = por %p235, %p236
    %p238 = scmp.ne.s32.totalorder %s227, %s228
    %p239 = scmp.eq.s32.totalorder %s20, 0
    %p240 = por %p238, %p239
    %p241 = scmp.ne.s32.totalorder %s227, %s228
    %p242 = scmp.eq.s32.totalorder %s21, 1
    %p243 = por %p241, %p242
    %p245 = scmp.ne.s32.totalorder %s228, %s244
    %p246 = scmp.eq.s32.totalorder %s21, 0
    %p247 = por %p245, %p246
    %p248 = scmp.le.s32.totalorder 1, %s15
    %p249 = scmp.lt.s32.totalorder %s15, 3
    %p250 = pnand %p248, %p249
    %p251 = pneg %p250
    // Predicated region
    $region9: #{resnet1d_encoder_forward.11} parent=5 // pred_check
      _
    $region10: #{resnet1d_encoder_forward.11} parent=5 // pred_check_branch
      %253 = sbr.rel (%p250) target = $region12
    $region11: #{resnet1d_encoder_forward.11} parent=5 // pred_region
      %s254 = ssub.s32 %s15, 1
      // Predicated region
      $region13: #{resnet1d_encoder_forward.11} parent=11 // pred_check
        %p255 = pneg %p62
      $region14: #{resnet1d_encoder_forward.11} parent=11 // pred_check_branch
        %257 = sbr.rel (%p255) target = $region16
      $region15: #{resnet1d_encoder_forward.11} parent=11 // pred_region
        _
      $region16: #{resnet1d_encoder_forward.11} parent=11 // pred_fallthru
        _
      // Predicated region
      $region17: #{resnet1d_encoder_forward.11} parent=11 // pred_check
        %p258 = pneg %p83
      $region18: #{resnet1d_encoder_forward.11} parent=11 // pred_check_branch
        %260 = sbr.rel (%p258) target = $region20
      $region19: #{resnet1d_encoder_forward.11} parent=11 // pred_region
        _
      $region20: #{resnet1d_encoder_forward.11} parent=11 // pred_fallthru
        _
      // Predicated region
      $region21: #{resnet1d_encoder_forward.11} parent=11 // pred_check
        %p261 = pneg %p104
      $region22: #{resnet1d_encoder_forward.11} parent=11 // pred_check_branch
        %263 = sbr.rel (%p261) target = $region24
      $region23: #{resnet1d_encoder_forward.11} parent=11 // pred_region
        _
      $region24: #{resnet1d_encoder_forward.11} parent=11 // pred_fallthru
        _
      // Predicated region
      $region25: #{resnet1d_encoder_forward.11} parent=11 // pred_check
        %p264 = pneg %p125
      $region26: #{resnet1d_encoder_forward.11} parent=11 // pred_check_branch
        %266 = sbr.rel (%p264) target = $region28
      $region27: #{resnet1d_encoder_forward.11} parent=11 // pred_region
        _
      $region28: #{resnet1d_encoder_forward.11} parent=11 // pred_fallthru
        _
      // Predicated region
      $region29: #{resnet1d_encoder_forward.11} parent=11 // pred_check
        %p267 = pneg %p146
      $region30: #{resnet1d_encoder_forward.11} parent=11 // pred_check_branch
        %269 = sbr.rel (%p267) target = $region32
      $region31: #{resnet1d_encoder_forward.11} parent=11 // pred_region
        _
      $region32: #{resnet1d_encoder_forward.11} parent=11 // pred_fallthru
        _
      // Predicated region
      $region33: #{resnet1d_encoder_forward.11} parent=11 // pred_check
        %p270 = pneg %p167
      $region34: #{resnet1d_encoder_forward.11} parent=11 // pred_check_branch
        %272 = sbr.rel (%p270) target = $region36
      $region35: #{resnet1d_encoder_forward.11} parent=11 // pred_region
        _
      $region36: #{resnet1d_encoder_forward.11} parent=11 // pred_fallthru
        _
      // Predicated region
      $region37: #{resnet1d_encoder_forward.11} parent=11 // pred_check
        %p273 = pneg %p188
      $region38: #{resnet1d_encoder_forward.11} parent=11 // pred_check_branch
        %275 = sbr.rel (%p273) target = $region40
      $region39: #{resnet1d_encoder_forward.11} parent=11 // pred_region
        _
      $region40: #{resnet1d_encoder_forward.11} parent=11 // pred_fallthru
        _
    $region12: #{resnet1d_encoder_forward.11} parent=5 // pred_fallthru
      _
    %p276 = scmp.lt.s32.totalorder %s15, 2
    // Predicated region
    $region41: #{resnet1d_encoder_forward.11} parent=5 // pred_check
      %p277 = pneg %p276
    $region42: #{resnet1d_encoder_forward.11} parent=5 // pred_check_branch
      %279 = sbr.rel (%p277) target = $region44
    $region43: #{resnet1d_encoder_forward.11} parent=5 // pred_region
      // Predicated region
      $region45: #{resnet1d_encoder_forward.11} parent=43 // pred_check
        %p280 = pneg %p35
      $region46: #{resnet1d_encoder_forward.11} parent=43 // pred_check_branch
        %282 = sbr.rel (%p280) target = $region48
      $region47: #{resnet1d_encoder_forward.11} parent=43 // pred_region
        %p283 = scmp.lt.s32.totalorder %s15, 1
        %s284 = scalar_select %p283, %s15, 1
        %s285 = smul.addr %s284, 2
        %s286 = smul.addr %s285, 8
        %s287 = scalar_lea.vmem %s0, %s286
      $region48: #{resnet1d_encoder_forward.11} parent=43 // pred_fallthru
        _
      // Predicated region
      $region49: #{resnet1d_encoder_forward.11} parent=43 // pred_check
        %p288 = pneg %p208
      $region50: #{resnet1d_encoder_forward.11} parent=43 // pred_check_branch
        %290 = sbr.rel (%p288) target = $region52
      $region51: #{resnet1d_encoder_forward.11} parent=43 // pred_region
        %p291 = scmp.lt.s32.totalorder %s15, 1
        %s292 = scalar_select %p291, %s15, 1
        %s293 = smul.addr %s292, 2
        %s294 = smul.addr %s293, 8
        %s295 = scalar_lea.vmem %s8, %s294
      $region52: #{resnet1d_encoder_forward.11} parent=43 // pred_fallthru
        _
    $region44: #{resnet1d_encoder_forward.11} parent=5 // pred_fallthru
      _
    %p296 = scmp.le.s32.totalorder 1, %s15
    %p297 = scmp.lt.s32.totalorder %s15, 3
    %p298 = pnand %p296, %p297
    %p299 = pneg %p298
    // Predicated region
    $region53: #{resnet1d_encoder_forward.11} parent=5 // pred_check
      _
    $region54: #{resnet1d_encoder_forward.11} parent=5 // pred_check_branch
      %301 = sbr.rel (%p298) target = $region56
    $region55: #{resnet1d_encoder_forward.11} parent=5 // pred_region
      %s302 = ssub.s32 %s15, 1
      %p303 = scmp.lt.s32.totalorder %s20, 1
      %s304 = scalar_select %p303, %s20, 1
      %s305 = smul.addr %s304, 2
      %s306 = smul.addr %s305, 8
      %s307 = scalar_lea.vmem %s0, %s306
      %p308 = pneg %p41
      %p309 = pneg %p38
      %p310 = pneg %p62
      %p311 = pneg %p59
      %p312 = pneg %p83
      %p313 = pneg %p80
      %p314 = pneg %p104
      %p315 = pneg %p101
      %p316 = pneg %p125
      %p317 = pneg %p122
      %p318 = pneg %p146
      %p319 = pneg %p143
      %p320 = pneg %p167
      %p321 = pneg %p164
      %p322 = pneg %p188
      %p323 = pneg %p185
      %p324 = scmp.lt.s32.totalorder %s20, 1
      %s325 = scalar_select %p324, %s20, 1
      %s326 = smul.addr %s325, 2
      %s327 = smul.addr %s326, 8
      %s328 = scalar_lea.vmem %s8, %s327
      %p329 = pneg %p214
      %p330 = pneg %p211
      %p331 = pneg %p240
      %p332 = pneg %p237
      %p333 = scmp.lt.s32.totalorder %s20, 1
      %s334 = scalar_select %p333, %s20, 1
      %s335 = smul.addr %s334, 8
      %s336 = scalar_lea.vmem %s9, %s335
      %p337 = scmp.lt.s32.totalorder %s20, 1
      %s338 = scalar_select %p337, %s20, 1
      %s339 = smul.addr %s338, 2
      %s340 = smul.addr %s339, 8
      %s341 = scalar_lea.vmem %s0, %s340
      %p342 = scmp.lt.s32.totalorder %s20, 1
      %s343 = scalar_select %p342, %s20, 1
      %s344 = smul.addr %s343, 2
      %s345 = smul.addr %s344, 8
      %s346 = scalar_lea.vmem %s8, %s345
      %p347 = scmp.lt.s32.totalorder %s20, 1
      %s348 = scalar_select %p347, %s20, 1
      %s349 = smul.addr %s348, 8
      %s350 = scalar_lea.vmem %s9, %s349
      %v352 = vld [vmem:[%s341] sm:$0xff]
      %v353 = vld [vmem:[%s1] sm:$0xff]
      %355 = vset.pattern.permute.xlu0 0
      %356 = vperm.xlu0 %355, %v353
      %v357 = vpop.permute.xlu0 %356
      %v359 = vmul.f32 %v352, %v357
      %v360 = vld [vmem:[%s2] sm:$0xff]
      %362 = vset.pattern.permute.xlu0 0
      %363 = vperm.xlu0 %362, %v360
      %v364 = vpop.permute.xlu0 %363
      %v366 = vadd.f32 %v359, %v364
      %v367 = vmax.f32 %v366, 0.0
      %v368 = vlaneseq
      %v369 = vand.u32 %v368, 127
      %v370 = vmul.u32 %v369, 2
      %vm371 = vcmp.ge.s32.totalorder %v370, 0
      %vm372 = vcmp.lt.s32.totalorder %v370, 8
      %vm373 = vmand %vm371, %vm372
      %v374 = vsel %vm373, %v367, 0.0
      %vm375 = vcmask 31744
      %376 = vst.msk [vmem:[#allocation2] sm:$0xff] %vm375, %v374
      %s377 = scalar_lea.vmem %s341, 8
      %v378 = vld [vmem:[%s377] sm:$0xff]
      %v379 = vld [vmem:[%s1] sm:$0xff]
      %381 = vset.pattern.permute.xlu0 0
      %382 = vperm.xlu0 %381, %v379
      %v383 = vpop.permute.xlu0 %382
      %v385 = vmul.f32 %v378, %v383
      %v386 = vld [vmem:[%s2] sm:$0xff]
      %388 = vset.pattern.permute.xlu0 0
      %389 = vperm.xlu0 %388, %v386
      %v390 = vpop.permute.xlu0 %389
      %v392 = vadd.f32 %v385, %v390
      %v393 = vmax.f32 %v392, 0.0
      %v394 = vadd.s32 %v370, 1
      %vm395 = vcmp.ge.s32.totalorder %v394, 0
      %vm396 = vcmp.lt.s32.totalorder %v394, 8
      %vm397 = vmand %vm395, %vm396
      %v398 = vsel %vm397, %v393, 0.0
      %399 = vst.msk [vmem:[#allocation2 + $0x8] sm:$0xff] %vm375, %v398
      %v400 = vld [vmem:[%s341] sm:$0xff]
      %v401 = vld [vmem:[%s1] sm:$0xff]
      %403 = vset.pattern.permute.xlu0 0
      %404 = vperm.xlu0 %403, %v401
      %v405 = vpop.permute.xlu0 %404
      %v407 = vmul.f32 %v400, %v405
      %v408 = vld [vmem:[%s2] sm:$0xff]
      %410 = vset.pattern.permute.xlu0 0
      %411 = vperm.xlu0 %410, %v408
      %v412 = vpop.permute.xlu0 %411
      %v414 = vadd.f32 %v407, %v412
      %v415 = vmax.f32 %v414, 0.0
      %v416 = vadd.s32 %v370, 2
      %vm417 = vcmp.ge.s32.totalorder %v416, 0
      %vm418 = vcmp.lt.s32.totalorder %v416, 8
      %vm419 = vmand %vm417, %vm418
      %421 = vrot.lane.b32.xlu0 %v415, 127
      %v422 = vpop.permute.xlu0 %421
      %v424 = vsel %vm419, %v422, 0.0
      %425 = vst.msk [vmem:[#allocation2 + $0x10] sm:$0xff] %vm375, %v424
      %v426 = vld [vmem:[%s3] sm:$0xf]
      %v427 = vld [vmem:[#allocation2] sm:$0xff]
      %v428 = vld [vmem:[#allocation2 + $0x8] sm:$0xff]
      %v429 = vld [vmem:[#allocation2 + $0x10] sm:$0xff]
      %v430 = vpack.c.bf16 %v428, %v427
      %v431 = vpack.c.bf16 %v429, %v429
      %vm432 = vcmask 195584
      %v434 = vsel %vm432, %v426, 0
      %vm436 = vcmask 1043456
      %v438 = vsel %vm436, %v431, 0
      %440 = vmatprep.subr.bf16.mxu0 0
      %441 = vmatpush1.bf16.msra.mxu0 %v430
      %442 = vmatprep.subr.bf16.mxu0 0
      %443 = vmatpush1.bf16.msra.mxu0 %v438
      %444 = vmatprep.subr.bf16.mxu0 0
      %445 = vmatpush1.bf16.msra.mxu0 0
      %446 = vmatprep.subr.bf16.mxu0 0
      %447 = vmatpush1.bf16.msra.mxu0 0
      %448 = vmatprep.subr.bf16.mxu0 0
      %449 = vmatpush1.bf16.msra.mxu0 0
      %450 = vmatprep.subr.bf16.mxu0 0
      %451 = vmatpush1.bf16.msra.mxu0 0
      %452 = vmatprep.subr.bf16.mxu0 0
      %453 = vmatpush1.bf16.msra.mxu0 0
      %454 = vmatprep.subr.bf16.mxu0 0
      %455 = vmatpush1.bf16.msra.mxu0 0
      %456 = vmatprep.subr.bf16.mxu0 0
      %457 = vmatpush1.bf16.msra.mxu0 0
      %458 = vmatprep.subr.bf16.mxu0 0
      %459 = vmatpush1.bf16.msra.mxu0 0
      %460 = vmatprep.subr.bf16.mxu0 0
      %461 = vmatpush1.bf16.msra.mxu0 0
      %462 = vmatprep.subr.bf16.mxu0 0
      %463 = vmatpush1.bf16.msra.mxu0 0
      %464 = vmatprep.subr.bf16.mxu0 0
      %465 = vmatpush1.bf16.msra.mxu0 0
      %466 = vmatprep.subr.bf16.mxu0 0
      %467 = vmatpush1.bf16.msra.mxu0 0
      %468 = vmatprep.subr.bf16.mxu0 0
      %469 = vmatpush1.bf16.msra.mxu0 0
      %470 = vmatprep.subr.bf16.mxu0 0
      %471 = vmatpush1.bf16.msra.mxu0 0
      %472 = vmatprep.mubr.bf16.mxu0 0
      %473 = vmatmul.mubr.bf16.gmra.mrb[0].mxu0 %v434
      %v474 = vpop.f32.mrb[0].mxu0
      %v475 = vadd.f32 0.0, %v474
      %v476 = vpop.f32.mrb[0].mxu0
      %v477 = vpop.f32.mrb[0].mxu0
      %v478 = vpop.f32.mrb[0].mxu0
      %479 = vdwg.mxu0
      %v480 = vld [vmem:[%s4] sm:$0xff]
      %482 = vset.pattern.permute.xlu0 0
      %483 = vperm.xlu0 %482, %v480
      %v484 = vpop.permute.xlu0 %483
      %v486 = vmul.f32 %v475, %v484
      %v487 = vld [vmem:[%s5] sm:$0xff]
      %489 = vset.pattern.permute.xlu0 0
      %490 = vperm.xlu0 %489, %v487
      %v491 = vpop.permute.xlu0 %490
      %v493 = vadd.f32 %v486, %v491
      %v494 = vmax.f32 %v493, 0.0
      %vm495 = vcmask 48128
      %496 = vst.msk [vmem:[#allocation3] sm:$0xff] %vm495, 0.0
      %498 = vrot.lane.b32.xlu0 %v494, 1
      %v499 = vpop.permute.xlu0 %498
      %vm501 = vcmask 39944
      %502 = vst.msk [vmem:[#allocation3] sm:$0xff] %vm501, %v499
      %v503 = vld [vmem:[#allocation3] sm:$0xff]
      %504 = vst.msk [vmem:[#allocation4] sm:$0xff] %vm375, %v503
      %v505 = vld [vmem:[#allocation3] sm:$0xff]
      %507 = vrot.lane.b32.xlu0 %v505, 127
      %v508 = vpop.permute.xlu0 %507
      %510 = vst.msk [vmem:[#allocation4 + $0x8] sm:$0xff] %vm375, %v508
      %v511 = vld [vmem:[#allocation3] sm:$0xff]
      %513 = vrot.lane.b32.xlu0 %v511, 126
      %v514 = vpop.permute.xlu0 %513
      %516 = vst.msk [vmem:[#allocation4 + $0x10] sm:$0xff] %vm375, %v514
      %v517 = vld [vmem:[%s6] sm:$0xf]
      %v518 = vld [vmem:[#allocation4] sm:$0xff]
      %v519 = vld [vmem:[#allocation4 + $0x8] sm:$0xff]
      %v520 = vld [vmem:[#allocation4 + $0x10] sm:$0xff]
      %v521 = vpack.c.bf16 %v519, %v518
      %v522 = vpack.c.bf16 %v520, %v520
      %v523 = vld [vmem:[%s7] sm:$0xff]
      %525 = vset.pattern.permute.xlu0 0
      %526 = vperm.xlu0 %525, %v523
      %v527 = vpop.permute.xlu0 %526
      %v530 = vsel %vm432, %v517, 0
      %v533 = vsel %vm436, %v522, 0
      %535 = vmatprep.subr.bf16.mxu0 0
      %536 = vmatpush1.bf16.msra.mxu0 %v521
      %537 = vmatprep.subr.bf16.mxu0 0
      %538 = vmatpush1.bf16.msra.mxu0 %v533
      %539 = vmatprep.subr.bf16.mxu0 0
      %540 = vmatpush1.bf16.msra.mxu0 0
      %541 = vmatprep.subr.bf16.mxu0 0
      %542 = vmatpush1.bf16.msra.mxu0 0
      %543 = vmatprep.subr.bf16.mxu0 0
      %544 = vmatpush1.bf16.msra.mxu0 0
      %545 = vmatprep.subr.bf16.mxu0 0
      %546 = vmatpush1.bf16.msra.mxu0 0
      %547 = vmatprep.subr.bf16.mxu0 0
      %548 = vmatpush1.bf16.msra.mxu0 0
      %549 = vmatprep.subr.bf16.mxu0 0
      %550 = vmatpush1.bf16.msra.mxu0 0
      %551 = vmatprep.subr.bf16.mxu0 0
      %552 = vmatpush1.bf16.msra.mxu0 0
      %553 = vmatprep.subr.bf16.mxu0 0
      %554 = vmatpush1.bf16.msra.mxu0 0
      %555 = vmatprep.subr.bf16.mxu0 0
      %556 = vmatpush1.bf16.msra.mxu0 0
      %557 = vmatprep.subr.bf16.mxu0 0
      %558 = vmatpush1.bf16.msra.mxu0 0
      %559 = vmatprep.subr.bf16.mxu0 0
      %560 = vmatpush1.bf16.msra.mxu0 0
      %561 = vmatprep.subr.bf16.mxu0 0
      %562 = vmatpush1.bf16.msra.mxu0 0
      %563 = vmatprep.subr.bf16.mxu0 0
      %564 = vmatpush1.bf16.msra.mxu0 0
      %565 = vmatprep.subr.bf16.mxu0 0
      %566 = vmatpush1.bf16.msra.mxu0 0
      %567 = vmatprep.mubr.bf16.mxu0 0
      %568 = vmatmul.mubr.bf16.gmra.mrb[0].mxu0 %v530
      %v569 = vpop.f32.mrb[0].mxu0
      %v570 = vadd.f32 %v527, %v569
      %v571 = vpop.f32.mrb[0].mxu0
      %v572 = vpop.f32.mrb[0].mxu0
      %v573 = vpop.f32.mrb[0].mxu0
      %574 = vdwg.mxu0
      %v575 = vld [vmem:[%s346] sm:$0xff]
      %s576 = scalar_lea.vmem %s346, 8
      %v577 = vld [vmem:[%s576] sm:$0xff]
      %v578 = vmax.f32 %v575, %v577
      %v579 = vadd.f32 %v570, %v578
      %580 = vst.msk [vmem:[%s350] sm:$0xff] %vm375, %v579
      %p581 = scmp.lt.s32.totalorder %s20, 1
      %s582 = scalar_select %p581, %s20, 1
      %s583 = smul.addr %s582, 8
      %s584 = scalar_lea.vmem %s9, %s583
      // Predicated region
      $region57: #{resnet1d_encoder_forward.11} parent=55 // pred_check
        %p585 = pneg %p237
      $region58: #{resnet1d_encoder_forward.11} parent=55 // pred_check_branch
        %587 = sbr.rel (%p585) target = $region60
      $region59: #{resnet1d_encoder_forward.11} parent=55 // pred_region
        _
      $region60: #{resnet1d_encoder_forward.11} parent=55 // pred_fallthru
        _
    $region56: #{resnet1d_encoder_forward.11} parent=5 // pred_fallthru
      _
    %p588 = scmp.le.s32.totalorder 2, %s15
    // Predicated region
    $region61: #{resnet1d_encoder_forward.11} parent=5 // pred_check
      %p589 = pneg %p588
    $region62: #{resnet1d_encoder_forward.11} parent=5 // pred_check_branch
      %591 = sbr.rel (%p589) target = $region64
    $region63: #{resnet1d_encoder_forward.11} parent=5 // pred_region
      %s592 = ssub.s32 %s15, 2
      // Predicated region
      $region65: #{resnet1d_encoder_forward.11} parent=63 // pred_check
        %p593 = pneg %p243
      $region66: #{resnet1d_encoder_forward.11} parent=63 // pred_check_branch
        %595 = sbr.rel (%p593) target = $region68
      $region67: #{resnet1d_encoder_forward.11} parent=63 // pred_region
        %p596 = scmp.lt.s32.totalorder %s21, 1
        %s597 = scalar_select %p596, %s21, 1
        %s598 = smul.addr %s597, 8
        %s599 = scalar_lea.vmem %s9, %s598
      $region68: #{resnet1d_encoder_forward.11} parent=63 // pred_fallthru
        _
    $region64: #{resnet1d_encoder_forward.11} parent=5 // pred_fallthru
      _
  $region6: #{resnet1d_encoder_forward.11} parent=0 // loop_footer
    %s19 = sadd.s32 1, %s15
  $region7: #{resnet1d_encoder_forward.11} parent=0 // loop_footer_branch
    %14 = sbr.rel target = $region3
  $region8: #{resnet1d_encoder_forward.11} parent=0 // loop_exit
    _

// kernel: resnet1d_encoder_forward.12
$region0: #{resnet1d_encoder_forward.12}
  #allocation0 [shape = 'u32[]', space=smem, size = 0x4, offset = 0x4, fixed_abs, tag = 'smem constant byte address 0x4 - core index']
  #allocation1 [shape = 'u32[144,128]{1,0:T(1,128)}', space=vmem, size = 0x12000, scoped, tag = 'internal scratch']
  #allocation2 [shape = 'f32[24,4]{1,0:T(8,128)}', space=vmem, size = 0x3000, scoped, tag = 'scratch operand']
  #allocation3 [shape = 'f32[16,6]{1,0:T(8,128)}', space=vmem, size = 0x2000, scoped, tag = 'scratch operand']
  #allocation4 [shape = 'f32[48,4]{1,0:T(8,128)}', space=vmem, size = 0x6000, scoped, tag = 'scratch operand']
  %s0 = inlined_call_operand.vmem [shape: f32[2,1,8,6], index: 0, kind: input, shape index: {}]
  %s1 = inlined_call_operand.vmem [shape: f32[8,1], index: 1, kind: input, shape index: {}]
  %s2 = inlined_call_operand.vmem [shape: f32[8,1], index: 2, kind: input, shape index: {}]
  %s3 = inlined_call_operand.vmem [shape: bf16[16,24], index: 3, kind: input, shape index: {}]
  %s4 = inlined_call_operand.vmem [shape: f32[16,1], index: 4, kind: input, shape index: {}]
  %s5 = inlined_call_operand.vmem [shape: f32[16,1], index: 5, kind: input, shape index: {}]
  %s6 = inlined_call_operand.vmem [shape: bf16[16,48], index: 6, kind: input, shape index: {}]
  %s7 = inlined_call_operand.vmem [shape: f32[16,1], index: 7, kind: input, shape index: {}]
  %s8 = inlined_call_operand.vmem [shape: f32[2,16,4], index: 8, kind: output, shape index: {}]
  %s9 = sld [smem:[#allocation0]]
  $region65: #{resnet1d_encoder_forward.12} parent=0
    _
  %s11 = ssub.s32 1, %s9
  %s12 = scalar_select 0, %s11, %s9
  loop: start=0, step=1, limit=4
  $region2: #{resnet1d_encoder_forward.12} parent=0 // loop_pre_header
    _
  $region3: #{resnet1d_encoder_forward.12} parent=0 // loop_header
    %s14 = sphi 0, %s18
    %p15 = scmp.ge.s32.totalorder %s14, 4
    %s24 = sphi 0, %s26
    %s27 = sphi 0, %s24
    %s28 = sphi 0, %s27
    %s44 = sphi 0, %s28
    %s48 = sphi 0, %s48
    %s50 = sphi 0, %s48
    %s51 = sphi 0, %s50
    %s65 = sphi 0, %s51
    %s69 = sphi 0, %s69
    %s71 = sphi 0, %s69
    %s72 = sphi 0, %s71
    %s86 = sphi 0, %s72
    %s90 = sphi 0, %s90
    %s92 = sphi 0, %s90
    %s93 = sphi 0, %s92
    %s107 = sphi 0, %s93
    %s111 = sphi 0, %s111
    %s113 = sphi 0, %s111
    %s114 = sphi 0, %s113
    %s128 = sphi 0, %s114
    %s132 = sphi 0, %s132
    %s134 = sphi 0, %s132
    %s135 = sphi 0, %s134
    %s149 = sphi 0, %s135
    %s153 = sphi 0, %s153
    %s155 = sphi 0, %s153
    %s156 = sphi 0, %s155
    %s170 = sphi 0, %s156
    %s174 = sphi 0, %s174
    %s176 = sphi 0, %s174
    %s177 = sphi 0, %s176
    %s191 = sphi 0, %s177
    %s197 = sphi 0, %s199
    %s200 = sphi 0, %s197
    %s201 = sphi 0, %s200
    %s217 = sphi 0, %s201
  $region4: #{resnet1d_encoder_forward.12} parent=0 // loop_header_branch
    %17 = sbr.rel (%p15) target = $region8
  $region5: #{resnet1d_encoder_forward.12} parent=0 // loop_body
    %s19 = ssub.s32 %s14, 1
    %s20 = ssub.s32 %s14, 2
    %s21 = sadd.s32 %s14, 1
    %s22 = ssub.s32 %s14, %s21
    %p23 = scmp.eq.s32.totalorder %s22, 0
    %s25 = sadd.s32 %s24, 1
    %s26 = scalar_select %p23, %s24, %s25
    %p29 = pneg %p23
    %p30 = scmp.eq.s32.totalorder %s14, 1
    %p31 = por %p29, %p30
    %p32 = scmp.ne.s32.totalorder %s24, %s27
    %p33 = scmp.eq.s32.totalorder %s14, 0
    %p34 = por %p32, %p33
    %p35 = scmp.ne.s32.totalorder %s24, %s27
    %p36 = scmp.eq.s32.totalorder %s19, 1
    %p37 = por %p35, %p36
    %p38 = scmp.ne.s32.totalorder %s27, %s28
    %p39 = scmp.eq.s32.totalorder %s19, 0
    %p40 = por %p38, %p39
    %p41 = scmp.ne.s32.totalorder %s27, %s28
    %p42 = scmp.eq.s32.totalorder %s20, 1
    %p43 = por %p41, %p42
    %p45 = scmp.ne.s32.totalorder %s28, %s44
    %p46 = scmp.eq.s32.totalorder %s20, 0
    %p47 = por %p45, %p46
    %s49 = sadd.s32 %s48, 1
    %p52 = scmp.eq.s32.totalorder %s14, 1
    %p53 = scmp.ne.s32.totalorder %s48, %s50
    %p54 = scmp.eq.s32.totalorder %s14, 0
    %p55 = por %p53, %p54
    %p56 = scmp.ne.s32.totalorder %s48, %s50
    %p57 = scmp.eq.s32.totalorder %s19, 1
    %p58 = por %p56, %p57
    %p59 = scmp.ne.s32.totalorder %s50, %s51
    %p60 = scmp.eq.s32.totalorder %s19, 0
    %p61 = por %p59, %p60
    %p62 = scmp.ne.s32.totalorder %s50, %s51
    %p63 = scmp.eq.s32.totalorder %s20, 1
    %p64 = por %p62, %p63
    %p66 = scmp.ne.s32.totalorder %s51, %s65
    %p67 = scmp.eq.s32.totalorder %s20, 0
    %p68 = por %p66, %p67
    %s70 = sadd.s32 %s69, 1
    %p73 = scmp.eq.s32.totalorder %s14, 1
    %p74 = scmp.ne.s32.totalorder %s69, %s71
    %p75 = scmp.eq.s32.totalorder %s14, 0
    %p76 = por %p74, %p75
    %p77 = scmp.ne.s32.totalorder %s69, %s71
    %p78 = scmp.eq.s32.totalorder %s19, 1
    %p79 = por %p77, %p78
    %p80 = scmp.ne.s32.totalorder %s71, %s72
    %p81 = scmp.eq.s32.totalorder %s19, 0
    %p82 = por %p80, %p81
    %p83 = scmp.ne.s32.totalorder %s71, %s72
    %p84 = scmp.eq.s32.totalorder %s20, 1
    %p85 = por %p83, %p84
    %p87 = scmp.ne.s32.totalorder %s72, %s86
    %p88 = scmp.eq.s32.totalorder %s20, 0
    %p89 = por %p87, %p88
    %s91 = sadd.s32 %s90, 1
    %p94 = scmp.eq.s32.totalorder %s14, 1
    %p95 = scmp.ne.s32.totalorder %s90, %s92
    %p96 = scmp.eq.s32.totalorder %s14, 0
    %p97 = por %p95, %p96
    %p98 = scmp.ne.s32.totalorder %s90, %s92
    %p99 = scmp.eq.s32.totalorder %s19, 1
    %p100 = por %p98, %p99
    %p101 = scmp.ne.s32.totalorder %s92, %s93
    %p102 = scmp.eq.s32.totalorder %s19, 0
    %p103 = por %p101, %p102
    %p104 = scmp.ne.s32.totalorder %s92, %s93
    %p105 = scmp.eq.s32.totalorder %s20, 1
    %p106 = por %p104, %p105
    %p108 = scmp.ne.s32.totalorder %s93, %s107
    %p109 = scmp.eq.s32.totalorder %s20, 0
    %p110 = por %p108, %p109
    %s112 = sadd.s32 %s111, 1
    %p115 = scmp.eq.s32.totalorder %s14, 1
    %p116 = scmp.ne.s32.totalorder %s111, %s113
    %p117 = scmp.eq.s32.totalorder %s14, 0
    %p118 = por %p116, %p117
    %p119 = scmp.ne.s32.totalorder %s111, %s113
    %p120 = scmp.eq.s32.totalorder %s19, 1
    %p121 = por %p119, %p120
    %p122 = scmp.ne.s32.totalorder %s113, %s114
    %p123 = scmp.eq.s32.totalorder %s19, 0
    %p124 = por %p122, %p123
    %p125 = scmp.ne.s32.totalorder %s113, %s114
    %p126 = scmp.eq.s32.totalorder %s20, 1
    %p127 = por %p125, %p126
    %p129 = scmp.ne.s32.totalorder %s114, %s128
    %p130 = scmp.eq.s32.totalorder %s20, 0
    %p131 = por %p129, %p130
    %s133 = sadd.s32 %s132, 1
    %p136 = scmp.eq.s32.totalorder %s14, 1
    %p137 = scmp.ne.s32.totalorder %s132, %s134
    %p138 = scmp.eq.s32.totalorder %s14, 0
    %p139 = por %p137, %p138
    %p140 = scmp.ne.s32.totalorder %s132, %s134
    %p141 = scmp.eq.s32.totalorder %s19, 1
    %p142 = por %p140, %p141
    %p143 = scmp.ne.s32.totalorder %s134, %s135
    %p144 = scmp.eq.s32.totalorder %s19, 0
    %p145 = por %p143, %p144
    %p146 = scmp.ne.s32.totalorder %s134, %s135
    %p147 = scmp.eq.s32.totalorder %s20, 1
    %p148 = por %p146, %p147
    %p150 = scmp.ne.s32.totalorder %s135, %s149
    %p151 = scmp.eq.s32.totalorder %s20, 0
    %p152 = por %p150, %p151
    %s154 = sadd.s32 %s153, 1
    %p157 = scmp.eq.s32.totalorder %s14, 1
    %p158 = scmp.ne.s32.totalorder %s153, %s155
    %p159 = scmp.eq.s32.totalorder %s14, 0
    %p160 = por %p158, %p159
    %p161 = scmp.ne.s32.totalorder %s153, %s155
    %p162 = scmp.eq.s32.totalorder %s19, 1
    %p163 = por %p161, %p162
    %p164 = scmp.ne.s32.totalorder %s155, %s156
    %p165 = scmp.eq.s32.totalorder %s19, 0
    %p166 = por %p164, %p165
    %p167 = scmp.ne.s32.totalorder %s155, %s156
    %p168 = scmp.eq.s32.totalorder %s20, 1
    %p169 = por %p167, %p168
    %p171 = scmp.ne.s32.totalorder %s156, %s170
    %p172 = scmp.eq.s32.totalorder %s20, 0
    %p173 = por %p171, %p172
    %s175 = sadd.s32 %s174, 1
    %p178 = scmp.eq.s32.totalorder %s14, 1
    %p179 = scmp.ne.s32.totalorder %s174, %s176
    %p180 = scmp.eq.s32.totalorder %s14, 0
    %p181 = por %p179, %p180
    %p182 = scmp.ne.s32.totalorder %s174, %s176
    %p183 = scmp.eq.s32.totalorder %s19, 1
    %p184 = por %p182, %p183
    %p185 = scmp.ne.s32.totalorder %s176, %s177
    %p186 = scmp.eq.s32.totalorder %s19, 0
    %p187 = por %p185, %p186
    %p188 = scmp.ne.s32.totalorder %s176, %s177
    %p189 = scmp.eq.s32.totalorder %s20, 1
    %p190 = por %p188, %p189
    %p192 = scmp.ne.s32.totalorder %s177, %s191
    %p193 = scmp.eq.s32.totalorder %s20, 0
    %p194 = por %p192, %p193
    %s195 = ssub.s32 %s14, %s21
    %p196 = scmp.eq.s32.totalorder %s195, 0
    %s198 = sadd.s32 %s197, 1
    %s199 = scalar_select %p196, %s197, %s198
    %p202 = pneg %p196
    %p203 = scmp.eq.s32.totalorder %s14, 1
    %p204 = por %p202, %p203
    %p205 = scmp.ne.s32.totalorder %s197, %s200
    %p206 = scmp.eq.s32.totalorder %s14, 0
    %p207 = por %p205, %p206
    %p208 = scmp.ne.s32.totalorder %s197, %s200
    %p209 = scmp.eq.s32.totalorder %s19, 1
    %p210 = por %p208, %p209
    %p211 = scmp.ne.s32.totalorder %s200, %s201
    %p212 = scmp.eq.s32.totalorder %s19, 0
    %p213 = por %p211, %p212
    %p214 = scmp.ne.s32.totalorder %s200, %s201
    %p215 = scmp.eq.s32.totalorder %s20, 1
    %p216 = por %p214, %p215
    %p218 = scmp.ne.s32.totalorder %s201, %s217
    %p219 = scmp.eq.s32.totalorder %s20, 0
    %p220 = por %p218, %p219
    %p221 = scmp.le.s32.totalorder 1, %s14
    %p222 = scmp.lt.s32.totalorder %s14, 3
    %p223 = pnand %p221, %p222
    %p224 = pneg %p223
    // Predicated region
    $region9: #{resnet1d_encoder_forward.12} parent=5 // pred_check
      _
    $region10: #{resnet1d_encoder_forward.12} parent=5 // pred_check_branch
      %226 = sbr.rel (%p223) target = $region12
    $region11: #{resnet1d_encoder_forward.12} parent=5 // pred_region
      %s227 = ssub.s32 %s14, 1
      // Predicated region
      $region13: #{resnet1d_encoder_forward.12} parent=11 // pred_check
        %p228 = pneg %p61
      $region14: #{resnet1d_encoder_forward.12} parent=11 // pred_check_branch
        %230 = sbr.rel (%p228) target = $region16
      $region15: #{resnet1d_encoder_forward.12} parent=11 // pred_region
        _
      $region16: #{resnet1d_encoder_forward.12} parent=11 // pred_fallthru
        _
      // Predicated region
      $region17: #{resnet1d_encoder_forward.12} parent=11 // pred_check
        %p231 = pneg %p82
      $region18: #{resnet1d_encoder_forward.12} parent=11 // pred_check_branch
        %233 = sbr.rel (%p231) target = $region20
      $region19: #{resnet1d_encoder_forward.12} parent=11 // pred_region
        _
      $region20: #{resnet1d_encoder_forward.12} parent=11 // pred_fallthru
        _
      // Predicated region
      $region21: #{resnet1d_encoder_forward.12} parent=11 // pred_check
        %p234 = pneg %p103
      $region22: #{resnet1d_encoder_forward.12} parent=11 // pred_check_branch
        %236 = sbr.rel (%p234) target = $region24
      $region23: #{resnet1d_encoder_forward.12} parent=11 // pred_region
        _
      $region24: #{resnet1d_encoder_forward.12} parent=11 // pred_fallthru
        _
      // Predicated region
      $region25: #{resnet1d_encoder_forward.12} parent=11 // pred_check
        %p237 = pneg %p124
      $region26: #{resnet1d_encoder_forward.12} parent=11 // pred_check_branch
        %239 = sbr.rel (%p237) target = $region28
      $region27: #{resnet1d_encoder_forward.12} parent=11 // pred_region
        _
      $region28: #{resnet1d_encoder_forward.12} parent=11 // pred_fallthru
        _
      // Predicated region
      $region29: #{resnet1d_encoder_forward.12} parent=11 // pred_check
        %p240 = pneg %p145
      $region30: #{resnet1d_encoder_forward.12} parent=11 // pred_check_branch
        %242 = sbr.rel (%p240) target = $region32
      $region31: #{resnet1d_encoder_forward.12} parent=11 // pred_region
        _
      $region32: #{resnet1d_encoder_forward.12} parent=11 // pred_fallthru
        _
      // Predicated region
      $region33: #{resnet1d_encoder_forward.12} parent=11 // pred_check
        %p243 = pneg %p166
      $region34: #{resnet1d_encoder_forward.12} parent=11 // pred_check_branch
        %245 = sbr.rel (%p243) target = $region36
      $region35: #{resnet1d_encoder_forward.12} parent=11 // pred_region
        _
      $region36: #{resnet1d_encoder_forward.12} parent=11 // pred_fallthru
        _
      // Predicated region
      $region37: #{resnet1d_encoder_forward.12} parent=11 // pred_check
        %p246 = pneg %p187
      $region38: #{resnet1d_encoder_forward.12} parent=11 // pred_check_branch
        %248 = sbr.rel (%p246) target = $region40
      $region39: #{resnet1d_encoder_forward.12} parent=11 // pred_region
        _
      $region40: #{resnet1d_encoder_forward.12} parent=11 // pred_fallthru
        _
    $region12: #{resnet1d_encoder_forward.12} parent=5 // pred_fallthru
      _
    %p249 = scmp.lt.s32.totalorder %s14, 2
    // Predicated region
    $region41: #{resnet1d_encoder_forward.12} parent=5 // pred_check
      %p250 = pneg %p249
    $region42: #{resnet1d_encoder_forward.12} parent=5 // pred_check_branch
      %252 = sbr.rel (%p250) target = $region44
    $region43: #{resnet1d_encoder_forward.12} parent=5 // pred_region
      // Predicated region
      $region45: #{resnet1d_encoder_forward.12} parent=43 // pred_check
        %p253 = pneg %p34
      $region46: #{resnet1d_encoder_forward.12} parent=43 // pred_check_branch
        %255 = sbr.rel (%p253) target = $region48
      $region47: #{resnet1d_encoder_forward.12} parent=43 // pred_region
        %p256 = scmp.lt.s32.totalorder %s14, 1
        %s257 = scalar_select %p256, %s14, 1
        %s258 = smul.addr %s257, 8
        %s259 = scalar_lea.vmem %s0, %s258
      $region48: #{resnet1d_encoder_forward.12} parent=43 // pred_fallthru
        _
    $region44: #{resnet1d_encoder_forward.12} parent=5 // pred_fallthru
      _
    %p260 = scmp.le.s32.totalorder 1, %s14
    %p261 = scmp.lt.s32.totalorder %s14, 3
    %p262 = pnand %p260, %p261
    %p263 = pneg %p262
    // Predicated region
    $region49: #{resnet1d_encoder_forward.12} parent=5 // pred_check
      _
    $region50: #{resnet1d_encoder_forward.12} parent=5 // pred_check_branch
      %265 = sbr.rel (%p262) target = $region52
    $region51: #{resnet1d_encoder_forward.12} parent=5 // pred_region
      %s266 = ssub.s32 %s14, 1
      %p267 = scmp.lt.s32.totalorder %s19, 1
      %s268 = scalar_select %p267, %s19, 1
      %s269 = smul.addr %s268, 8
      %s270 = scalar_lea.vmem %s0, %s269
      %p271 = pneg %p40
      %p272 = pneg %p37
      %p273 = pneg %p61
      %p274 = pneg %p58
      %p275 = pneg %p82
      %p276 = pneg %p79
      %p277 = pneg %p103
      %p278 = pneg %p100
      %p279 = pneg %p124
      %p280 = pneg %p121
      %p281 = pneg %p145
      %p282 = pneg %p142
      %p283 = pneg %p166
      %p284 = pneg %p163
      %p285 = pneg %p187
      %p286 = pneg %p184
      %p287 = pneg %p213
      %p288 = pneg %p210
      %p289 = scmp.lt.s32.totalorder %s19, 1
      %s290 = scalar_select %p289, %s19, 1
      %s291 = smul.addr %s290, 2
      %s292 = smul.addr %s291, 8
      %s293 = scalar_lea.vmem %s8, %s292
      %p294 = scmp.lt.s32.totalorder %s19, 1
      %s295 = scalar_select %p294, %s19, 1
      %s296 = smul.addr %s295, 8
      %s297 = scalar_lea.vmem %s0, %s296
      %p298 = scmp.lt.s32.totalorder %s19, 1
      %s299 = scalar_select %p298, %s19, 1
      %s300 = smul.addr %s299, 2
      %s301 = smul.addr %s300, 8
      %s302 = scalar_lea.vmem %s8, %s301
      %v304 = vld [vmem:[%s297] sm:$0xff]
      %v305 = vld [vmem:[%s1] sm:$0xff]
      %307 = vset.pattern.permute.xlu0 0
      %308 = vperm.xlu0 %307, %v305
      %v309 = vpop.permute.xlu0 %308
      %v311 = vmul.f32 %v304, %v309
      %v312 = vld [vmem:[%s2] sm:$0xff]
      %314 = vset.pattern.permute.xlu0 0
      %315 = vperm.xlu0 %314, %v312
      %v316 = vpop.permute.xlu0 %315
      %v318 = vadd.f32 %v311, %v316
      %v319 = vmax.f32 %v318, 0.0
      %v320 = vlaneseq
      %v321 = vand.u32 %v320, 127
      %vm322 = vcmp.ge.s32.totalorder %v321, 1
      %vm323 = vcmp.lt.s32.totalorder %v321, 5
      %vm324 = vmand %vm322, %vm323
      %v325 = vsel %vm324, %v319, 0.0
      %vm326 = vcmask 31744
      %327 = vst.msk [vmem:[#allocation2] sm:$0xff] %vm326, %v325
      %v328 = vld [vmem:[%s297] sm:$0xff]
      %v329 = vld [vmem:[%s1] sm:$0xff]
      %331 = vset.pattern.permute.xlu0 0
      %332 = vperm.xlu0 %331, %v329
      %v333 = vpop.permute.xlu0 %332
      %v335 = vmul.f32 %v328, %v333
      %v336 = vld [vmem:[%s2] sm:$0xff]
      %338 = vset.pattern.permute.xlu0 0
      %339 = vperm.xlu0 %338, %v336
      %v340 = vpop.permute.xlu0 %339
      %v342 = vadd.f32 %v335, %v340
      %v343 = vmax.f32 %v342, 0.0
      %v344 = vadd.s32 %v321, 1
      %vm345 = vcmp.ge.s32.totalorder %v344, 1
      %vm346 = vcmp.lt.s32.totalorder %v344, 5
      %vm347 = vmand %vm345, %vm346
      %349 = vrot.lane.b32.xlu0 %v343, 127
      %v350 = vpop.permute.xlu0 %349
      %v352 = vsel %vm347, %v350, 0.0
      %353 = vst.msk [vmem:[#allocation2 + $0x8] sm:$0xff] %vm326, %v352
      %v354 = vld [vmem:[%s297] sm:$0xff]
      %v355 = vld [vmem:[%s1] sm:$0xff]
      %357 = vset.pattern.permute.xlu0 0
      %358 = vperm.xlu0 %357, %v355
      %v359 = vpop.permute.xlu0 %358
      %v361 = vmul.f32 %v354, %v359
      %v362 = vld [vmem:[%s2] sm:$0xff]
      %364 = vset.pattern.permute.xlu0 0
      %365 = vperm.xlu0 %364, %v362
      %v366 = vpop.permute.xlu0 %365
      %v368 = vadd.f32 %v361, %v366
      %v369 = vmax.f32 %v368, 0.0
      %v370 = vadd.s32 %v321, 2
      %vm371 = vcmp.ge.s32.totalorder %v370, 1
      %vm372 = vcmp.lt.s32.totalorder %v370, 5
      %vm373 = vmand %vm371, %vm372
      %375 = vrot.lane.b32.xlu0 %v369, 126
      %v376 = vpop.permute.xlu0 %375
      %v378 = vsel %vm373, %v376, 0.0
      %379 = vst.msk [vmem:[#allocation2 + $0x10] sm:$0xff] %vm326, %v378
      %v380 = vld [vmem:[%s3] sm:$0xf]
      %v381 = vld [vmem:[%s3 + $0x4] sm:$0xf]
      %v382 = vld [vmem:[#allocation2] sm:$0xff]
      %v383 = vld [vmem:[#allocation2 + $0x8] sm:$0xff]
      %v384 = vld [vmem:[#allocation2 + $0x10] sm:$0xff]
      %v385 = vpack.c.bf16 %v383, %v382
      %v386 = vpack.c.bf16 %v384, %v384
      %v389 = vunpack.c.l.b16 %v380
      %v390 = vunpack.c.l.b16 %v381
      %v391 = vpack.c.b16 %v390, %v389
      %vm392 = vcmask 195584
      %v394 = vsel %vm392, %v391, 0
      %vm396 = vcmask 1043456
      %v398 = vsel %vm396, %v386, 0
      %400 = vmatprep.subr.bf16.mxu0 0
      %401 = vmatpush1.bf16.msra.mxu0 %v385
      %402 = vmatprep.subr.bf16.mxu0 0
      %403 = vmatpush1.bf16.msra.mxu0 %v398
      %404 = vmatprep.subr.bf16.mxu0 0
      %405 = vmatpush1.bf16.msra.mxu0 0
      %406 = vmatprep.subr.bf16.mxu0 0
      %407 = vmatpush1.bf16.msra.mxu0 0
      %408 = vmatprep.subr.bf16.mxu0 0
      %409 = vmatpush1.bf16.msra.mxu0 0
      %410 = vmatprep.subr.bf16.mxu0 0
      %411 = vmatpush1.bf16.msra.mxu0 0
      %412 = vmatprep.subr.bf16.mxu0 0
      %413 = vmatpush1.bf16.msra.mxu0 0
      %414 = vmatprep.subr.bf16.mxu0 0
      %415 = vmatpush1.bf16.msra.mxu0 0
      %416 = vmatprep.subr.bf16.mxu0 0
      %417 = vmatpush1.bf16.msra.mxu0 0
      %418 = vmatprep.subr.bf16.mxu0 0
      %419 = vmatpush1.bf16.msra.mxu0 0
      %420 = vmatprep.subr.bf16.mxu0 0
      %421 = vmatpush1.bf16.msra.mxu0 0
      %422 = vmatprep.subr.bf16.mxu0 0
      %423 = vmatpush1.bf16.msra.mxu0 0
      %424 = vmatprep.subr.bf16.mxu0 0
      %425 = vmatpush1.bf16.msra.mxu0 0
      %426 = vmatprep.subr.bf16.mxu0 0
      %427 = vmatpush1.bf16.msra.mxu0 0
      %428 = vmatprep.subr.bf16.mxu0 0
      %429 = vmatpush1.bf16.msra.mxu0 0
      %430 = vmatprep.subr.bf16.mxu0 0
      %431 = vmatpush1.bf16.msra.mxu0 0
      %432 = vmatprep.mubr.bf16.mxu0 0
      %433 = vmatmul.mubr.bf16.gmra.mrb[0].mxu0 %v394
      %v434 = vpop.f32.mrb[0].mxu0
      %v435 = vadd.f32 0.0, %v434
      %v436 = vpop.f32.mrb[0].mxu0
      %v437 = vpop.f32.mrb[0].mxu0
      %v438 = vadd.f32 0.0, %v437
      %v439 = vpop.f32.mrb[0].mxu0
      %440 = vdwg.mxu0
      %v441 = vld [vmem:[%s4] sm:$0xff]
      %v442 = vld [vmem:[%s4 + $0x8] sm:$0xff]
      %444 = vset.pattern.permute.xlu0 0
      %445 = vperm.xlu0 %444, %v441
      %v446 = vpop.permute.xlu0 %445
      %449 = vset.pattern.permute.xlu0 0
      %450 = vperm.xlu0 %449, %v442
      %v451 = vpop.permute.xlu0 %450
      %v453 = vmul.f32 %v435, %v446
      %v454 = vmul.f32 %v438, %v451
      %v455 = vld [vmem:[%s5] sm:$0xff]
      %v456 = vld [vmem:[%s5 + $0x8] sm:$0xff]
      %458 = vset.pattern.permute.xlu0 0
      %459 = vperm.xlu0 %458, %v455
      %v460 = vpop.permute.xlu0 %459
      %463 = vset.pattern.permute.xlu0 0
      %464 = vperm.xlu0 %463, %v456
      %v465 = vpop.permute.xlu0 %464
      %v467 = vadd.f32 %v453, %v460
      %v468 = vadd.f32 %v454, %v465
      %v469 = vmax.f32 %v467, 0.0
      %v470 = vmax.f32 %v468, 0.0
      %vm471 = vcmask 48128
      %472 = vst.msk [vmem:[#allocation3] sm:$0xff] %vm471, 0.0
      %473 = vst.msk [vmem:[#allocation3 + $0x8] sm:$0xff] %vm471, 0.0
      %476 = vrot.lane.b32.xlu0 %v469, 1
      %v477 = vpop.permute.xlu0 %476
      %478 = vrot.lane.b32.xlu0 %v470, 1
      %v479 = vpop.permute.xlu0 %478
      %vm482 = vcmask 39944
      %483 = vst.msk [vmem:[#allocation3] sm:$0xff] %vm482, %v477
      %484 = vst.msk [vmem:[#allocation3 + $0x8] sm:$0xff] %vm482, %v479
      %v485 = vld [vmem:[#allocation3] sm:$0xff]
      %v486 = vld [vmem:[#allocation3 + $0x8] sm:$0xff]
      %487 = vst.msk [vmem:[#allocation4] sm:$0xff] %vm326, %v485
      %488 = vst.msk [vmem:[#allocation4 + $0x8] sm:$0xff] %vm326, %v486
      %v489 = vld [vmem:[#allocation3] sm:$0xff]
      %v490 = vld [vmem:[#allocation3 + $0x8] sm:$0xff]
      %493 = vrot.lane.b32.xlu0 %v489, 127
      %v494 = vpop.permute.xlu0 %493
      %495 = vrot.lane.b32.xlu0 %v490, 127
      %v496 = vpop.permute.xlu0 %495
      %499 = vst.msk [vmem:[#allocation4 + $0x10] sm:$0xff] %vm326, %v494
      %500 = vst.msk [vmem:[#allocation4 + $0x18] sm:$0xff] %vm326, %v496
      %v501 = vld [vmem:[#allocation3] sm:$0xff]
      %v502 = vld [vmem:[#allocation3 + $0x8] sm:$0xff]
      %505 = vrot.lane.b32.xlu0 %v501, 126
      %v506 = vpop.permute.xlu0 %505
      %507 = vrot.lane.b32.xlu0 %v502, 126
      %v508 = vpop.permute.xlu0 %507
      %511 = vst.msk [vmem:[#allocation4 + $0x20] sm:$0xff] %vm326, %v506
      %512 = vst.msk [vmem:[#allocation4 + $0x28] sm:$0xff] %vm326, %v508
      %v513 = vld [vmem:[%s6] sm:$0xf]
      %v514 = vld [vmem:[%s6 + $0x4] sm:$0xf]
      %v515 = vld [vmem:[#allocation4] sm:$0xff]
      %v516 = vld [vmem:[#allocation4 + $0x8] sm:$0xff]
      %v517 = vld [vmem:[#allocation4 + $0x10] sm:$0xff]
      %v518 = vld [vmem:[#allocation4 + $0x18] sm:$0xff]
      %v519 = vld [vmem:[#allocation4 + $0x20] sm:$0xff]
      %v520 = vld [vmem:[#allocation4 + $0x28] sm:$0xff]
      %v521 = vpack.c.bf16 %v516, %v515
      %v522 = vpack.c.bf16 %v518, %v517
      %v523 = vpack.c.bf16 %v520, %v519
      %v524 = vld [vmem:[%s7] sm:$0xff]
      %v525 = vld [vmem:[%s7 + $0x8] sm:$0xff]
      %527 = vset.pattern.permute.xlu0 0
      %528 = vperm.xlu0 %527, %v524
      %v529 = vpop.permute.xlu0 %528
      %532 = vset.pattern.permute.xlu0 0
      %533 = vperm.xlu0 %532, %v525
      %v534 = vpop.permute.xlu0 %533
      %v538 = vunpack.c.l.b16 %v513
      %v539 = vunpack.c.l.b16 %v514
      %v540 = vpack.c.b16 %v539, %v538
      %vm541 = vcmask 392192
      %v543 = vsel %vm541, %v540, 0
      %545 = vmatprep.subr.bf16.mxu0 0
      %546 = vmatpush1.bf16.msra.mxu0 %v521
      %547 = vmatprep.subr.bf16.mxu0 0
      %548 = vmatpush1.bf16.msra.mxu0 %v522
      %549 = vmatprep.subr.bf16.mxu0 0
      %550 = vmatpush1.bf16.msra.mxu0 %v523
      %551 = vmatprep.subr.bf16.mxu0 0
      %552 = vmatpush1.bf16.msra.mxu0 0
      %553 = vmatprep.subr.bf16.mxu0 0
      %554 = vmatpush1.bf16.msra.mxu0 0
      %555 = vmatprep.subr.bf16.mxu0 0
      %556 = vmatpush1.bf16.msra.mxu0 0
      %557 = vmatprep.subr.bf16.mxu0 0
      %558 = vmatpush1.bf16.msra.mxu0 0
      %559 = vmatprep.subr.bf16.mxu0 0
      %560 = vmatpush1.bf16.msra.mxu0 0
      %561 = vmatprep.subr.bf16.mxu0 0
      %562 = vmatpush1.bf16.msra.mxu0 0
      %563 = vmatprep.subr.bf16.mxu0 0
      %564 = vmatpush1.bf16.msra.mxu0 0
      %565 = vmatprep.subr.bf16.mxu0 0
      %566 = vmatpush1.bf16.msra.mxu0 0
      %567 = vmatprep.subr.bf16.mxu0 0
      %568 = vmatpush1.bf16.msra.mxu0 0
      %569 = vmatprep.subr.bf16.mxu0 0
      %570 = vmatpush1.bf16.msra.mxu0 0
      %571 = vmatprep.subr.bf16.mxu0 0
      %572 = vmatpush1.bf16.msra.mxu0 0
      %573 = vmatprep.subr.bf16.mxu0 0
      %574 = vmatpush1.bf16.msra.mxu0 0
      %575 = vmatprep.subr.bf16.mxu0 0
      %576 = vmatpush1.bf16.msra.mxu0 0
      %577 = vmatprep.mubr.bf16.mxu0 0
      %578 = vmatmul.mubr.bf16.gmra.mrb[0].mxu0 %v543
      %v579 = vpop.f32.mrb[0].mxu0
      %v580 = vadd.f32 %v529, %v579
      %v581 = vpop.f32.mrb[0].mxu0
      %v582 = vpop.f32.mrb[0].mxu0
      %v583 = vadd.f32 %v534, %v582
      %v584 = vpop.f32.mrb[0].mxu0
      %585 = vdwg.mxu0
      %v586 = vld [vmem:[%s297] sm:$0xff]
      %587 = vst.msk [vmem:[%s302] sm:$0xff] %vm326, %v580
      %588 = vst.msk [vmem:[%s302 + $0x8] sm:$0xff] %vm326, %v583
      %v590 = vrot.slane %v586, 4
      %591 = vrot.lane.b32.xlu0 %v590, 127
      %v592 = vpop.permute.xlu0 %591
      %v594 = vadd.f32 %v580, %v592
      %v595 = vadd.f32 %v583, %v592
      %vm596 = vcmask 31748
      %597 = vst.msk [vmem:[%s302] sm:$0xf0] %vm596, %v594
      %vm598 = vcmask 27648
      %599 = vst.msk [vmem:[%s302 + $0x8] sm:$0xf] %vm598, %v595
      %p600 = scmp.lt.s32.totalorder %s19, 1
      %s601 = scalar_select %p600, %s19, 1
      %s602 = smul.addr %s601, 2
      %s603 = smul.addr %s602, 8
      %s604 = scalar_lea.vmem %s8, %s603
      // Predicated region
      $region53: #{resnet1d_encoder_forward.12} parent=51 // pred_check
        %p605 = pneg %p210
      $region54: #{resnet1d_encoder_forward.12} parent=51 // pred_check_branch
        %607 = sbr.rel (%p605) target = $region56
      $region55: #{resnet1d_encoder_forward.12} parent=51 // pred_region
        _
      $region56: #{resnet1d_encoder_forward.12} parent=51 // pred_fallthru
        _
    $region52: #{resnet1d_encoder_forward.12} parent=5 // pred_fallthru
      _
    %p608 = scmp.le.s32.totalorder 2, %s14
    // Predicated region
    $region57: #{resnet1d_encoder_forward.12} parent=5 // pred_check
      %p609 = pneg %p608
    $region58: #{resnet1d_encoder_forward.12} parent=5 // pred_check_branch
      %611 = sbr.rel (%p609) target = $region60
    $region59: #{resnet1d_encoder_forward.12} parent=5 // pred_region
      %s612 = ssub.s32 %s14, 2
      // Predicated region
      $region61: #{resnet1d_encoder_forward.12} parent=59 // pred_check
        %p613 = pneg %p216
      $region62: #{resnet1d_encoder_forward.12} parent=59 // pred_check_branch
        %615 = sbr.rel (%p613) target = $region64
      $region63: #{resnet1d_encoder_forward.12} parent=59 // pred_region
        %p616 = scmp.lt.s32.totalorder %s20, 1
        %s617 = scalar_select %p616, %s20, 1
        %s618 = smul.addr %s617, 2
        %s619 = smul.addr %s618, 8
        %s620 = scalar_lea.vmem %s8, %s619
      $region64: #{resnet1d_encoder_forward.12} parent=59 // pred_fallthru
        _
    $region60: #{resnet1d_encoder_forward.12} parent=5 // pred_fallthru
      _
  $region6: #{resnet1d_encoder_forward.12} parent=0 // loop_footer
    %s18 = sadd.s32 1, %s14
  $region7: #{resnet1d_encoder_forward.12} parent=0 // loop_footer_branch
    %13 = sbr.rel target = $region3
  $region8: #{resnet1d_encoder_forward.12} parent=0 // loop_exit
    _

</llo_original>
